<compile_context>
chip_gen: v7x
topology: tpu7x:2x2x1
jax: 0.10.0
libtpu: 0.0.40
codegen_flags: <defaults>
</compile_context>

<pallas_src>
import jax
import jax.numpy as jnp
from jax.experimental import pallas as pl
from jax.experimental.pallas import tpu as pltpu

# Problem sizes (small, consistent with the module's forward).
S = 8          # sequence length
N = 2          # batch
E = 32         # d_model
NHEAD = 4
HD = E // NHEAD
FF = 64        # dim_feedforward
EPS = 1e-5     # LayerNorm eps (PyTorch default)

ROWS = S * N       # activation rows, s-major: row = q*N + n
B = N * NHEAD      # attention batch: b = n*NHEAD + h


def encoder_layer_kernel(x_ref, pin_ref, pout_ref, qkvw_ref, qkvb_ref, wob_ref,
                         w1t_ref, w2t_ref, bvec_ref, b1_ref, out_ref, attnw_ref):
    x = x_ref[...]                                           # (ROWS, E), s-major rows

    # Replicate + permute rows into per-(n, h) operands via an exact 0/1 matmul on
    # the MXU (instead of XLU lane/sublane relayouts).
    x_b = jnp.dot(pin_ref[...], x,
                  preferred_element_type=jnp.float32)        # (B*S, E)
    x_b = x_b.reshape(B, S, E)

    qkvw = qkvw_ref[...]                                     # (3, B, HD, E)
    qkvb = qkvb_ref[...]                                     # (3, B, S, HD), pre-broadcast

    # Per-head QKV projections (1/sqrt(HD) already folded into q weights/bias).
    q = jnp.einsum('bse,bde->bsd', x_b, qkvw[0],
                   preferred_element_type=jnp.float32) + qkvb[0]
    k = jnp.einsum('bse,bde->bsd', x_b, qkvw[1],
                   preferred_element_type=jnp.float32) + qkvb[1]
    v = jnp.einsum('bse,bde->bsd', x_b, qkvw[2],
                   preferred_element_type=jnp.float32) + qkvb[2]

    # Scaled-dot-product attention, batched over b = n*NHEAD + h.
    s = jnp.einsum('bqd,bkd->bqk', q, k,
                   preferred_element_type=jnp.float32)       # (B, S, S)
    m = jnp.max(s, axis=-1, keepdims=True)
    e = jnp.exp(s - m)
    denom = jnp.sum(e, axis=-1, keepdims=True)
    # Exact reciprocal (approx=True could breach the 1e-4 attention-weight tolerance).
    p = e * pl.reciprocal(denom, approx=False)

    attnw_ref[...] = p                                       # (B, S, S)

    ctx = jnp.einsum('bqk,bkd->bqd', p, v,
                     preferred_element_type=jnp.float32)     # (B, S, HD)

    # Output projection folded per head; head merge + row scatter done by the 0/1
    # selector matmul (sums the NHEAD contributions per output row).
    y_b = jnp.einsum('bqd,bde->bqe', ctx, wob_ref[...],
                     preferred_element_type=jnp.float32)     # (B, S, E)
    bvec = bvec_ref[...]                                     # (6, ROWS, E), pre-broadcast
    attn_out = jnp.dot(pout_ref[...], y_b.reshape(B * S, E),
                       preferred_element_type=jnp.float32) + bvec[0]

    # Residual + LayerNorm1 (dropout1 = identity in eval mode).
    y = x + attn_out
    mu = jnp.mean(y, axis=-1, keepdims=True)
    var = jnp.mean((y - mu) ** 2, axis=-1, keepdims=True)
    y = (y - mu) * jax.lax.rsqrt(var + EPS) * bvec[2] + bvec[3]

    # Feed-forward: linear1 -> ReLU -> (dropout = identity) -> linear2.
    h1 = jnp.maximum(
        jnp.dot(y, w1t_ref[...], preferred_element_type=jnp.float32) + b1_ref[...],
        0.0)
    ff = jnp.dot(h1, w2t_ref[...], preferred_element_type=jnp.float32) + bvec[1]

    # Residual + LayerNorm2 (dropout2 = identity in eval mode).
    z = y + ff
    mu2 = jnp.mean(z, axis=-1, keepdims=True)
    var2 = jnp.mean((z - mu2) ** 2, axis=-1, keepdims=True)
    z = (z - mu2) * jax.lax.rsqrt(var2 + EPS) * bvec[4] + bvec[5]

    out_ref[...] = z                                         # (ROWS, E), s-major rows


def pack_params(params):
    """One-time host-side packing (run at parameter-load time, NOT per forward)."""
    (wq, wk, wv, bq, bk, bv, wo, bo, w1, b1, w2, b2, g1, be1, g2, be2) = params
    scale = 1.0 / (HD ** 0.5)

    # Row selector: x_b[b*S + q] = x[q*N + n(b)], with b = n*NHEAD + h and s-major x.
    b_idx = jnp.arange(B * S) // S
    q_idx = jnp.arange(B * S) % S
    n_idx = b_idx // NHEAD
    p_in = jax.nn.one_hot(q_idx * N + n_idx, ROWS, dtype=jnp.float32)   # (B*S, ROWS)
    p_out = p_in.T                                                      # (ROWS, B*S)

    def per_head(w, sc=1.0):                    # (E, E) torch layout -> (B, HD, E)
        return jnp.tile((w * sc).reshape(NHEAD, HD, E), (N, 1, 1))

    qkvw = jnp.stack([per_head(wq, scale), per_head(wk), per_head(wv)])  # (3, B, HD, E)

    def per_head_bias(bv1, sc=1.0):             # (1, E) -> (B, S, HD), pre-broadcast
        hb = (bv1[0] * sc).reshape(NHEAD, 1, HD)
        return jnp.tile(jnp.broadcast_to(hb, (NHEAD, S, HD)), (N, 1, 1))

    qkvb = jnp.stack([per_head_bias(bq, scale), per_head_bias(bk),
                      per_head_bias(bv)])                                # (3, B, S, HD)

    wob = jnp.tile(wo.T.reshape(NHEAD, HD, E), (N, 1, 1))                # (B, HD, E)

    def rows(vec1):                             # (1, k) -> (ROWS, k), pre-broadcast
        return jnp.broadcast_to(vec1, (ROWS, vec1.shape[1]))

    bvec = jnp.stack([rows(bo), rows(b2), rows(g1), rows(be1),
                      rows(g2), rows(be2)])                              # (6, ROWS, E)
    b1r = rows(b1)                                                       # (ROWS, FF)

    return (p_in, p_out, qkvw, qkvb, wob, w1.T, w2.T, bvec, b1r)


@jax.jit
def transformer_encoder_layer(src, packed):
    """src: (S, N, E). Returns (out (S, N, E), attn_weights (N, NHEAD, S, S))."""
    x = src.reshape(S * N, E)                    # contiguous -> free, no transpose
    vmem = pl.BlockSpec(memory_space=pltpu.MemorySpace.VMEM)
    out_flat, attnw = pl.pallas_call(
        encoder_layer_kernel,
        out_shape=(jax.ShapeDtypeStruct((ROWS, E), jnp.float32),
                   jax.ShapeDtypeStruct((B, S, S), jnp.float32)),
        in_specs=[vmem] * 10,
        out_specs=(vmem, vmem),
    )(x, *packed)
    # Both reshapes are contiguous (free); no XLA transposes in the wrapper.
    return out_flat.reshape(S, N, E), attnw.reshape(N, NHEAD, S, S)


def ref_forward(src, params):
    """Pure-JAX reference matching the PyTorch forward (eval mode)."""
    (wq, wk, wv, bq, bk, bv, wo, bo, w1, b1, w2, b2, g1, be1, g2, be2) = params
    outs, weights = [], []
    scale = 1.0 / (HD ** 0.5)
    for n in range(N):
        x = src[:, n, :]
        q = x @ wq.T + bq[0]
        k = x @ wk.T + bk[0]
        v = x @ wv.T + bv[0]
        hos, ws = [], []
        for h in range(NHEAD):
            sl = slice(h * HD, (h + 1) * HD)
            sc = (q[:, sl] * scale) @ k[:, sl].T
            p = jax.nn.softmax(sc, axis=-1)
            ws.append(p)
            hos.append(p @ v[:, sl])
        attn_out = jnp.concatenate(hos, axis=-1) @ wo.T + bo[0]
        y = x + attn_out
        mu = y.mean(-1, keepdims=True)
        var = ((y - mu) ** 2).mean(-1, keepdims=True)
        y = (y - mu) * jax.lax.rsqrt(var + EPS) * g1[0] + be1[0]
        ff = jnp.maximum(y @ w1.T + b1[0], 0.0) @ w2.T + b2[0]
        z = y + ff
        mu2 = z.mean(-1, keepdims=True)
        var2 = ((z - mu2) ** 2).mean(-1, keepdims=True)
        z = (z - mu2) * jax.lax.rsqrt(var2 + EPS) * g2[0] + be2[0]
        outs.append(z)
        weights.append(jnp.stack(ws, axis=0))
    return jnp.stack(outs, axis=1), jnp.stack(weights, axis=0)


if __name__ == "__main__":
    key = jax.random.PRNGKey(0)
    keys = jax.random.split(key, 20)

    # Deterministic synthetic parameters (module __init__ shapes).
    wq = 0.1 * jax.random.normal(keys[0], (E, E), jnp.float32)
    wk = 0.1 * jax.random.normal(keys[1], (E, E), jnp.float32)
    wv = 0.1 * jax.random.normal(keys[2], (E, E), jnp.float32)
    bq = 0.1 * jax.random.normal(keys[3], (1, E), jnp.float32)
    bk = 0.1 * jax.random.normal(keys[4], (1, E), jnp.float32)
    bv = 0.1 * jax.random.normal(keys[5], (1, E), jnp.float32)
    wo = 0.1 * jax.random.normal(keys[6], (E, E), jnp.float32)
    bo = 0.1 * jax.random.normal(keys[7], (1, E), jnp.float32)
    w1 = 0.1 * jax.random.normal(keys[8], (FF, E), jnp.float32)
    b1 = 0.1 * jax.random.normal(keys[9], (1, FF), jnp.float32)
    w2 = 0.1 * jax.random.normal(keys[10], (E, FF), jnp.float32)
    b2 = 0.1 * jax.random.normal(keys[11], (1, E), jnp.float32)
    g1 = jnp.ones((1, E), jnp.float32)
    be1 = jnp.zeros((1, E), jnp.float32)
    g2 = jnp.ones((1, E), jnp.float32)
    be2 = jnp.zeros((1, E), jnp.float32)
    params = (wq, wk, wv, bq, bk, bv, wo, bo, w1, b1, w2, b2, g1, be1, g2, be2)

    src = jax.random.normal(keys[12], (S, N, E), jnp.float32)

    # One-time packing (hoisted out of the per-forward path).
    packed = jax.block_until_ready(pack_params(params))

    out, attn_w = jax.block_until_ready(transformer_encoder_layer(src, packed))

    ref_out, ref_w = ref_forward(src, params)
    assert out.shape == (S, N, E) and attn_w.shape == (N, NHEAD, S, S)
    assert jnp.max(jnp.abs(out - ref_out)) < 1e-4, "output mismatch"
    assert jnp.max(jnp.abs(attn_w - ref_w)) < 1e-4, "attn weights mismatch"

    print("KERNEL_OK")
</pallas_src>

<mosaic_0001>
module attributes {stable_mosaic.version = 11 : i64} {
  func.func @encoder_layer_kernel(%arg0: memref<16x32xf32, #tpu.memory_space<vmem>>, %arg1: memref<64x16xf32, #tpu.memory_space<vmem>>, %arg2: memref<16x64xf32, #tpu.memory_space<vmem>>, %arg3: memref<3x8x8x32xf32, #tpu.memory_space<vmem>>, %arg4: memref<3x8x8x8xf32, #tpu.memory_space<vmem>>, %arg5: memref<8x8x32xf32, #tpu.memory_space<vmem>>, %arg6: memref<32x64xf32, #tpu.memory_space<vmem>>, %arg7: memref<64x32xf32, #tpu.memory_space<vmem>>, %arg8: memref<6x16x32xf32, #tpu.memory_space<vmem>>, %arg9: memref<16x64xf32, #tpu.memory_space<vmem>>, %arg10: memref<16x32xf32, #tpu.memory_space<vmem>>, %arg11: memref<8x8x8xf32, #tpu.memory_space<vmem>>) attributes {dimension_semantics = [], scalar_prefetch = 0 : i64, scratch_operands = 0 : i64, tpu.core_type = #tpu.core_type<tc>} {
    %c0 = arith.constant 0 : index
    %c0_0 = arith.constant 0 : index
    %0 = vector.load %arg0[%c0, %c0_0] : memref<16x32xf32, #tpu.memory_space<vmem>>, vector<16x32xf32>
    %c0_1 = arith.constant 0 : index
    %c0_2 = arith.constant 0 : index
    %1 = vector.load %arg1[%c0_1, %c0_2] : memref<64x16xf32, #tpu.memory_space<vmem>>, vector<64x16xf32>
    %cst = arith.constant dense<0.000000e+00> : vector<64x32xf32>
    %2 = tpu.matmul %1, %0, %cst {dimension_numbers = #tpu.dot_dimension_numbers<[1], [0], [0], [1], [0, 0, 1, 1], [], []>} : vector<64x16xf32>, vector<16x32xf32>, vector<64x32xf32> -> vector<64x32xf32>
    %3 = vector.shape_cast %2 : vector<64x32xf32> to vector<8x8x32xf32>
    %c0_3 = arith.constant 0 : index
    %c0_4 = arith.constant 0 : index
    %c0_5 = arith.constant 0 : index
    %c0_6 = arith.constant 0 : index
    %4 = vector.load %arg3[%c0_3, %c0_4, %c0_5, %c0_6] : memref<3x8x8x32xf32, #tpu.memory_space<vmem>>, vector<3x8x8x32xf32>
    %c0_7 = arith.constant 0 : index
    %c0_8 = arith.constant 0 : index
    %c0_9 = arith.constant 0 : index
    %c0_10 = arith.constant 0 : index
    %5 = vector.load %arg4[%c0_7, %c0_8, %c0_9, %c0_10] : memref<3x8x8x8xf32, #tpu.memory_space<vmem>>, vector<3x8x8x8xf32>
    %6 = vector.extract_strided_slice %4 {offsets = [0, 0, 0, 0], sizes = [1, 8, 8, 32], strides = [1, 1, 1, 1]} : vector<3x8x8x32xf32> to vector<1x8x8x32xf32>
    %7 = vector.shape_cast %6 : vector<1x8x8x32xf32> to vector<8x8x32xf32>
    "tpu.trace_start"() <{level = 10 : i32, message = "bse,bde->bsd"}> : () -> ()
    %cst_11 = arith.constant dense<0.000000e+00> : vector<8x8x8xf32>
    %8 = tpu.matmul %3, %7, %cst_11 {dimension_numbers = #tpu.dot_dimension_numbers<[2], [2], [1], [1], [0, 0, 0, 1, 1, 1], [0], [0]>} : vector<8x8x32xf32>, vector<8x8x32xf32>, vector<8x8x8xf32> -> vector<8x8x8xf32>
    "tpu.trace_stop"() : () -> ()
    %9 = vector.extract_strided_slice %5 {offsets = [0, 0, 0, 0], sizes = [1, 8, 8, 8], strides = [1, 1, 1, 1]} : vector<3x8x8x8xf32> to vector<1x8x8x8xf32>
    %10 = vector.shape_cast %9 : vector<1x8x8x8xf32> to vector<8x8x8xf32>
    %11 = arith.addf %8, %10 : vector<8x8x8xf32>
    %12 = vector.extract_strided_slice %4 {offsets = [1, 0, 0, 0], sizes = [1, 8, 8, 32], strides = [1, 1, 1, 1]} : vector<3x8x8x32xf32> to vector<1x8x8x32xf32>
    %13 = vector.shape_cast %12 : vector<1x8x8x32xf32> to vector<8x8x32xf32>
    "tpu.trace_start"() <{level = 10 : i32, message = "bse,bde->bsd"}> : () -> ()
    %cst_12 = arith.constant dense<0.000000e+00> : vector<8x8x8xf32>
    %14 = tpu.matmul %3, %13, %cst_12 {dimension_numbers = #tpu.dot_dimension_numbers<[2], [2], [1], [1], [0, 0, 0, 1, 1, 1], [0], [0]>} : vector<8x8x32xf32>, vector<8x8x32xf32>, vector<8x8x8xf32> -> vector<8x8x8xf32>
    "tpu.trace_stop"() : () -> ()
    %15 = vector.extract_strided_slice %5 {offsets = [1, 0, 0, 0], sizes = [1, 8, 8, 8], strides = [1, 1, 1, 1]} : vector<3x8x8x8xf32> to vector<1x8x8x8xf32>
    %16 = vector.shape_cast %15 : vector<1x8x8x8xf32> to vector<8x8x8xf32>
    %17 = arith.addf %14, %16 : vector<8x8x8xf32>
    %18 = vector.extract_strided_slice %4 {offsets = [2, 0, 0, 0], sizes = [1, 8, 8, 32], strides = [1, 1, 1, 1]} : vector<3x8x8x32xf32> to vector<1x8x8x32xf32>
    %19 = vector.shape_cast %18 : vector<1x8x8x32xf32> to vector<8x8x32xf32>
    "tpu.trace_start"() <{level = 10 : i32, message = "bse,bde->bsd"}> : () -> ()
    %cst_13 = arith.constant dense<0.000000e+00> : vector<8x8x8xf32>
    %20 = tpu.matmul %3, %19, %cst_13 {dimension_numbers = #tpu.dot_dimension_numbers<[2], [2], [1], [1], [0, 0, 0, 1, 1, 1], [0], [0]>} : vector<8x8x32xf32>, vector<8x8x32xf32>, vector<8x8x8xf32> -> vector<8x8x8xf32>
    "tpu.trace_stop"() : () -> ()
    %21 = vector.extract_strided_slice %5 {offsets = [2, 0, 0, 0], sizes = [1, 8, 8, 8], strides = [1, 1, 1, 1]} : vector<3x8x8x8xf32> to vector<1x8x8x8xf32>
    %22 = vector.shape_cast %21 : vector<1x8x8x8xf32> to vector<8x8x8xf32>
    %23 = arith.addf %20, %22 : vector<8x8x8xf32>
    "tpu.trace_start"() <{level = 10 : i32, message = "bqd,bkd->bqk"}> : () -> ()
    %cst_14 = arith.constant dense<0.000000e+00> : vector<8x8x8xf32>
    %24 = tpu.matmul %11, %17, %cst_14 {dimension_numbers = #tpu.dot_dimension_numbers<[2], [2], [1], [1], [0, 0, 0, 1, 1, 1], [0], [0]>} : vector<8x8x8xf32>, vector<8x8x8xf32>, vector<8x8x8xf32> -> vector<8x8x8xf32>
    "tpu.trace_stop"() : () -> ()
    %cst_15 = arith.constant dense<0xFF800000> : vector<8x8xf32>
    %25 = vector.multi_reduction <maximumf>, %24, %cst_15 [2] : vector<8x8x8xf32> to vector<8x8xf32>
    %26 = vector.shape_cast %25 : vector<8x8xf32> to vector<8x8x1xf32>
    %27 = vector.broadcast %26 : vector<8x8x1xf32> to vector<8x8x8xf32>
    %28 = arith.subf %24, %27 : vector<8x8x8xf32>
    %29 = math.exp %28 : vector<8x8x8xf32>
    %cst_16 = arith.constant dense<0.000000e+00> : vector<8x8xf32>
    %30 = vector.multi_reduction <add>, %29, %cst_16 [2] : vector<8x8x8xf32> to vector<8x8xf32>
    %31 = vector.shape_cast %30 : vector<8x8xf32> to vector<8x8x1xf32>
    %32 = tpu.reciprocal %31 : vector<8x8x1xf32> -> vector<8x8x1xf32>
    %33 = vector.broadcast %32 : vector<8x8x1xf32> to vector<8x8x8xf32>
    %34 = arith.mulf %29, %33 : vector<8x8x8xf32>
    %c0_17 = arith.constant 0 : index
    %c0_18 = arith.constant 0 : index
    %c0_19 = arith.constant 0 : index
    %35 = vector.load %arg11[%c0_17, %c0_18, %c0_19] : memref<8x8x8xf32, #tpu.memory_space<vmem>>, vector<8x8x8xf32>
    tpu.vector_store %arg11[%c0_17, %c0_18, %c0_19], %34 {strides = array<i32>} : memref<8x8x8xf32, #tpu.memory_space<vmem>>, vector<8x8x8xf32>,
    "tpu.trace_start"() <{level = 10 : i32, message = "bqk,bkd->bqd"}> : () -> ()
    %cst_20 = arith.constant dense<0.000000e+00> : vector<8x8x8xf32>
    %36 = tpu.matmul %34, %23, %cst_20 {dimension_numbers = #tpu.dot_dimension_numbers<[2], [1], [1], [2], [0, 0, 0, 1, 1, 2], [0], [0]>} : vector<8x8x8xf32>, vector<8x8x8xf32>, vector<8x8x8xf32> -> vector<8x8x8xf32>
    "tpu.trace_stop"() : () -> ()
    %c0_21 = arith.constant 0 : index
    %c0_22 = arith.constant 0 : index
    %c0_23 = arith.constant 0 : index
    %37 = vector.load %arg5[%c0_21, %c0_22, %c0_23] : memref<8x8x32xf32, #tpu.memory_space<vmem>>, vector<8x8x32xf32>
    "tpu.trace_start"() <{level = 10 : i32, message = "bqd,bde->bqe"}> : () -> ()
    %cst_24 = arith.constant dense<0.000000e+00> : vector<8x8x32xf32>
    %38 = tpu.matmul %36, %37, %cst_24 {dimension_numbers = #tpu.dot_dimension_numbers<[2], [1], [1], [2], [0, 0, 0, 1, 1, 2], [0], [0]>} : vector<8x8x8xf32>, vector<8x8x32xf32>, vector<8x8x32xf32> -> vector<8x8x32xf32>
    "tpu.trace_stop"() : () -> ()
    %c0_25 = arith.constant 0 : index
    %c0_26 = arith.constant 0 : index
    %c0_27 = arith.constant 0 : index
    %39 = vector.load %arg8[%c0_25, %c0_26, %c0_27] : memref<6x16x32xf32, #tpu.memory_space<vmem>>, vector<6x16x32xf32>
    %c0_28 = arith.constant 0 : index
    %c0_29 = arith.constant 0 : index
    %40 = vector.load %arg2[%c0_28, %c0_29] : memref<16x64xf32, #tpu.memory_space<vmem>>, vector<16x64xf32>
    %41 = vector.shape_cast %38 : vector<8x8x32xf32> to vector<64x32xf32>
    %cst_30 = arith.constant dense<0.000000e+00> : vector<16x32xf32>
    %42 = tpu.matmul %40, %41, %cst_30 {dimension_numbers = #tpu.dot_dimension_numbers<[1], [0], [0], [1], [0, 0, 1, 1], [], []>} : vector<16x64xf32>, vector<64x32xf32>, vector<16x32xf32> -> vector<16x32xf32>
    %43 = vector.extract_strided_slice %39 {offsets = [0, 0, 0], sizes = [1, 16, 32], strides = [1, 1, 1]} : vector<6x16x32xf32> to vector<1x16x32xf32>
    %44 = vector.shape_cast %43 : vector<1x16x32xf32> to vector<16x32xf32>
    %45 = arith.addf %42, %44 : vector<16x32xf32>
    %46 = arith.addf %0, %45 : vector<16x32xf32>
    %cst_31 = arith.constant dense<0.000000e+00> : vector<16xf32>
    %47 = vector.multi_reduction <add>, %46, %cst_31 [1] : vector<16x32xf32> to vector<16xf32>
    %48 = vector.shape_cast %47 : vector<16xf32> to vector<16x1xf32>
    %cst_32 = arith.constant 3.200000e+01 : f32
    %49 = vector.broadcast %cst_32 : f32 to vector<16x1xf32>
    %50 = arith.divf %48, %49 : vector<16x1xf32>
    %51 = vector.broadcast %50 : vector<16x1xf32> to vector<16x32xf32>
    %52 = arith.subf %46, %51 : vector<16x32xf32>
    %53 = arith.mulf %52, %52 : vector<16x32xf32>
    %cst_33 = arith.constant dense<0.000000e+00> : vector<16xf32>
    %54 = vector.multi_reduction <add>, %53, %cst_33 [1] : vector<16x32xf32> to vector<16xf32>
    %55 = vector.shape_cast %54 : vector<16xf32> to vector<16x1xf32>
    %cst_34 = arith.constant 3.200000e+01 : f32
    %56 = vector.broadcast %cst_34 : f32 to vector<16x1xf32>
    %57 = arith.divf %55, %56 : vector<16x1xf32>
    %58 = vector.broadcast %50 : vector<16x1xf32> to vector<16x32xf32>
    %59 = arith.subf %46, %58 : vector<16x32xf32>
    %cst_35 = arith.constant 9.99999974E-6 : f32
    %60 = vector.broadcast %cst_35 : f32 to vector<16x1xf32>
    %61 = arith.addf %57, %60 : vector<16x1xf32>
    %62 = math.rsqrt %61 : vector<16x1xf32>
    %63 = vector.broadcast %62 : vector<16x1xf32> to vector<16x32xf32>
    %64 = arith.mulf %59, %63 : vector<16x32xf32>
    %65 = vector.extract_strided_slice %39 {offsets = [2, 0, 0], sizes = [1, 16, 32], strides = [1, 1, 1]} : vector<6x16x32xf32> to vector<1x16x32xf32>
    %66 = vector.shape_cast %65 : vector<1x16x32xf32> to vector<16x32xf32>
    %67 = arith.mulf %64, %66 : vector<16x32xf32>
    %68 = vector.extract_strided_slice %39 {offsets = [3, 0, 0], sizes = [1, 16, 32], strides = [1, 1, 1]} : vector<6x16x32xf32> to vector<1x16x32xf32>
    %69 = vector.shape_cast %68 : vector<1x16x32xf32> to vector<16x32xf32>
    %70 = arith.addf %67, %69 : vector<16x32xf32>
    %c0_36 = arith.constant 0 : index
    %c0_37 = arith.constant 0 : index
    %71 = vector.load %arg6[%c0_36, %c0_37] : memref<32x64xf32, #tpu.memory_space<vmem>>, vector<32x64xf32>
    %cst_38 = arith.constant dense<0.000000e+00> : vector<16x64xf32>
    %72 = tpu.matmul %70, %71, %cst_38 {dimension_numbers = #tpu.dot_dimension_numbers<[1], [0], [0], [1], [0, 0, 1, 1], [], []>} : vector<16x32xf32>, vector<32x64xf32>, vector<16x64xf32> -> vector<16x64xf32>
    %c0_39 = arith.constant 0 : index
    %c0_40 = arith.constant 0 : index
    %73 = vector.load %arg9[%c0_39, %c0_40] : memref<16x64xf32, #tpu.memory_space<vmem>>, vector<16x64xf32>
    %74 = arith.addf %72, %73 : vector<16x64xf32>
    %cst_41 = arith.constant 0.000000e+00 : f32
    %75 = vector.broadcast %cst_41 : f32 to vector<16x64xf32>
    %76 = arith.maximumf %74, %75 : vector<16x64xf32>
    %c0_42 = arith.constant 0 : index
    %c0_43 = arith.constant 0 : index
    %77 = vector.load %arg7[%c0_42, %c0_43] : memref<64x32xf32, #tpu.memory_space<vmem>>, vector<64x32xf32>
    %cst_44 = arith.constant dense<0.000000e+00> : vector<16x32xf32>
    %78 = tpu.matmul %76, %77, %cst_44 {dimension_numbers = #tpu.dot_dimension_numbers<[1], [0], [0], [1], [0, 0, 1, 1], [], []>} : vector<16x64xf32>, vector<64x32xf32>, vector<16x32xf32> -> vector<16x32xf32>
    %79 = vector.extract_strided_slice %39 {offsets = [1, 0, 0], sizes = [1, 16, 32], strides = [1, 1, 1]} : vector<6x16x32xf32> to vector<1x16x32xf32>
    %80 = vector.shape_cast %79 : vector<1x16x32xf32> to vector<16x32xf32>
    %81 = arith.addf %78, %80 : vector<16x32xf32>
    %82 = arith.addf %70, %81 : vector<16x32xf32>
    %cst_45 = arith.constant dense<0.000000e+00> : vector<16xf32>
    %83 = vector.multi_reduction <add>, %82, %cst_45 [1] : vector<16x32xf32> to vector<16xf32>
    %84 = vector.shape_cast %83 : vector<16xf32> to vector<16x1xf32>
    %cst_46 = arith.constant 3.200000e+01 : f32
    %85 = vector.broadcast %cst_46 : f32 to vector<16x1xf32>
    %86 = arith.divf %84, %85 : vector<16x1xf32>
    %87 = vector.broadcast %86 : vector<16x1xf32> to vector<16x32xf32>
    %88 = arith.subf %82, %87 : vector<16x32xf32>
    %89 = arith.mulf %88, %88 : vector<16x32xf32>
    %cst_47 = arith.constant dense<0.000000e+00> : vector<16xf32>
    %90 = vector.multi_reduction <add>, %89, %cst_47 [1] : vector<16x32xf32> to vector<16xf32>
    %91 = vector.shape_cast %90 : vector<16xf32> to vector<16x1xf32>
    %cst_48 = arith.constant 3.200000e+01 : f32
    %92 = vector.broadcast %cst_48 : f32 to vector<16x1xf32>
    %93 = arith.divf %91, %92 : vector<16x1xf32>
    %94 = vector.broadcast %86 : vector<16x1xf32> to vector<16x32xf32>
    %95 = arith.subf %82, %94 : vector<16x32xf32>
    %cst_49 = arith.constant 9.99999974E-6 : f32
    %96 = vector.broadcast %cst_49 : f32 to vector<16x1xf32>
    %97 = arith.addf %93, %96 : vector<16x1xf32>
    %98 = math.rsqrt %97 : vector<16x1xf32>
    %99 = vector.broadcast %98 : vector<16x1xf32> to vector<16x32xf32>
    %100 = arith.mulf %95, %99 : vector<16x32xf32>
    %101 = vector.extract_strided_slice %39 {offsets = [4, 0, 0], sizes = [1, 16, 32], strides = [1, 1, 1]} : vector<6x16x32xf32> to vector<1x16x32xf32>
    %102 = vector.shape_cast %101 : vector<1x16x32xf32> to vector<16x32xf32>
    %103 = arith.mulf %100, %102 : vector<16x32xf32>
    %104 = vector.extract_strided_slice %39 {offsets = [5, 0, 0], sizes = [1, 16, 32], strides = [1, 1, 1]} : vector<6x16x32xf32> to vector<1x16x32xf32>
    %105 = vector.shape_cast %104 : vector<1x16x32xf32> to vector<16x32xf32>
    %106 = arith.addf %103, %105 : vector<16x32xf32>
    %c0_50 = arith.constant 0 : index
    %c0_51 = arith.constant 0 : index
    %107 = vector.load %arg10[%c0_50, %c0_51] : memref<16x32xf32, #tpu.memory_space<vmem>>, vector<16x32xf32>
    tpu.vector_store %arg10[%c0_50, %c0_51], %106 {strides = array<i32>} : memref<16x32xf32, #tpu.memory_space<vmem>>, vector<16x32xf32>,
    return
  }
}

</mosaic_0001>

<llo_original>
// kernel: transformer_encoder_layer.1
$region0: #{transformer_encoder_layer.1}
  #allocation0 [shape = 'u32[]', space=smem, size = 0x4, offset = 0x4, fixed_abs, tag = 'smem constant byte address 0x4 - core index']
  #allocation1 [shape = 'u32[144,128]{1,0:T(1,128)}', space=vmem, size = 0x12000, scoped, tag = 'internal scratch']
  %s0 = inlined_call_operand.hbm [shape: f32[16,32], index: 0, kind: input, shape index: {}]
  %s1 = inlined_call_operand.vmem [shape: f32[64,16], index: 1, kind: input, shape index: {}]
  %s2 = inlined_call_operand.hbm [shape: f32[16,64], index: 2, kind: input, shape index: {}]
  %s3 = inlined_call_operand.hbm [shape: f32[3,8,8,32], index: 3, kind: input, shape index: {}]
  %s4 = inlined_call_operand.vmem [shape: f32[3,8,8,8], index: 4, kind: input, shape index: {}]
  %s5 = inlined_call_operand.hbm [shape: f32[8,8,32], index: 5, kind: input, shape index: {}]
  %s6 = inlined_call_operand.hbm [shape: f32[32,64], index: 6, kind: input, shape index: {}]
  %s7 = inlined_call_operand.vmem [shape: f32[64,32], index: 7, kind: input, shape index: {}]
  %s8 = inlined_call_operand.hbm [shape: f32[6,16,32], index: 8, kind: input, shape index: {}]
  %s9 = inlined_call_operand.vmem [shape: f32[16,64], index: 9, kind: input, shape index: {}]
  %s10 = inlined_call_operand.hbm [shape: f32[16,32], index: 10, kind: output, shape index: {0}]
  %s11 = inlined_call_operand.hbm [shape: f32[8,8,8], index: 11, kind: output, shape index: {1}]
  %12 = xla_tuple %s10, %s11
  %s13 = sld [smem:[#allocation0]]
  $region82: #{transformer_encoder_layer.1} parent=0
    _
  %s15 = ssub.s32 1, %s13
  %s16 = scalar_select 0, %s15, %s13
  $region1: #{transformer_encoder_layer.1} parent=0
    #allocation2 [shape = 'u8[8192]{0}', space=vmem, size = 0x2000, scoped, tag = 'input window, operand 0, single buffered']
    #allocation3 [shape = 's32[1]{0}', space=sflag, size = 0x4, scoped, tag = 'scoped memory for transformer_encoder_layer.1']
    #allocation4 [shape = 's32[1]{0}', space=sflag, size = 0x4, scoped, tag = 'scoped memory for transformer_encoder_layer.1']
    #allocation5 [shape = 'u8[8192]{0}', space=vmem, size = 0x2000, scoped, tag = 'input window, operand 2, single buffered']
    #allocation6 [shape = 's32[1]{0}', space=sflag, size = 0x4, scoped, tag = 'scoped memory for transformer_encoder_layer.1']
    #allocation7 [shape = 'u8[98304]{0}', space=vmem, size = 0x18000, scoped, tag = 'input window, operand 3, single buffered']
    #allocation8 [shape = 'u8[32768]{0}', space=vmem, size = 0x8000, scoped, tag = 'input window, operand 5, single buffered']
    #allocation9 [shape = 's32[1]{0}', space=sflag, size = 0x4, scoped, tag = 'scoped memory for transformer_encoder_layer.1']
    #allocation10 [shape = 'u8[16384]{0}', space=vmem, size = 0x4000, scoped, tag = 'input window, operand 6, single buffered']
    #allocation11 [shape = 'u8[49152]{0}', space=vmem, size = 0xc000, scoped, tag = 'input window, operand 8, single buffered']
    #allocation12 [shape = 's32[1]{0}', space=sflag, size = 0x4, scoped, tag = 'scoped memory for transformer_encoder_layer.1']
    #allocation13 [shape = 'u8[8192]{0}', space=vmem, size = 0x2000, scoped, tag = 'output window, operand 0, single buffered']
    #allocation14 [shape = 'u8[32768]{0}', space=vmem, size = 0x8000, scoped, tag = 'output window, operand 1, single buffered']
    #allocation15 [shape = 's32[1]{0}', space=sflag, size = 0x4, scoped, tag = 'scoped memory for transformer_encoder_layer.1']
    %17 = vsyncpa [#allocation3], 0
    %18 = vsyncpa [#allocation6], 0
    %19 = vsyncpa [#allocation9], 0
    %20 = vsyncpa [#allocation12], 0
    %21 = vsyncpa [#allocation4], 0
    %22 = vsyncpa [#allocation15], 0
    // Predicated region
    $region2: #{transformer_encoder_layer.1} parent=1 // pred_check
      _
    $region3: #{transformer_encoder_layer.1} parent=1 // pred_check_branch
      %24 = sbr.rel (0) target = $region5
    $region4: #{transformer_encoder_layer.1} parent=1 // pred_region
      %s26 = ssub.s32 256, 256
      %27 = vsyncadd [#allocation3], %s26
      %s28 = sshll.u32 [#allocation2], 4
      %s29 = int_to_ptr.vmem [resolvable:$true] %s28
      %34 = dma.hbm_to_vmem [thread:$0]  %s0, 256, %s29, [#allocation3], 128, 128, 8
    $region5: #{transformer_encoder_layer.1} parent=1 // pred_fallthru
      _
    // Predicated region
    $region6: #{transformer_encoder_layer.1} parent=1 // pred_check
      _
    $region7: #{transformer_encoder_layer.1} parent=1 // pred_check_branch
      %36 = sbr.rel (0) target = $region9
    $region8: #{transformer_encoder_layer.1} parent=1 // pred_region
      _
    $region9: #{transformer_encoder_layer.1} parent=1 // pred_fallthru
      _
    // Predicated region
    $region10: #{transformer_encoder_layer.1} parent=1 // pred_check
      _
    $region11: #{transformer_encoder_layer.1} parent=1 // pred_check_branch
      %38 = sbr.rel (0) target = $region13
    $region12: #{transformer_encoder_layer.1} parent=1 // pred_region
      %s40 = ssub.s32 256, 256
      %41 = vsyncadd [#allocation6], %s40
      %s42 = sshll.u32 [#allocation5], 4
      %s43 = int_to_ptr.vmem [resolvable:$true] %s42
      %48 = dma.hbm_to_vmem [thread:$0]  %s2, 256, %s43, [#allocation6], 128, 128, 8
    $region13: #{transformer_encoder_layer.1} parent=1 // pred_fallthru
      _
    // Predicated region
    $region14: #{transformer_encoder_layer.1} parent=1 // pred_check
      _
    $region15: #{transformer_encoder_layer.1} parent=1 // pred_check_branch
      %50 = sbr.rel (0) target = $region17
    $region16: #{transformer_encoder_layer.1} parent=1 // pred_region
      %s52 = ssub.s32 3072, 3072
      %53 = vsyncadd [#allocation6], %s52
      %s54 = sshll.u32 [#allocation7], 4
      %s55 = int_to_ptr.vmem [resolvable:$true] %s54
      %60 = dma.hbm_to_vmem [thread:$0]  %s3, 3072, %s55, [#allocation6], 128, 128, 8
    $region17: #{transformer_encoder_layer.1} parent=1 // pred_fallthru
      _
    // Predicated region
    $region18: #{transformer_encoder_layer.1} parent=1 // pred_check
      _
    $region19: #{transformer_encoder_layer.1} parent=1 // pred_check_branch
      %62 = sbr.rel (0) target = $region21
    $region20: #{transformer_encoder_layer.1} parent=1 // pred_region
      _
    $region21: #{transformer_encoder_layer.1} parent=1 // pred_fallthru
      _
    // Predicated region
    $region22: #{transformer_encoder_layer.1} parent=1 // pred_check
      _
    $region23: #{transformer_encoder_layer.1} parent=1 // pred_check_branch
      %64 = sbr.rel (0) target = $region25
    $region24: #{transformer_encoder_layer.1} parent=1 // pred_region
      %s66 = ssub.s32 1024, 1024
      %67 = vsyncadd [#allocation9], %s66
      %s68 = sshll.u32 [#allocation8], 4
      %s69 = int_to_ptr.vmem [resolvable:$true] %s68
      %74 = dma.hbm_to_vmem [thread:$0]  %s5, 1024, %s69, [#allocation9], 128, 128, 8
    $region25: #{transformer_encoder_layer.1} parent=1 // pred_fallthru
      _
    // Predicated region
    $region26: #{transformer_encoder_layer.1} parent=1 // pred_check
      _
    $region27: #{transformer_encoder_layer.1} parent=1 // pred_check_branch
      %76 = sbr.rel (0) target = $region29
    $region28: #{transformer_encoder_layer.1} parent=1 // pred_region
      %s78 = ssub.s32 512, 512
      %79 = vsyncadd [#allocation9], %s78
      %s80 = sshll.u32 [#allocation10], 4
      %s81 = int_to_ptr.vmem [resolvable:$true] %s80
      %86 = dma.hbm_to_vmem [thread:$0]  %s6, 512, %s81, [#allocation9], 128, 128, 8
    $region29: #{transformer_encoder_layer.1} parent=1 // pred_fallthru
      _
    // Predicated region
    $region30: #{transformer_encoder_layer.1} parent=1 // pred_check
      _
    $region31: #{transformer_encoder_layer.1} parent=1 // pred_check_branch
      %88 = sbr.rel (0) target = $region33
    $region32: #{transformer_encoder_layer.1} parent=1 // pred_region
      _
    $region33: #{transformer_encoder_layer.1} parent=1 // pred_fallthru
      _
    // Predicated region
    $region34: #{transformer_encoder_layer.1} parent=1 // pred_check
      _
    $region35: #{transformer_encoder_layer.1} parent=1 // pred_check_branch
      %90 = sbr.rel (0) target = $region37
    $region36: #{transformer_encoder_layer.1} parent=1 // pred_region
      %s92 = ssub.s32 1536, 1536
      %93 = vsyncadd [#allocation12], %s92
      %s94 = sshll.u32 [#allocation11], 4
      %s95 = int_to_ptr.vmem [resolvable:$true] %s94
      %100 = dma.hbm_to_vmem [thread:$0]  %s8, 1536, %s95, [#allocation12], 128, 128, 8
    $region37: #{transformer_encoder_layer.1} parent=1 // pred_fallthru
      _
    // Predicated region
    $region38: #{transformer_encoder_layer.1} parent=1 // pred_check
      _
    $region39: #{transformer_encoder_layer.1} parent=1 // pred_check_branch
      %102 = sbr.rel (0) target = $region41
    $region40: #{transformer_encoder_layer.1} parent=1 // pred_region
      _
    $region41: #{transformer_encoder_layer.1} parent=1 // pred_fallthru
      _
    // Predicated region
    $region42: #{transformer_encoder_layer.1} parent=1 // pred_check
      _
    $region43: #{transformer_encoder_layer.1} parent=1 // pred_check_branch
      %104 = sbr.rel (0) target = $region45
    $region44: #{transformer_encoder_layer.1} parent=1 // pred_region
      %105 = dma.done [#allocation3], 256
    $region45: #{transformer_encoder_layer.1} parent=1 // pred_fallthru
      _
    // Predicated region
    $region46: #{transformer_encoder_layer.1} parent=1 // pred_check
      _
    $region47: #{transformer_encoder_layer.1} parent=1 // pred_check_branch
      %107 = sbr.rel (0) target = $region49
    $region48: #{transformer_encoder_layer.1} parent=1 // pred_region
      %108 = dma.done [#allocation6], 256
    $region49: #{transformer_encoder_layer.1} parent=1 // pred_fallthru
      _
    // Predicated region
    $region50: #{transformer_encoder_layer.1} parent=1 // pred_check
      _
    $region51: #{transformer_encoder_layer.1} parent=1 // pred_check_branch
      %110 = sbr.rel (0) target = $region53
    $region52: #{transformer_encoder_layer.1} parent=1 // pred_region
      %111 = dma.done [#allocation6], 3072
    $region53: #{transformer_encoder_layer.1} parent=1 // pred_fallthru
      _
    // Predicated region
    $region54: #{transformer_encoder_layer.1} parent=1 // pred_check
      _
    $region55: #{transformer_encoder_layer.1} parent=1 // pred_check_branch
      %113 = sbr.rel (0) target = $region57
    $region56: #{transformer_encoder_layer.1} parent=1 // pred_region
      %114 = dma.done [#allocation9], 1024
    $region57: #{transformer_encoder_layer.1} parent=1 // pred_fallthru
      _
    // Predicated region
    $region58: #{transformer_encoder_layer.1} parent=1 // pred_check
      _
    $region59: #{transformer_encoder_layer.1} parent=1 // pred_check_branch
      %116 = sbr.rel (0) target = $region61
    $region60: #{transformer_encoder_layer.1} parent=1 // pred_region
      %117 = dma.done [#allocation9], 512
    $region61: #{transformer_encoder_layer.1} parent=1 // pred_fallthru
      _
    // Predicated region
    $region62: #{transformer_encoder_layer.1} parent=1 // pred_check
      _
    $region63: #{transformer_encoder_layer.1} parent=1 // pred_check_branch
      %119 = sbr.rel (0) target = $region65
    $region64: #{transformer_encoder_layer.1} parent=1 // pred_region
      %120 = dma.done [#allocation12], 1536
    $region65: #{transformer_encoder_layer.1} parent=1 // pred_fallthru
      _
    %v121 = vld [vmem:[#allocation2] sm:$0xff]
    %v122 = vld [vmem:[#allocation2 + $0x8] sm:$0xff]
    %v123 = vld [vmem:[%s1] sm:$0xff]
    %v124 = vld [vmem:[%s1 + $0x8] sm:$0xff]
    %v125 = vld [vmem:[%s1 + $0x10] sm:$0xff]
    %v126 = vld [vmem:[%s1 + $0x18] sm:$0xff]
    %v127 = vld [vmem:[%s1 + $0x20] sm:$0xff]
    %v128 = vld [vmem:[%s1 + $0x28] sm:$0xff]
    %v129 = vld [vmem:[%s1 + $0x30] sm:$0xff]
    %v130 = vld [vmem:[%s1 + $0x38] sm:$0xff]
    %vm131 = vcmask 130048
    %v133 = vsel %vm131, %v123, 0
    %v136 = vsel %vm131, %v124, 0
    %v139 = vsel %vm131, %v125, 0
    %v142 = vsel %vm131, %v126, 0
    %v145 = vsel %vm131, %v127, 0
    %v148 = vsel %vm131, %v128, 0
    %v151 = vsel %vm131, %v129, 0
    %v154 = vsel %vm131, %v130, 0
    %156 = vmatprep.subr.mxu0 0.0
    %157 = vmatpush1.msra.mxu0 %v121
    %158 = vmatprep.subr.mxu0 0.0
    %159 = vmatpush1.msra.mxu0 %v122
    %160 = vmatprep.subr.mxu0 0.0
    %161 = vmatpush1.msra.mxu0 0.0
    %162 = vmatprep.subr.mxu0 0.0
    %163 = vmatpush1.msra.mxu0 0.0
    %164 = vmatprep.subr.mxu0 0.0
    %165 = vmatpush1.msra.mxu0 0.0
    %166 = vmatprep.subr.mxu0 0.0
    %167 = vmatpush1.msra.mxu0 0.0
    %168 = vmatprep.subr.mxu0 0.0
    %169 = vmatpush1.msra.mxu0 0.0
    %170 = vmatprep.subr.mxu0 0.0
    %171 = vmatpush1.msra.mxu0 0.0
    %172 = vmatprep.subr.mxu0 0.0
    %173 = vmatpush1.msra.mxu0 0.0
    %174 = vmatprep.subr.mxu0 0.0
    %175 = vmatpush1.msra.mxu0 0.0
    %176 = vmatprep.subr.mxu0 0.0
    %177 = vmatpush1.msra.mxu0 0.0
    %178 = vmatprep.subr.mxu0 0.0
    %179 = vmatpush1.msra.mxu0 0.0
    %180 = vmatprep.subr.mxu0 0.0
    %181 = vmatpush1.msra.mxu0 0.0
    %182 = vmatprep.subr.mxu0 0.0
    %183 = vmatpush1.msra.mxu0 0.0
    %184 = vmatprep.subr.mxu0 0.0
    %185 = vmatpush1.msra.mxu0 0.0
    %186 = vmatprep.subr.mxu0 0.0
    %187 = vmatpush1.msra.mxu0 0.0
    %188 = vmatprep.subr.mxu0 0.0
    %189 = vmatpush1.msra.mxu0 0.0
    %190 = vmatprep.subr.mxu0 0.0
    %191 = vmatpush1.msra.mxu0 0.0
    %192 = vmatprep.subr.mxu0 0.0
    %193 = vmatpush1.msra.mxu0 0.0
    %194 = vmatprep.subr.mxu0 0.0
    %195 = vmatpush1.msra.mxu0 0.0
    %196 = vmatprep.subr.mxu0 0.0
    %197 = vmatpush1.msra.mxu0 0.0
    %198 = vmatprep.subr.mxu0 0.0
    %199 = vmatpush1.msra.mxu0 0.0
    %200 = vmatprep.subr.mxu0 0.0
    %201 = vmatpush1.msra.mxu0 0.0
    %202 = vmatprep.subr.mxu0 0.0
    %203 = vmatpush1.msra.mxu0 0.0
    %204 = vmatprep.subr.mxu0 0.0
    %205 = vmatpush1.msra.mxu0 0.0
    %206 = vmatprep.subr.mxu0 0.0
    %207 = vmatpush1.msra.mxu0 0.0
    %208 = vmatprep.subr.mxu0 0.0
    %209 = vmatpush1.msra.mxu0 0.0
    %210 = vmatprep.subr.mxu0 0.0
    %211 = vmatpush1.msra.mxu0 0.0
    %212 = vmatprep.subr.mxu0 0.0
    %213 = vmatpush1.msra.mxu0 0.0
    %214 = vmatprep.subr.mxu0 0.0
    %215 = vmatpush1.msra.mxu0 0.0
    %216 = vmatprep.subr.mxu0 0.0
    %217 = vmatpush1.msra.mxu0 0.0
    %218 = vmatprep.subr.mxu0 0.0
    %219 = vmatpush1.msra.mxu0 0.0
    %220 = vmatprep.mubr.f32.mxu0 0.0
    %221 = vmatmul.mubr.f32.gmra.mrb[0].mxu0 %v133
    %v222 = vpop.f32.mrb[0].mxu0
    %v223 = vadd.f32 0.0, %v222
    %v224 = vpop.f32.mrb[0].mxu0
    %225 = vmatprep.mubr.f32.mxu0 0.0
    %226 = vmatmul.mubr.f32.gmra.mrb[0].mxu0 %v136
    %v227 = vpop.f32.mrb[0].mxu0
    %v228 = vadd.f32 0.0, %v227
    %v229 = vpop.f32.mrb[0].mxu0
    %230 = vmatprep.mubr.f32.mxu0 0.0
    %231 = vmatmul.mubr.f32.gmra.mrb[0].mxu0 %v139
    %v232 = vpop.f32.mrb[0].mxu0
    %v233 = vadd.f32 0.0, %v232
    %v234 = vpop.f32.mrb[0].mxu0
    %235 = vmatprep.mubr.f32.mxu0 0.0
    %236 = vmatmul.mubr.f32.gmra.mrb[0].mxu0 %v142
    %v237 = vpop.f32.mrb[0].mxu0
    %v238 = vadd.f32 0.0, %v237
    %v239 = vpop.f32.mrb[0].mxu0
    %240 = vmatprep.mubr.f32.mxu0 0.0
    %241 = vmatmul.mubr.f32.gmra.mrb[0].mxu0 %v145
    %v242 = vpop.f32.mrb[0].mxu0
    %v243 = vadd.f32 0.0, %v242
    %v244 = vpop.f32.mrb[0].mxu0
    %245 = vmatprep.mubr.f32.mxu0 0.0
    %246 = vmatmul.mubr.f32.gmra.mrb[0].mxu0 %v148
    %v247 = vpop.f32.mrb[0].mxu0
    %v248 = vadd.f32 0.0, %v247
    %v249 = vpop.f32.mrb[0].mxu0
    %250 = vmatprep.mubr.f32.mxu0 0.0
    %251 = vmatmul.mubr.f32.gmra.mrb[0].mxu0 %v151
    %v252 = vpop.f32.mrb[0].mxu0
    %v253 = vadd.f32 0.0, %v252
    %v254 = vpop.f32.mrb[0].mxu0
    %255 = vmatprep.mubr.f32.mxu0 0.0
    %256 = vmatmul.mubr.f32.gmra.mrb[0].mxu0 %v154
    %v257 = vpop.f32.mrb[0].mxu0
    %v258 = vadd.f32 0.0, %v257
    %v259 = vpop.f32.mrb[0].mxu0
    %260 = vdwg.mxu0
    %v261 = vld [vmem:[#allocation7] sm:$0xff]
    %v262 = vld [vmem:[#allocation7 + $0x8] sm:$0xff]
    %v263 = vld [vmem:[#allocation7 + $0x10] sm:$0xff]
    %v264 = vld [vmem:[#allocation7 + $0x18] sm:$0xff]
    %v265 = vld [vmem:[#allocation7 + $0x20] sm:$0xff]
    %v266 = vld [vmem:[#allocation7 + $0x28] sm:$0xff]
    %v267 = vld [vmem:[#allocation7 + $0x30] sm:$0xff]
    %v268 = vld [vmem:[#allocation7 + $0x38] sm:$0xff]
    %v269 = vld [vmem:[#allocation7 + $0x40] sm:$0xff]
    %v270 = vld [vmem:[#allocation7 + $0x48] sm:$0xff]
    %v271 = vld [vmem:[#allocation7 + $0x50] sm:$0xff]
    %v272 = vld [vmem:[#allocation7 + $0x58] sm:$0xff]
    %v273 = vld [vmem:[#allocation7 + $0x60] sm:$0xff]
    %v274 = vld [vmem:[#allocation7 + $0x68] sm:$0xff]
    %v275 = vld [vmem:[#allocation7 + $0x70] sm:$0xff]
    %v276 = vld [vmem:[#allocation7 + $0x78] sm:$0xff]
    %v277 = vld [vmem:[#allocation7 + $0x80] sm:$0xff]
    %v278 = vld [vmem:[#allocation7 + $0x88] sm:$0xff]
    %v279 = vld [vmem:[#allocation7 + $0x90] sm:$0xff]
    %v280 = vld [vmem:[#allocation7 + $0x98] sm:$0xff]
    %v281 = vld [vmem:[#allocation7 + $0xa0] sm:$0xff]
    %v282 = vld [vmem:[#allocation7 + $0xa8] sm:$0xff]
    %v283 = vld [vmem:[#allocation7 + $0xb0] sm:$0xff]
    %v284 = vld [vmem:[#allocation7 + $0xb8] sm:$0xff]
    %v285 = vld [vmem:[%s4] sm:$0xff]
    %v286 = vld [vmem:[%s4 + $0x8] sm:$0xff]
    %v287 = vld [vmem:[%s4 + $0x10] sm:$0xff]
    %v288 = vld [vmem:[%s4 + $0x18] sm:$0xff]
    %v289 = vld [vmem:[%s4 + $0x20] sm:$0xff]
    %v290 = vld [vmem:[%s4 + $0x28] sm:$0xff]
    %v291 = vld [vmem:[%s4 + $0x30] sm:$0xff]
    %v292 = vld [vmem:[%s4 + $0x38] sm:$0xff]
    %v293 = vld [vmem:[%s4 + $0x40] sm:$0xff]
    %v294 = vld [vmem:[%s4 + $0x48] sm:$0xff]
    %v295 = vld [vmem:[%s4 + $0x50] sm:$0xff]
    %v296 = vld [vmem:[%s4 + $0x58] sm:$0xff]
    %v297 = vld [vmem:[%s4 + $0x60] sm:$0xff]
    %v298 = vld [vmem:[%s4 + $0x68] sm:$0xff]
    %v299 = vld [vmem:[%s4 + $0x70] sm:$0xff]
    %v300 = vld [vmem:[%s4 + $0x78] sm:$0xff]
    %v301 = vld [vmem:[%s4 + $0x80] sm:$0xff]
    %v302 = vld [vmem:[%s4 + $0x88] sm:$0xff]
    %v303 = vld [vmem:[%s4 + $0x90] sm:$0xff]
    %v304 = vld [vmem:[%s4 + $0x98] sm:$0xff]
    %v305 = vld [vmem:[%s4 + $0xa0] sm:$0xff]
    %v306 = vld [vmem:[%s4 + $0xa8] sm:$0xff]
    %v307 = vld [vmem:[%s4 + $0xb0] sm:$0xff]
    %v308 = vld [vmem:[%s4 + $0xb8] sm:$0xff]
    %vm309 = vcmask 261120
    %v311 = vsel %vm309, %v223, 0
    %v314 = vsel %vm309, %v261, 0
    %316 = vmatprep.subr.mxu0 0.0
    %317 = vmatpush1.xpose.msra.mxu0 %v314
    %318 = vmatprep.subr.mxu0 0.0
    %319 = vmatpush1.xpose.msra.mxu0 0.0
    %320 = vmatprep.subr.mxu0 0.0
    %321 = vmatpush1.xpose.msra.mxu0 0.0
    %322 = vmatprep.subr.mxu0 0.0
    %323 = vmatpush1.xpose.msra.mxu0 0.0
    %324 = vmatprep.subr.mxu0 0.0
    %325 = vmatpush1.xpose.msra.mxu0 0.0
    %326 = vmatprep.subr.mxu0 0.0
    %327 = vmatpush1.xpose.msra.mxu0 0.0
    %328 = vmatprep.subr.mxu0 0.0
    %329 = vmatpush1.xpose.msra.mxu0 0.0
    %330 = vmatprep.subr.mxu0 0.0
    %331 = vmatpush1.xpose.msra.mxu0 0.0
    %332 = vmatprep.subr.mxu0 0.0
    %333 = vmatpush1.xpose.msra.mxu0 0.0
    %334 = vmatprep.subr.mxu0 0.0
    %335 = vmatpush1.xpose.msra.mxu0 0.0
    %336 = vmatprep.subr.mxu0 0.0
    %337 = vmatpush1.xpose.msra.mxu0 0.0
    %338 = vmatprep.subr.mxu0 0.0
    %339 = vmatpush1.xpose.msra.mxu0 0.0
    %340 = vmatprep.subr.mxu0 0.0
    %341 = vmatpush1.xpose.msra.mxu0 0.0
    %342 = vmatprep.subr.mxu0 0.0
    %343 = vmatpush1.xpose.msra.mxu0 0.0
    %344 = vmatprep.subr.mxu0 0.0
    %345 = vmatpush1.xpose.msra.mxu0 0.0
    %346 = vmatprep.subr.mxu0 0.0
    %347 = vmatpush1.xpose.msra.mxu0 0.0
    %348 = vmatprep.subr.mxu0 0.0
    %349 = vmatpush1.xpose.msra.mxu0 0.0
    %350 = vmatprep.subr.mxu0 0.0
    %351 = vmatpush1.xpose.msra.mxu0 0.0
    %352 = vmatprep.subr.mxu0 0.0
    %353 = vmatpush1.xpose.msra.mxu0 0.0
    %354 = vmatprep.subr.mxu0 0.0
    %355 = vmatpush1.xpose.msra.mxu0 0.0
    %356 = vmatprep.subr.mxu0 0.0
    %357 = vmatpush1.xpose.msra.mxu0 0.0
    %358 = vmatprep.subr.mxu0 0.0
    %359 = vmatpush1.xpose.msra.mxu0 0.0
    %360 = vmatprep.subr.mxu0 0.0
    %361 = vmatpush1.xpose.msra.mxu0 0.0
    %362 = vmatprep.subr.mxu0 0.0
    %363 = vmatpush1.xpose.msra.mxu0 0.0
    %364 = vmatprep.subr.mxu0 0.0
    %365 = vmatpush1.xpose.msra.mxu0 0.0
    %366 = vmatprep.subr.mxu0 0.0
    %367 = vmatpush1.xpose.msra.mxu0 0.0
    %368 = vmatprep.subr.mxu0 0.0
    %369 = vmatpush1.xpose.msra.mxu0 0.0
    %370 = vmatprep.subr.mxu0 0.0
    %371 = vmatpush1.xpose.msra.mxu0 0.0
    %372 = vmatprep.subr.mxu0 0.0
    %373 = vmatpush1.xpose.msra.mxu0 0.0
    %374 = vmatprep.subr.mxu0 0.0
    %375 = vmatpush1.xpose.msra.mxu0 0.0
    %376 = vmatprep.subr.mxu0 0.0
    %377 = vmatpush1.xpose.msra.mxu0 0.0
    %378 = vmatprep.subr.mxu0 0.0
    %379 = vmatpush1.xpose.msra.mxu0 0.0
    %380 = vmatprep.mubr.f32.mxu0 0.0
    %381 = vmatmul.mubr.f32.gmra.mrb[0].mxu0 %v311
    %v382 = vpop.f32.mrb[0].mxu0
    %v383 = vadd.f32 %v285, %v382
    %v384 = vpop.f32.mrb[0].mxu0
    %385 = vdwg.mxu0
    %v387 = vsel %vm309, %v228, 0
    %v390 = vsel %vm309, %v262, 0
    %392 = vmatprep.subr.mxu0 0.0
    %393 = vmatpush1.xpose.msra.mxu0 %v390
    %394 = vmatprep.subr.mxu0 0.0
    %395 = vmatpush1.xpose.msra.mxu0 0.0
    %396 = vmatprep.subr.mxu0 0.0
    %397 = vmatpush1.xpose.msra.mxu0 0.0
    %398 = vmatprep.subr.mxu0 0.0
    %399 = vmatpush1.xpose.msra.mxu0 0.0
    %400 = vmatprep.subr.mxu0 0.0
    %401 = vmatpush1.xpose.msra.mxu0 0.0
    %402 = vmatprep.subr.mxu0 0.0
    %403 = vmatpush1.xpose.msra.mxu0 0.0
    %404 = vmatprep.subr.mxu0 0.0
    %405 = vmatpush1.xpose.msra.mxu0 0.0
    %406 = vmatprep.subr.mxu0 0.0
    %407 = vmatpush1.xpose.msra.mxu0 0.0
    %408 = vmatprep.subr.mxu0 0.0
    %409 = vmatpush1.xpose.msra.mxu0 0.0
    %410 = vmatprep.subr.mxu0 0.0
    %411 = vmatpush1.xpose.msra.mxu0 0.0
    %412 = vmatprep.subr.mxu0 0.0
    %413 = vmatpush1.xpose.msra.mxu0 0.0
    %414 = vmatprep.subr.mxu0 0.0
    %415 = vmatpush1.xpose.msra.mxu0 0.0
    %416 = vmatprep.subr.mxu0 0.0
    %417 = vmatpush1.xpose.msra.mxu0 0.0
    %418 = vmatprep.subr.mxu0 0.0
    %419 = vmatpush1.xpose.msra.mxu0 0.0
    %420 = vmatprep.subr.mxu0 0.0
    %421 = vmatpush1.xpose.msra.mxu0 0.0
    %422 = vmatprep.subr.mxu0 0.0
    %423 = vmatpush1.xpose.msra.mxu0 0.0
    %424 = vmatprep.subr.mxu0 0.0
    %425 = vmatpush1.xpose.msra.mxu0 0.0
    %426 = vmatprep.subr.mxu0 0.0
    %427 = vmatpush1.xpose.msra.mxu0 0.0
    %428 = vmatprep.subr.mxu0 0.0
    %429 = vmatpush1.xpose.msra.mxu0 0.0
    %430 = vmatprep.subr.mxu0 0.0
    %431 = vmatpush1.xpose.msra.mxu0 0.0
    %432 = vmatprep.subr.mxu0 0.0
    %433 = vmatpush1.xpose.msra.mxu0 0.0
    %434 = vmatprep.subr.mxu0 0.0
    %435 = vmatpush1.xpose.msra.mxu0 0.0
    %436 = vmatprep.subr.mxu0 0.0
    %437 = vmatpush1.xpose.msra.mxu0 0.0
    %438 = vmatprep.subr.mxu0 0.0
    %439 = vmatpush1.xpose.msra.mxu0 0.0
    %440 = vmatprep.subr.mxu0 0.0
    %441 = vmatpush1.xpose.msra.mxu0 0.0
    %442 = vmatprep.subr.mxu0 0.0
    %443 = vmatpush1.xpose.msra.mxu0 0.0
    %444 = vmatprep.subr.mxu0 0.0
    %445 = vmatpush1.xpose.msra.mxu0 0.0
    %446 = vmatprep.subr.mxu0 0.0
    %447 = vmatpush1.xpose.msra.mxu0 0.0
    %448 = vmatprep.subr.mxu0 0.0
    %449 = vmatpush1.xpose.msra.mxu0 0.0
    %450 = vmatprep.subr.mxu0 0.0
    %451 = vmatpush1.xpose.msra.mxu0 0.0
    %452 = vmatprep.subr.mxu0 0.0
    %453 = vmatpush1.xpose.msra.mxu0 0.0
    %454 = vmatprep.subr.mxu0 0.0
    %455 = vmatpush1.xpose.msra.mxu0 0.0
    %456 = vmatprep.mubr.f32.mxu0 0.0
    %457 = vmatmul.mubr.f32.gmra.mrb[0].mxu0 %v387
    %v458 = vpop.f32.mrb[0].mxu0
    %v459 = vadd.f32 %v286, %v458
    %v460 = vpop.f32.mrb[0].mxu0
    %461 = vdwg.mxu0
    %v463 = vsel %vm309, %v233, 0
    %v466 = vsel %vm309, %v263, 0
    %468 = vmatprep.subr.mxu0 0.0
    %469 = vmatpush1.xpose.msra.mxu0 %v466
    %470 = vmatprep.subr.mxu0 0.0
    %471 = vmatpush1.xpose.msra.mxu0 0.0
    %472 = vmatprep.subr.mxu0 0.0
    %473 = vmatpush1.xpose.msra.mxu0 0.0
    %474 = vmatprep.subr.mxu0 0.0
    %475 = vmatpush1.xpose.msra.mxu0 0.0
    %476 = vmatprep.subr.mxu0 0.0
    %477 = vmatpush1.xpose.msra.mxu0 0.0
    %478 = vmatprep.subr.mxu0 0.0
    %479 = vmatpush1.xpose.msra.mxu0 0.0
    %480 = vmatprep.subr.mxu0 0.0
    %481 = vmatpush1.xpose.msra.mxu0 0.0
    %482 = vmatprep.subr.mxu0 0.0
    %483 = vmatpush1.xpose.msra.mxu0 0.0
    %484 = vmatprep.subr.mxu0 0.0
    %485 = vmatpush1.xpose.msra.mxu0 0.0
    %486 = vmatprep.subr.mxu0 0.0
    %487 = vmatpush1.xpose.msra.mxu0 0.0
    %488 = vmatprep.subr.mxu0 0.0
    %489 = vmatpush1.xpose.msra.mxu0 0.0
    %490 = vmatprep.subr.mxu0 0.0
    %491 = vmatpush1.xpose.msra.mxu0 0.0
    %492 = vmatprep.subr.mxu0 0.0
    %493 = vmatpush1.xpose.msra.mxu0 0.0
    %494 = vmatprep.subr.mxu0 0.0
    %495 = vmatpush1.xpose.msra.mxu0 0.0
    %496 = vmatprep.subr.mxu0 0.0
    %497 = vmatpush1.xpose.msra.mxu0 0.0
    %498 = vmatprep.subr.mxu0 0.0
    %499 = vmatpush1.xpose.msra.mxu0 0.0
    %500 = vmatprep.subr.mxu0 0.0
    %501 = vmatpush1.xpose.msra.mxu0 0.0
    %502 = vmatprep.subr.mxu0 0.0
    %503 = vmatpush1.xpose.msra.mxu0 0.0
    %504 = vmatprep.subr.mxu0 0.0
    %505 = vmatpush1.xpose.msra.mxu0 0.0
    %506 = vmatprep.subr.mxu0 0.0
    %507 = vmatpush1.xpose.msra.mxu0 0.0
    %508 = vmatprep.subr.mxu0 0.0
    %509 = vmatpush1.xpose.msra.mxu0 0.0
    %510 = vmatprep.subr.mxu0 0.0
    %511 = vmatpush1.xpose.msra.mxu0 0.0
    %512 = vmatprep.subr.mxu0 0.0
    %513 = vmatpush1.xpose.msra.mxu0 0.0
    %514 = vmatprep.subr.mxu0 0.0
    %515 = vmatpush1.xpose.msra.mxu0 0.0
    %516 = vmatprep.subr.mxu0 0.0
    %517 = vmatpush1.xpose.msra.mxu0 0.0
    %518 = vmatprep.subr.mxu0 0.0
    %519 = vmatpush1.xpose.msra.mxu0 0.0
    %520 = vmatprep.subr.mxu0 0.0
    %521 = vmatpush1.xpose.msra.mxu0 0.0
    %522 = vmatprep.subr.mxu0 0.0
    %523 = vmatpush1.xpose.msra.mxu0 0.0
    %524 = vmatprep.subr.mxu0 0.0
    %525 = vmatpush1.xpose.msra.mxu0 0.0
    %526 = vmatprep.subr.mxu0 0.0
    %527 = vmatpush1.xpose.msra.mxu0 0.0
    %528 = vmatprep.subr.mxu0 0.0
    %529 = vmatpush1.xpose.msra.mxu0 0.0
    %530 = vmatprep.subr.mxu0 0.0
    %531 = vmatpush1.xpose.msra.mxu0 0.0
    %532 = vmatprep.mubr.f32.mxu0 0.0
    %533 = vmatmul.mubr.f32.gmra.mrb[0].mxu0 %v463
    %v534 = vpop.f32.mrb[0].mxu0
    %v535 = vadd.f32 %v287, %v534
    %v536 = vpop.f32.mrb[0].mxu0
    %537 = vdwg.mxu0
    %v539 = vsel %vm309, %v238, 0
    %v542 = vsel %vm309, %v264, 0
    %544 = vmatprep.subr.mxu0 0.0
    %545 = vmatpush1.xpose.msra.mxu0 %v542
    %546 = vmatprep.subr.mxu0 0.0
    %547 = vmatpush1.xpose.msra.mxu0 0.0
    %548 = vmatprep.subr.mxu0 0.0
    %549 = vmatpush1.xpose.msra.mxu0 0.0
    %550 = vmatprep.subr.mxu0 0.0
    %551 = vmatpush1.xpose.msra.mxu0 0.0
    %552 = vmatprep.subr.mxu0 0.0
    %553 = vmatpush1.xpose.msra.mxu0 0.0
    %554 = vmatprep.subr.mxu0 0.0
    %555 = vmatpush1.xpose.msra.mxu0 0.0
    %556 = vmatprep.subr.mxu0 0.0
    %557 = vmatpush1.xpose.msra.mxu0 0.0
    %558 = vmatprep.subr.mxu0 0.0
    %559 = vmatpush1.xpose.msra.mxu0 0.0
    %560 = vmatprep.subr.mxu0 0.0
    %561 = vmatpush1.xpose.msra.mxu0 0.0
    %562 = vmatprep.subr.mxu0 0.0
    %563 = vmatpush1.xpose.msra.mxu0 0.0
    %564 = vmatprep.subr.mxu0 0.0
    %565 = vmatpush1.xpose.msra.mxu0 0.0
    %566 = vmatprep.subr.mxu0 0.0
    %567 = vmatpush1.xpose.msra.mxu0 0.0
    %568 = vmatprep.subr.mxu0 0.0
    %569 = vmatpush1.xpose.msra.mxu0 0.0
    %570 = vmatprep.subr.mxu0 0.0
    %571 = vmatpush1.xpose.msra.mxu0 0.0
    %572 = vmatprep.subr.mxu0 0.0
    %573 = vmatpush1.xpose.msra.mxu0 0.0
    %574 = vmatprep.subr.mxu0 0.0
    %575 = vmatpush1.xpose.msra.mxu0 0.0
    %576 = vmatprep.subr.mxu0 0.0
    %577 = vmatpush1.xpose.msra.mxu0 0.0
    %578 = vmatprep.subr.mxu0 0.0
    %579 = vmatpush1.xpose.msra.mxu0 0.0
    %580 = vmatprep.subr.mxu0 0.0
    %581 = vmatpush1.xpose.msra.mxu0 0.0
    %582 = vmatprep.subr.mxu0 0.0
    %583 = vmatpush1.xpose.msra.mxu0 0.0
    %584 = vmatprep.subr.mxu0 0.0
    %585 = vmatpush1.xpose.msra.mxu0 0.0
    %586 = vmatprep.subr.mxu0 0.0
    %587 = vmatpush1.xpose.msra.mxu0 0.0
    %588 = vmatprep.subr.mxu0 0.0
    %589 = vmatpush1.xpose.msra.mxu0 0.0
    %590 = vmatprep.subr.mxu0 0.0
    %591 = vmatpush1.xpose.msra.mxu0 0.0
    %592 = vmatprep.subr.mxu0 0.0
    %593 = vmatpush1.xpose.msra.mxu0 0.0
    %594 = vmatprep.subr.mxu0 0.0
    %595 = vmatpush1.xpose.msra.mxu0 0.0
    %596 = vmatprep.subr.mxu0 0.0
    %597 = vmatpush1.xpose.msra.mxu0 0.0
    %598 = vmatprep.subr.mxu0 0.0
    %599 = vmatpush1.xpose.msra.mxu0 0.0
    %600 = vmatprep.subr.mxu0 0.0
    %601 = vmatpush1.xpose.msra.mxu0 0.0
    %602 = vmatprep.subr.mxu0 0.0
    %603 = vmatpush1.xpose.msra.mxu0 0.0
    %604 = vmatprep.subr.mxu0 0.0
    %605 = vmatpush1.xpose.msra.mxu0 0.0
    %606 = vmatprep.subr.mxu0 0.0
    %607 = vmatpush1.xpose.msra.mxu0 0.0
    %608 = vmatprep.mubr.f32.mxu0 0.0
    %609 = vmatmul.mubr.f32.gmra.mrb[0].mxu0 %v539
    %v610 = vpop.f32.mrb[0].mxu0
    %v611 = vadd.f32 %v288, %v610
    %v612 = vpop.f32.mrb[0].mxu0
    %613 = vdwg.mxu0
    %v615 = vsel %vm309, %v243, 0
    %v618 = vsel %vm309, %v265, 0
    %620 = vmatprep.subr.mxu0 0.0
    %621 = vmatpush1.xpose.msra.mxu0 %v618
    %622 = vmatprep.subr.mxu0 0.0
    %623 = vmatpush1.xpose.msra.mxu0 0.0
    %624 = vmatprep.subr.mxu0 0.0
    %625 = vmatpush1.xpose.msra.mxu0 0.0
    %626 = vmatprep.subr.mxu0 0.0
    %627 = vmatpush1.xpose.msra.mxu0 0.0
    %628 = vmatprep.subr.mxu0 0.0
    %629 = vmatpush1.xpose.msra.mxu0 0.0
    %630 = vmatprep.subr.mxu0 0.0
    %631 = vmatpush1.xpose.msra.mxu0 0.0
    %632 = vmatprep.subr.mxu0 0.0
    %633 = vmatpush1.xpose.msra.mxu0 0.0
    %634 = vmatprep.subr.mxu0 0.0
    %635 = vmatpush1.xpose.msra.mxu0 0.0
    %636 = vmatprep.subr.mxu0 0.0
    %637 = vmatpush1.xpose.msra.mxu0 0.0
    %638 = vmatprep.subr.mxu0 0.0
    %639 = vmatpush1.xpose.msra.mxu0 0.0
    %640 = vmatprep.subr.mxu0 0.0
    %641 = vmatpush1.xpose.msra.mxu0 0.0
    %642 = vmatprep.subr.mxu0 0.0
    %643 = vmatpush1.xpose.msra.mxu0 0.0
    %644 = vmatprep.subr.mxu0 0.0
    %645 = vmatpush1.xpose.msra.mxu0 0.0
    %646 = vmatprep.subr.mxu0 0.0
    %647 = vmatpush1.xpose.msra.mxu0 0.0
    %648 = vmatprep.subr.mxu0 0.0
    %649 = vmatpush1.xpose.msra.mxu0 0.0
    %650 = vmatprep.subr.mxu0 0.0
    %651 = vmatpush1.xpose.msra.mxu0 0.0
    %652 = vmatprep.subr.mxu0 0.0
    %653 = vmatpush1.xpose.msra.mxu0 0.0
    %654 = vmatprep.subr.mxu0 0.0
    %655 = vmatpush1.xpose.msra.mxu0 0.0
    %656 = vmatprep.subr.mxu0 0.0
    %657 = vmatpush1.xpose.msra.mxu0 0.0
    %658 = vmatprep.subr.mxu0 0.0
    %659 = vmatpush1.xpose.msra.mxu0 0.0
    %660 = vmatprep.subr.mxu0 0.0
    %661 = vmatpush1.xpose.msra.mxu0 0.0
    %662 = vmatprep.subr.mxu0 0.0
    %663 = vmatpush1.xpose.msra.mxu0 0.0
    %664 = vmatprep.subr.mxu0 0.0
    %665 = vmatpush1.xpose.msra.mxu0 0.0
    %666 = vmatprep.subr.mxu0 0.0
    %667 = vmatpush1.xpose.msra.mxu0 0.0
    %668 = vmatprep.subr.mxu0 0.0
    %669 = vmatpush1.xpose.msra.mxu0 0.0
    %670 = vmatprep.subr.mxu0 0.0
    %671 = vmatpush1.xpose.msra.mxu0 0.0
    %672 = vmatprep.subr.mxu0 0.0
    %673 = vmatpush1.xpose.msra.mxu0 0.0
    %674 = vmatprep.subr.mxu0 0.0
    %675 = vmatpush1.xpose.msra.mxu0 0.0
    %676 = vmatprep.subr.mxu0 0.0
    %677 = vmatpush1.xpose.msra.mxu0 0.0
    %678 = vmatprep.subr.mxu0 0.0
    %679 = vmatpush1.xpose.msra.mxu0 0.0
    %680 = vmatprep.subr.mxu0 0.0
    %681 = vmatpush1.xpose.msra.mxu0 0.0
    %682 = vmatprep.subr.mxu0 0.0
    %683 = vmatpush1.xpose.msra.mxu0 0.0
    %684 = vmatprep.mubr.f32.mxu0 0.0
    %685 = vmatmul.mubr.f32.gmra.mrb[0].mxu0 %v615
    %v686 = vpop.f32.mrb[0].mxu0
    %v687 = vadd.f32 %v289, %v686
    %v688 = vpop.f32.mrb[0].mxu0
    %689 = vdwg.mxu0
    %v691 = vsel %vm309, %v248, 0
    %v694 = vsel %vm309, %v266, 0
    %696 = vmatprep.subr.mxu0 0.0
    %697 = vmatpush1.xpose.msra.mxu0 %v694
    %698 = vmatprep.subr.mxu0 0.0
    %699 = vmatpush1.xpose.msra.mxu0 0.0
    %700 = vmatprep.subr.mxu0 0.0
    %701 = vmatpush1.xpose.msra.mxu0 0.0
    %702 = vmatprep.subr.mxu0 0.0
    %703 = vmatpush1.xpose.msra.mxu0 0.0
    %704 = vmatprep.subr.mxu0 0.0
    %705 = vmatpush1.xpose.msra.mxu0 0.0
    %706 = vmatprep.subr.mxu0 0.0
    %707 = vmatpush1.xpose.msra.mxu0 0.0
    %708 = vmatprep.subr.mxu0 0.0
    %709 = vmatpush1.xpose.msra.mxu0 0.0
    %710 = vmatprep.subr.mxu0 0.0
    %711 = vmatpush1.xpose.msra.mxu0 0.0
    %712 = vmatprep.subr.mxu0 0.0
    %713 = vmatpush1.xpose.msra.mxu0 0.0
    %714 = vmatprep.subr.mxu0 0.0
    %715 = vmatpush1.xpose.msra.mxu0 0.0
    %716 = vmatprep.subr.mxu0 0.0
    %717 = vmatpush1.xpose.msra.mxu0 0.0
    %718 = vmatprep.subr.mxu0 0.0
    %719 = vmatpush1.xpose.msra.mxu0 0.0
    %720 = vmatprep.subr.mxu0 0.0
    %721 = vmatpush1.xpose.msra.mxu0 0.0
    %722 = vmatprep.subr.mxu0 0.0
    %723 = vmatpush1.xpose.msra.mxu0 0.0
    %724 = vmatprep.subr.mxu0 0.0
    %725 = vmatpush1.xpose.msra.mxu0 0.0
    %726 = vmatprep.subr.mxu0 0.0
    %727 = vmatpush1.xpose.msra.mxu0 0.0
    %728 = vmatprep.subr.mxu0 0.0
    %729 = vmatpush1.xpose.msra.mxu0 0.0
    %730 = vmatprep.subr.mxu0 0.0
    %731 = vmatpush1.xpose.msra.mxu0 0.0
    %732 = vmatprep.subr.mxu0 0.0
    %733 = vmatpush1.xpose.msra.mxu0 0.0
    %734 = vmatprep.subr.mxu0 0.0
    %735 = vmatpush1.xpose.msra.mxu0 0.0
    %736 = vmatprep.subr.mxu0 0.0
    %737 = vmatpush1.xpose.msra.mxu0 0.0
    %738 = vmatprep.subr.mxu0 0.0
    %739 = vmatpush1.xpose.msra.mxu0 0.0
    %740 = vmatprep.subr.mxu0 0.0
    %741 = vmatpush1.xpose.msra.mxu0 0.0
    %742 = vmatprep.subr.mxu0 0.0
    %743 = vmatpush1.xpose.msra.mxu0 0.0
    %744 = vmatprep.subr.mxu0 0.0
    %745 = vmatpush1.xpose.msra.mxu0 0.0
    %746 = vmatprep.subr.mxu0 0.0
    %747 = vmatpush1.xpose.msra.mxu0 0.0
    %748 = vmatprep.subr.mxu0 0.0
    %749 = vmatpush1.xpose.msra.mxu0 0.0
    %750 = vmatprep.subr.mxu0 0.0
    %751 = vmatpush1.xpose.msra.mxu0 0.0
    %752 = vmatprep.subr.mxu0 0.0
    %753 = vmatpush1.xpose.msra.mxu0 0.0
    %754 = vmatprep.subr.mxu0 0.0
    %755 = vmatpush1.xpose.msra.mxu0 0.0
    %756 = vmatprep.subr.mxu0 0.0
    %757 = vmatpush1.xpose.msra.mxu0 0.0
    %758 = vmatprep.subr.mxu0 0.0
    %759 = vmatpush1.xpose.msra.mxu0 0.0
    %760 = vmatprep.mubr.f32.mxu0 0.0
    %761 = vmatmul.mubr.f32.gmra.mrb[0].mxu0 %v691
    %v762 = vpop.f32.mrb[0].mxu0
    %v763 = vadd.f32 %v290, %v762
    %v764 = vpop.f32.mrb[0].mxu0
    %765 = vdwg.mxu0
    %v767 = vsel %vm309, %v253, 0
    %v770 = vsel %vm309, %v267, 0
    %772 = vmatprep.subr.mxu0 0.0
    %773 = vmatpush1.xpose.msra.mxu0 %v770
    %774 = vmatprep.subr.mxu0 0.0
    %775 = vmatpush1.xpose.msra.mxu0 0.0
    %776 = vmatprep.subr.mxu0 0.0
    %777 = vmatpush1.xpose.msra.mxu0 0.0
    %778 = vmatprep.subr.mxu0 0.0
    %779 = vmatpush1.xpose.msra.mxu0 0.0
    %780 = vmatprep.subr.mxu0 0.0
    %781 = vmatpush1.xpose.msra.mxu0 0.0
    %782 = vmatprep.subr.mxu0 0.0
    %783 = vmatpush1.xpose.msra.mxu0 0.0
    %784 = vmatprep.subr.mxu0 0.0
    %785 = vmatpush1.xpose.msra.mxu0 0.0
    %786 = vmatprep.subr.mxu0 0.0
    %787 = vmatpush1.xpose.msra.mxu0 0.0
    %788 = vmatprep.subr.mxu0 0.0
    %789 = vmatpush1.xpose.msra.mxu0 0.0
    %790 = vmatprep.subr.mxu0 0.0
    %791 = vmatpush1.xpose.msra.mxu0 0.0
    %792 = vmatprep.subr.mxu0 0.0
    %793 = vmatpush1.xpose.msra.mxu0 0.0
    %794 = vmatprep.subr.mxu0 0.0
    %795 = vmatpush1.xpose.msra.mxu0 0.0
    %796 = vmatprep.subr.mxu0 0.0
    %797 = vmatpush1.xpose.msra.mxu0 0.0
    %798 = vmatprep.subr.mxu0 0.0
    %799 = vmatpush1.xpose.msra.mxu0 0.0
    %800 = vmatprep.subr.mxu0 0.0
    %801 = vmatpush1.xpose.msra.mxu0 0.0
    %802 = vmatprep.subr.mxu0 0.0
    %803 = vmatpush1.xpose.msra.mxu0 0.0
    %804 = vmatprep.subr.mxu0 0.0
    %805 = vmatpush1.xpose.msra.mxu0 0.0
    %806 = vmatprep.subr.mxu0 0.0
    %807 = vmatpush1.xpose.msra.mxu0 0.0
    %808 = vmatprep.subr.mxu0 0.0
    %809 = vmatpush1.xpose.msra.mxu0 0.0
    %810 = vmatprep.subr.mxu0 0.0
    %811 = vmatpush1.xpose.msra.mxu0 0.0
    %812 = vmatprep.subr.mxu0 0.0
    %813 = vmatpush1.xpose.msra.mxu0 0.0
    %814 = vmatprep.subr.mxu0 0.0
    %815 = vmatpush1.xpose.msra.mxu0 0.0
    %816 = vmatprep.subr.mxu0 0.0
    %817 = vmatpush1.xpose.msra.mxu0 0.0
    %818 = vmatprep.subr.mxu0 0.0
    %819 = vmatpush1.xpose.msra.mxu0 0.0
    %820 = vmatprep.subr.mxu0 0.0
    %821 = vmatpush1.xpose.msra.mxu0 0.0
    %822 = vmatprep.subr.mxu0 0.0
    %823 = vmatpush1.xpose.msra.mxu0 0.0
    %824 = vmatprep.subr.mxu0 0.0
    %825 = vmatpush1.xpose.msra.mxu0 0.0
    %826 = vmatprep.subr.mxu0 0.0
    %827 = vmatpush1.xpose.msra.mxu0 0.0
    %828 = vmatprep.subr.mxu0 0.0
    %829 = vmatpush1.xpose.msra.mxu0 0.0
    %830 = vmatprep.subr.mxu0 0.0
    %831 = vmatpush1.xpose.msra.mxu0 0.0
    %832 = vmatprep.subr.mxu0 0.0
    %833 = vmatpush1.xpose.msra.mxu0 0.0
    %834 = vmatprep.subr.mxu0 0.0
    %835 = vmatpush1.xpose.msra.mxu0 0.0
    %836 = vmatprep.mubr.f32.mxu0 0.0
    %837 = vmatmul.mubr.f32.gmra.mrb[0].mxu0 %v767
    %v838 = vpop.f32.mrb[0].mxu0
    %v839 = vadd.f32 %v291, %v838
    %v840 = vpop.f32.mrb[0].mxu0
    %841 = vdwg.mxu0
    %v843 = vsel %vm309, %v258, 0
    %v846 = vsel %vm309, %v268, 0
    %848 = vmatprep.subr.mxu0 0.0
    %849 = vmatpush1.xpose.msra.mxu0 %v846
    %850 = vmatprep.subr.mxu0 0.0
    %851 = vmatpush1.xpose.msra.mxu0 0.0
    %852 = vmatprep.subr.mxu0 0.0
    %853 = vmatpush1.xpose.msra.mxu0 0.0
    %854 = vmatprep.subr.mxu0 0.0
    %855 = vmatpush1.xpose.msra.mxu0 0.0
    %856 = vmatprep.subr.mxu0 0.0
    %857 = vmatpush1.xpose.msra.mxu0 0.0
    %858 = vmatprep.subr.mxu0 0.0
    %859 = vmatpush1.xpose.msra.mxu0 0.0
    %860 = vmatprep.subr.mxu0 0.0
    %861 = vmatpush1.xpose.msra.mxu0 0.0
    %862 = vmatprep.subr.mxu0 0.0
    %863 = vmatpush1.xpose.msra.mxu0 0.0
    %864 = vmatprep.subr.mxu0 0.0
    %865 = vmatpush1.xpose.msra.mxu0 0.0
    %866 = vmatprep.subr.mxu0 0.0
    %867 = vmatpush1.xpose.msra.mxu0 0.0
    %868 = vmatprep.subr.mxu0 0.0
    %869 = vmatpush1.xpose.msra.mxu0 0.0
    %870 = vmatprep.subr.mxu0 0.0
    %871 = vmatpush1.xpose.msra.mxu0 0.0
    %872 = vmatprep.subr.mxu0 0.0
    %873 = vmatpush1.xpose.msra.mxu0 0.0
    %874 = vmatprep.subr.mxu0 0.0
    %875 = vmatpush1.xpose.msra.mxu0 0.0
    %876 = vmatprep.subr.mxu0 0.0
    %877 = vmatpush1.xpose.msra.mxu0 0.0
    %878 = vmatprep.subr.mxu0 0.0
    %879 = vmatpush1.xpose.msra.mxu0 0.0
    %880 = vmatprep.subr.mxu0 0.0
    %881 = vmatpush1.xpose.msra.mxu0 0.0
    %882 = vmatprep.subr.mxu0 0.0
    %883 = vmatpush1.xpose.msra.mxu0 0.0
    %884 = vmatprep.subr.mxu0 0.0
    %885 = vmatpush1.xpose.msra.mxu0 0.0
    %886 = vmatprep.subr.mxu0 0.0
    %887 = vmatpush1.xpose.msra.mxu0 0.0
    %888 = vmatprep.subr.mxu0 0.0
    %889 = vmatpush1.xpose.msra.mxu0 0.0
    %890 = vmatprep.subr.mxu0 0.0
    %891 = vmatpush1.xpose.msra.mxu0 0.0
    %892 = vmatprep.subr.mxu0 0.0
    %893 = vmatpush1.xpose.msra.mxu0 0.0
    %894 = vmatprep.subr.mxu0 0.0
    %895 = vmatpush1.xpose.msra.mxu0 0.0
    %896 = vmatprep.subr.mxu0 0.0
    %897 = vmatpush1.xpose.msra.mxu0 0.0
    %898 = vmatprep.subr.mxu0 0.0
    %899 = vmatpush1.xpose.msra.mxu0 0.0
    %900 = vmatprep.subr.mxu0 0.0
    %901 = vmatpush1.xpose.msra.mxu0 0.0
    %902 = vmatprep.subr.mxu0 0.0
    %903 = vmatpush1.xpose.msra.mxu0 0.0
    %904 = vmatprep.subr.mxu0 0.0
    %905 = vmatpush1.xpose.msra.mxu0 0.0
    %906 = vmatprep.subr.mxu0 0.0
    %907 = vmatpush1.xpose.msra.mxu0 0.0
    %908 = vmatprep.subr.mxu0 0.0
    %909 = vmatpush1.xpose.msra.mxu0 0.0
    %910 = vmatprep.subr.mxu0 0.0
    %911 = vmatpush1.xpose.msra.mxu0 0.0
    %912 = vmatprep.mubr.f32.mxu0 0.0
    %913 = vmatmul.mubr.f32.gmra.mrb[0].mxu0 %v843
    %v914 = vpop.f32.mrb[0].mxu0
    %v915 = vadd.f32 %v292, %v914
    %v916 = vpop.f32.mrb[0].mxu0
    %917 = vdwg.mxu0
    %v919 = vsel %vm309, %v269, 0
    %921 = vmatprep.subr.mxu0 0.0
    %922 = vmatpush1.xpose.msra.mxu0 %v919
    %923 = vmatprep.subr.mxu0 0.0
    %924 = vmatpush1.xpose.msra.mxu0 0.0
    %925 = vmatprep.subr.mxu0 0.0
    %926 = vmatpush1.xpose.msra.mxu0 0.0
    %927 = vmatprep.subr.mxu0 0.0
    %928 = vmatpush1.xpose.msra.mxu0 0.0
    %929 = vmatprep.subr.mxu0 0.0
    %930 = vmatpush1.xpose.msra.mxu0 0.0
    %931 = vmatprep.subr.mxu0 0.0
    %932 = vmatpush1.xpose.msra.mxu0 0.0
    %933 = vmatprep.subr.mxu0 0.0
    %934 = vmatpush1.xpose.msra.mxu0 0.0
    %935 = vmatprep.subr.mxu0 0.0
    %936 = vmatpush1.xpose.msra.mxu0 0.0
    %937 = vmatprep.subr.mxu0 0.0
    %938 = vmatpush1.xpose.msra.mxu0 0.0
    %939 = vmatprep.subr.mxu0 0.0
    %940 = vmatpush1.xpose.msra.mxu0 0.0
    %941 = vmatprep.subr.mxu0 0.0
    %942 = vmatpush1.xpose.msra.mxu0 0.0
    %943 = vmatprep.subr.mxu0 0.0
    %944 = vmatpush1.xpose.msra.mxu0 0.0
    %945 = vmatprep.subr.mxu0 0.0
    %946 = vmatpush1.xpose.msra.mxu0 0.0
    %947 = vmatprep.subr.mxu0 0.0
    %948 = vmatpush1.xpose.msra.mxu0 0.0
    %949 = vmatprep.subr.mxu0 0.0
    %950 = vmatpush1.xpose.msra.mxu0 0.0
    %951 = vmatprep.subr.mxu0 0.0
    %952 = vmatpush1.xpose.msra.mxu0 0.0
    %953 = vmatprep.subr.mxu0 0.0
    %954 = vmatpush1.xpose.msra.mxu0 0.0
    %955 = vmatprep.subr.mxu0 0.0
    %956 = vmatpush1.xpose.msra.mxu0 0.0
    %957 = vmatprep.subr.mxu0 0.0
    %958 = vmatpush1.xpose.msra.mxu0 0.0
    %959 = vmatprep.subr.mxu0 0.0
    %960 = vmatpush1.xpose.msra.mxu0 0.0
    %961 = vmatprep.subr.mxu0 0.0
    %962 = vmatpush1.xpose.msra.mxu0 0.0
    %963 = vmatprep.subr.mxu0 0.0
    %964 = vmatpush1.xpose.msra.mxu0 0.0
    %965 = vmatprep.subr.mxu0 0.0
    %966 = vmatpush1.xpose.msra.mxu0 0.0
    %967 = vmatprep.subr.mxu0 0.0
    %968 = vmatpush1.xpose.msra.mxu0 0.0
    %969 = vmatprep.subr.mxu0 0.0
    %970 = vmatpush1.xpose.msra.mxu0 0.0
    %971 = vmatprep.subr.mxu0 0.0
    %972 = vmatpush1.xpose.msra.mxu0 0.0
    %973 = vmatprep.subr.mxu0 0.0
    %974 = vmatpush1.xpose.msra.mxu0 0.0
    %975 = vmatprep.subr.mxu0 0.0
    %976 = vmatpush1.xpose.msra.mxu0 0.0
    %977 = vmatprep.subr.mxu0 0.0
    %978 = vmatpush1.xpose.msra.mxu0 0.0
    %979 = vmatprep.subr.mxu0 0.0
    %980 = vmatpush1.xpose.msra.mxu0 0.0
    %981 = vmatprep.subr.mxu0 0.0
    %982 = vmatpush1.xpose.msra.mxu0 0.0
    %983 = vmatprep.subr.mxu0 0.0
    %984 = vmatpush1.xpose.msra.mxu0 0.0
    %985 = vmatprep.mubr.f32.mxu0 0.0
    %986 = vmatmul.mubr.f32.gmra.mrb[0].mxu0 %v311
    %v987 = vpop.f32.mrb[0].mxu0
    %v988 = vadd.f32 %v293, %v987
    %v989 = vpop.f32.mrb[0].mxu0
    %990 = vdwg.mxu0
    %v992 = vsel %vm309, %v270, 0
    %994 = vmatprep.subr.mxu0 0.0
    %995 = vmatpush1.xpose.msra.mxu0 %v992
    %996 = vmatprep.subr.mxu0 0.0
    %997 = vmatpush1.xpose.msra.mxu0 0.0
    %998 = vmatprep.subr.mxu0 0.0
    %999 = vmatpush1.xpose.msra.mxu0 0.0
    %1000 = vmatprep.subr.mxu0 0.0
    %1001 = vmatpush1.xpose.msra.mxu0 0.0
    %1002 = vmatprep.subr.mxu0 0.0
    %1003 = vmatpush1.xpose.msra.mxu0 0.0
    %1004 = vmatprep.subr.mxu0 0.0
    %1005 = vmatpush1.xpose.msra.mxu0 0.0
    %1006 = vmatprep.subr.mxu0 0.0
    %1007 = vmatpush1.xpose.msra.mxu0 0.0
    %1008 = vmatprep.subr.mxu0 0.0
    %1009 = vmatpush1.xpose.msra.mxu0 0.0
    %1010 = vmatprep.subr.mxu0 0.0
    %1011 = vmatpush1.xpose.msra.mxu0 0.0
    %1012 = vmatprep.subr.mxu0 0.0
    %1013 = vmatpush1.xpose.msra.mxu0 0.0
    %1014 = vmatprep.subr.mxu0 0.0
    %1015 = vmatpush1.xpose.msra.mxu0 0.0
    %1016 = vmatprep.subr.mxu0 0.0
    %1017 = vmatpush1.xpose.msra.mxu0 0.0
    %1018 = vmatprep.subr.mxu0 0.0
    %1019 = vmatpush1.xpose.msra.mxu0 0.0
    %1020 = vmatprep.subr.mxu0 0.0
    %1021 = vmatpush1.xpose.msra.mxu0 0.0
    %1022 = vmatprep.subr.mxu0 0.0
    %1023 = vmatpush1.xpose.msra.mxu0 0.0
    %1024 = vmatprep.subr.mxu0 0.0
    %1025 = vmatpush1.xpose.msra.mxu0 0.0
    %1026 = vmatprep.subr.mxu0 0.0
    %1027 = vmatpush1.xpose.msra.mxu0 0.0
    %1028 = vmatprep.subr.mxu0 0.0
    %1029 = vmatpush1.xpose.msra.mxu0 0.0
    %1030 = vmatprep.subr.mxu0 0.0
    %1031 = vmatpush1.xpose.msra.mxu0 0.0
    %1032 = vmatprep.subr.mxu0 0.0
    %1033 = vmatpush1.xpose.msra.mxu0 0.0
    %1034 = vmatprep.subr.mxu0 0.0
    %1035 = vmatpush1.xpose.msra.mxu0 0.0
    %1036 = vmatprep.subr.mxu0 0.0
    %1037 = vmatpush1.xpose.msra.mxu0 0.0
    %1038 = vmatprep.subr.mxu0 0.0
    %1039 = vmatpush1.xpose.msra.mxu0 0.0
    %1040 = vmatprep.subr.mxu0 0.0
    %1041 = vmatpush1.xpose.msra.mxu0 0.0
    %1042 = vmatprep.subr.mxu0 0.0
    %1043 = vmatpush1.xpose.msra.mxu0 0.0
    %1044 = vmatprep.subr.mxu0 0.0
    %1045 = vmatpush1.xpose.msra.mxu0 0.0
    %1046 = vmatprep.subr.mxu0 0.0
    %1047 = vmatpush1.xpose.msra.mxu0 0.0
    %1048 = vmatprep.subr.mxu0 0.0
    %1049 = vmatpush1.xpose.msra.mxu0 0.0
    %1050 = vmatprep.subr.mxu0 0.0
    %1051 = vmatpush1.xpose.msra.mxu0 0.0
    %1052 = vmatprep.subr.mxu0 0.0
    %1053 = vmatpush1.xpose.msra.mxu0 0.0
    %1054 = vmatprep.subr.mxu0 0.0
    %1055 = vmatpush1.xpose.msra.mxu0 0.0
    %1056 = vmatprep.subr.mxu0 0.0
    %1057 = vmatpush1.xpose.msra.mxu0 0.0
    %1058 = vmatprep.mubr.f32.mxu0 0.0
    %1059 = vmatmul.mubr.f32.gmra.mrb[0].mxu0 %v387
    %v1060 = vpop.f32.mrb[0].mxu0
    %v1061 = vadd.f32 %v294, %v1060
    %v1062 = vpop.f32.mrb[0].mxu0
    %1063 = vdwg.mxu0
    %v1065 = vsel %vm309, %v271, 0
    %1067 = vmatprep.subr.mxu0 0.0
    %1068 = vmatpush1.xpose.msra.mxu0 %v1065
    %1069 = vmatprep.subr.mxu0 0.0
    %1070 = vmatpush1.xpose.msra.mxu0 0.0
    %1071 = vmatprep.subr.mxu0 0.0
    %1072 = vmatpush1.xpose.msra.mxu0 0.0
    %1073 = vmatprep.subr.mxu0 0.0
    %1074 = vmatpush1.xpose.msra.mxu0 0.0
    %1075 = vmatprep.subr.mxu0 0.0
    %1076 = vmatpush1.xpose.msra.mxu0 0.0
    %1077 = vmatprep.subr.mxu0 0.0
    %1078 = vmatpush1.xpose.msra.mxu0 0.0
    %1079 = vmatprep.subr.mxu0 0.0
    %1080 = vmatpush1.xpose.msra.mxu0 0.0
    %1081 = vmatprep.subr.mxu0 0.0
    %1082 = vmatpush1.xpose.msra.mxu0 0.0
    %1083 = vmatprep.subr.mxu0 0.0
    %1084 = vmatpush1.xpose.msra.mxu0 0.0
    %1085 = vmatprep.subr.mxu0 0.0
    %1086 = vmatpush1.xpose.msra.mxu0 0.0
    %1087 = vmatprep.subr.mxu0 0.0
    %1088 = vmatpush1.xpose.msra.mxu0 0.0
    %1089 = vmatprep.subr.mxu0 0.0
    %1090 = vmatpush1.xpose.msra.mxu0 0.0
    %1091 = vmatprep.subr.mxu0 0.0
    %1092 = vmatpush1.xpose.msra.mxu0 0.0
    %1093 = vmatprep.subr.mxu0 0.0
    %1094 = vmatpush1.xpose.msra.mxu0 0.0
    %1095 = vmatprep.subr.mxu0 0.0
    %1096 = vmatpush1.xpose.msra.mxu0 0.0
    %1097 = vmatprep.subr.mxu0 0.0
    %1098 = vmatpush1.xpose.msra.mxu0 0.0
    %1099 = vmatprep.subr.mxu0 0.0
    %1100 = vmatpush1.xpose.msra.mxu0 0.0
    %1101 = vmatprep.subr.mxu0 0.0
    %1102 = vmatpush1.xpose.msra.mxu0 0.0
    %1103 = vmatprep.subr.mxu0 0.0
    %1104 = vmatpush1.xpose.msra.mxu0 0.0
    %1105 = vmatprep.subr.mxu0 0.0
    %1106 = vmatpush1.xpose.msra.mxu0 0.0
    %1107 = vmatprep.subr.mxu0 0.0
    %1108 = vmatpush1.xpose.msra.mxu0 0.0
    %1109 = vmatprep.subr.mxu0 0.0
    %1110 = vmatpush1.xpose.msra.mxu0 0.0
    %1111 = vmatprep.subr.mxu0 0.0
    %1112 = vmatpush1.xpose.msra.mxu0 0.0
    %1113 = vmatprep.subr.mxu0 0.0
    %1114 = vmatpush1.xpose.msra.mxu0 0.0
    %1115 = vmatprep.subr.mxu0 0.0
    %1116 = vmatpush1.xpose.msra.mxu0 0.0
    %1117 = vmatprep.subr.mxu0 0.0
    %1118 = vmatpush1.xpose.msra.mxu0 0.0
    %1119 = vmatprep.subr.mxu0 0.0
    %1120 = vmatpush1.xpose.msra.mxu0 0.0
    %1121 = vmatprep.subr.mxu0 0.0
    %1122 = vmatpush1.xpose.msra.mxu0 0.0
    %1123 = vmatprep.subr.mxu0 0.0
    %1124 = vmatpush1.xpose.msra.mxu0 0.0
    %1125 = vmatprep.subr.mxu0 0.0
    %1126 = vmatpush1.xpose.msra.mxu0 0.0
    %1127 = vmatprep.subr.mxu0 0.0
    %1128 = vmatpush1.xpose.msra.mxu0 0.0
    %1129 = vmatprep.subr.mxu0 0.0
    %1130 = vmatpush1.xpose.msra.mxu0 0.0
    %1131 = vmatprep.mubr.f32.mxu0 0.0
    %1132 = vmatmul.mubr.f32.gmra.mrb[0].mxu0 %v463
    %v1133 = vpop.f32.mrb[0].mxu0
    %v1134 = vadd.f32 %v295, %v1133
    %v1135 = vpop.f32.mrb[0].mxu0
    %1136 = vdwg.mxu0
    %v1138 = vsel %vm309, %v272, 0
    %1140 = vmatprep.subr.mxu0 0.0
    %1141 = vmatpush1.xpose.msra.mxu0 %v1138
    %1142 = vmatprep.subr.mxu0 0.0
    %1143 = vmatpush1.xpose.msra.mxu0 0.0
    %1144 = vmatprep.subr.mxu0 0.0
    %1145 = vmatpush1.xpose.msra.mxu0 0.0
    %1146 = vmatprep.subr.mxu0 0.0
    %1147 = vmatpush1.xpose.msra.mxu0 0.0
    %1148 = vmatprep.subr.mxu0 0.0
    %1149 = vmatpush1.xpose.msra.mxu0 0.0
    %1150 = vmatprep.subr.mxu0 0.0
    %1151 = vmatpush1.xpose.msra.mxu0 0.0
    %1152 = vmatprep.subr.mxu0 0.0
    %1153 = vmatpush1.xpose.msra.mxu0 0.0
    %1154 = vmatprep.subr.mxu0 0.0
    %1155 = vmatpush1.xpose.msra.mxu0 0.0
    %1156 = vmatprep.subr.mxu0 0.0
    %1157 = vmatpush1.xpose.msra.mxu0 0.0
    %1158 = vmatprep.subr.mxu0 0.0
    %1159 = vmatpush1.xpose.msra.mxu0 0.0
    %1160 = vmatprep.subr.mxu0 0.0
    %1161 = vmatpush1.xpose.msra.mxu0 0.0
    %1162 = vmatprep.subr.mxu0 0.0
    %1163 = vmatpush1.xpose.msra.mxu0 0.0
    %1164 = vmatprep.subr.mxu0 0.0
    %1165 = vmatpush1.xpose.msra.mxu0 0.0
    %1166 = vmatprep.subr.mxu0 0.0
    %1167 = vmatpush1.xpose.msra.mxu0 0.0
    %1168 = vmatprep.subr.mxu0 0.0
    %1169 = vmatpush1.xpose.msra.mxu0 0.0
    %1170 = vmatprep.subr.mxu0 0.0
    %1171 = vmatpush1.xpose.msra.mxu0 0.0
    %1172 = vmatprep.subr.mxu0 0.0
    %1173 = vmatpush1.xpose.msra.mxu0 0.0
    %1174 = vmatprep.subr.mxu0 0.0
    %1175 = vmatpush1.xpose.msra.mxu0 0.0
    %1176 = vmatprep.subr.mxu0 0.0
    %1177 = vmatpush1.xpose.msra.mxu0 0.0
    %1178 = vmatprep.subr.mxu0 0.0
    %1179 = vmatpush1.xpose.msra.mxu0 0.0
    %1180 = vmatprep.subr.mxu0 0.0
    %1181 = vmatpush1.xpose.msra.mxu0 0.0
    %1182 = vmatprep.subr.mxu0 0.0
    %1183 = vmatpush1.xpose.msra.mxu0 0.0
    %1184 = vmatprep.subr.mxu0 0.0
    %1185 = vmatpush1.xpose.msra.mxu0 0.0
    %1186 = vmatprep.subr.mxu0 0.0
    %1187 = vmatpush1.xpose.msra.mxu0 0.0
    %1188 = vmatprep.subr.mxu0 0.0
    %1189 = vmatpush1.xpose.msra.mxu0 0.0
    %1190 = vmatprep.subr.mxu0 0.0
    %1191 = vmatpush1.xpose.msra.mxu0 0.0
    %1192 = vmatprep.subr.mxu0 0.0
    %1193 = vmatpush1.xpose.msra.mxu0 0.0
    %1194 = vmatprep.subr.mxu0 0.0
    %1195 = vmatpush1.xpose.msra.mxu0 0.0
    %1196 = vmatprep.subr.mxu0 0.0
    %1197 = vmatpush1.xpose.msra.mxu0 0.0
    %1198 = vmatprep.subr.mxu0 0.0
    %1199 = vmatpush1.xpose.msra.mxu0 0.0
    %1200 = vmatprep.subr.mxu0 0.0
    %1201 = vmatpush1.xpose.msra.mxu0 0.0
    %1202 = vmatprep.subr.mxu0 0.0
    %1203 = vmatpush1.xpose.msra.mxu0 0.0
    %1204 = vmatprep.mubr.f32.mxu0 0.0
    %1205 = vmatmul.mubr.f32.gmra.mrb[0].mxu0 %v539
    %v1206 = vpop.f32.mrb[0].mxu0
    %v1207 = vadd.f32 %v296, %v1206
    %v1208 = vpop.f32.mrb[0].mxu0
    %1209 = vdwg.mxu0
    %v1211 = vsel %vm309, %v273, 0
    %1213 = vmatprep.subr.mxu0 0.0
    %1214 = vmatpush1.xpose.msra.mxu0 %v1211
    %1215 = vmatprep.subr.mxu0 0.0
    %1216 = vmatpush1.xpose.msra.mxu0 0.0
    %1217 = vmatprep.subr.mxu0 0.0
    %1218 = vmatpush1.xpose.msra.mxu0 0.0
    %1219 = vmatprep.subr.mxu0 0.0
    %1220 = vmatpush1.xpose.msra.mxu0 0.0
    %1221 = vmatprep.subr.mxu0 0.0
    %1222 = vmatpush1.xpose.msra.mxu0 0.0
    %1223 = vmatprep.subr.mxu0 0.0
    %1224 = vmatpush1.xpose.msra.mxu0 0.0
    %1225 = vmatprep.subr.mxu0 0.0
    %1226 = vmatpush1.xpose.msra.mxu0 0.0
    %1227 = vmatprep.subr.mxu0 0.0
    %1228 = vmatpush1.xpose.msra.mxu0 0.0
    %1229 = vmatprep.subr.mxu0 0.0
    %1230 = vmatpush1.xpose.msra.mxu0 0.0
    %1231 = vmatprep.subr.mxu0 0.0
    %1232 = vmatpush1.xpose.msra.mxu0 0.0
    %1233 = vmatprep.subr.mxu0 0.0
    %1234 = vmatpush1.xpose.msra.mxu0 0.0
    %1235 = vmatprep.subr.mxu0 0.0
    %1236 = vmatpush1.xpose.msra.mxu0 0.0
    %1237 = vmatprep.subr.mxu0 0.0
    %1238 = vmatpush1.xpose.msra.mxu0 0.0
    %1239 = vmatprep.subr.mxu0 0.0
    %1240 = vmatpush1.xpose.msra.mxu0 0.0
    %1241 = vmatprep.subr.mxu0 0.0
    %1242 = vmatpush1.xpose.msra.mxu0 0.0
    %1243 = vmatprep.subr.mxu0 0.0
    %1244 = vmatpush1.xpose.msra.mxu0 0.0
    %1245 = vmatprep.subr.mxu0 0.0
    %1246 = vmatpush1.xpose.msra.mxu0 0.0
    %1247 = vmatprep.subr.mxu0 0.0
    %1248 = vmatpush1.xpose.msra.mxu0 0.0
    %1249 = vmatprep.subr.mxu0 0.0
    %1250 = vmatpush1.xpose.msra.mxu0 0.0
    %1251 = vmatprep.subr.mxu0 0.0
    %1252 = vmatpush1.xpose.msra.mxu0 0.0
    %1253 = vmatprep.subr.mxu0 0.0
    %1254 = vmatpush1.xpose.msra.mxu0 0.0
    %1255 = vmatprep.subr.mxu0 0.0
    %1256 = vmatpush1.xpose.msra.mxu0 0.0
    %1257 = vmatprep.subr.mxu0 0.0
    %1258 = vmatpush1.xpose.msra.mxu0 0.0
    %1259 = vmatprep.subr.mxu0 0.0
    %1260 = vmatpush1.xpose.msra.mxu0 0.0
    %1261 = vmatprep.subr.mxu0 0.0
    %1262 = vmatpush1.xpose.msra.mxu0 0.0
    %1263 = vmatprep.subr.mxu0 0.0
    %1264 = vmatpush1.xpose.msra.mxu0 0.0
    %1265 = vmatprep.subr.mxu0 0.0
    %1266 = vmatpush1.xpose.msra.mxu0 0.0
    %1267 = vmatprep.subr.mxu0 0.0
    %1268 = vmatpush1.xpose.msra.mxu0 0.0
    %1269 = vmatprep.subr.mxu0 0.0
    %1270 = vmatpush1.xpose.msra.mxu0 0.0
    %1271 = vmatprep.subr.mxu0 0.0
    %1272 = vmatpush1.xpose.msra.mxu0 0.0
    %1273 = vmatprep.subr.mxu0 0.0
    %1274 = vmatpush1.xpose.msra.mxu0 0.0
    %1275 = vmatprep.subr.mxu0 0.0
    %1276 = vmatpush1.xpose.msra.mxu0 0.0
    %1277 = vmatprep.mubr.f32.mxu0 0.0
    %1278 = vmatmul.mubr.f32.gmra.mrb[0].mxu0 %v615
    %v1279 = vpop.f32.mrb[0].mxu0
    %v1280 = vadd.f32 %v297, %v1279
    %v1281 = vpop.f32.mrb[0].mxu0
    %1282 = vdwg.mxu0
    %v1284 = vsel %vm309, %v274, 0
    %1286 = vmatprep.subr.mxu0 0.0
    %1287 = vmatpush1.xpose.msra.mxu0 %v1284
    %1288 = vmatprep.subr.mxu0 0.0
    %1289 = vmatpush1.xpose.msra.mxu0 0.0
    %1290 = vmatprep.subr.mxu0 0.0
    %1291 = vmatpush1.xpose.msra.mxu0 0.0
    %1292 = vmatprep.subr.mxu0 0.0
    %1293 = vmatpush1.xpose.msra.mxu0 0.0
    %1294 = vmatprep.subr.mxu0 0.0
    %1295 = vmatpush1.xpose.msra.mxu0 0.0
    %1296 = vmatprep.subr.mxu0 0.0
    %1297 = vmatpush1.xpose.msra.mxu0 0.0
    %1298 = vmatprep.subr.mxu0 0.0
    %1299 = vmatpush1.xpose.msra.mxu0 0.0
    %1300 = vmatprep.subr.mxu0 0.0
    %1301 = vmatpush1.xpose.msra.mxu0 0.0
    %1302 = vmatprep.subr.mxu0 0.0
    %1303 = vmatpush1.xpose.msra.mxu0 0.0
    %1304 = vmatprep.subr.mxu0 0.0
    %1305 = vmatpush1.xpose.msra.mxu0 0.0
    %1306 = vmatprep.subr.mxu0 0.0
    %1307 = vmatpush1.xpose.msra.mxu0 0.0
    %1308 = vmatprep.subr.mxu0 0.0
    %1309 = vmatpush1.xpose.msra.mxu0 0.0
    %1310 = vmatprep.subr.mxu0 0.0
    %1311 = vmatpush1.xpose.msra.mxu0 0.0
    %1312 = vmatprep.subr.mxu0 0.0
    %1313 = vmatpush1.xpose.msra.mxu0 0.0
    %1314 = vmatprep.subr.mxu0 0.0
    %1315 = vmatpush1.xpose.msra.mxu0 0.0
    %1316 = vmatprep.subr.mxu0 0.0
    %1317 = vmatpush1.xpose.msra.mxu0 0.0
    %1318 = vmatprep.subr.mxu0 0.0
    %1319 = vmatpush1.xpose.msra.mxu0 0.0
    %1320 = vmatprep.subr.mxu0 0.0
    %1321 = vmatpush1.xpose.msra.mxu0 0.0
    %1322 = vmatprep.subr.mxu0 0.0
    %1323 = vmatpush1.xpose.msra.mxu0 0.0
    %1324 = vmatprep.subr.mxu0 0.0
    %1325 = vmatpush1.xpose.msra.mxu0 0.0
    %1326 = vmatprep.subr.mxu0 0.0
    %1327 = vmatpush1.xpose.msra.mxu0 0.0
    %1328 = vmatprep.subr.mxu0 0.0
    %1329 = vmatpush1.xpose.msra.mxu0 0.0
    %1330 = vmatprep.subr.mxu0 0.0
    %1331 = vmatpush1.xpose.msra.mxu0 0.0
    %1332 = vmatprep.subr.mxu0 0.0
    %1333 = vmatpush1.xpose.msra.mxu0 0.0
    %1334 = vmatprep.subr.mxu0 0.0
    %1335 = vmatpush1.xpose.msra.mxu0 0.0
    %1336 = vmatprep.subr.mxu0 0.0
    %1337 = vmatpush1.xpose.msra.mxu0 0.0
    %1338 = vmatprep.subr.mxu0 0.0
    %1339 = vmatpush1.xpose.msra.mxu0 0.0
    %1340 = vmatprep.subr.mxu0 0.0
    %1341 = vmatpush1.xpose.msra.mxu0 0.0
    %1342 = vmatprep.subr.mxu0 0.0
    %1343 = vmatpush1.xpose.msra.mxu0 0.0
    %1344 = vmatprep.subr.mxu0 0.0
    %1345 = vmatpush1.xpose.msra.mxu0 0.0
    %1346 = vmatprep.subr.mxu0 0.0
    %1347 = vmatpush1.xpose.msra.mxu0 0.0
    %1348 = vmatprep.subr.mxu0 0.0
    %1349 = vmatpush1.xpose.msra.mxu0 0.0
    %1350 = vmatprep.mubr.f32.mxu0 0.0
    %1351 = vmatmul.mubr.f32.gmra.mrb[0].mxu0 %v691
    %v1352 = vpop.f32.mrb[0].mxu0
    %v1353 = vadd.f32 %v298, %v1352
    %v1354 = vpop.f32.mrb[0].mxu0
    %1355 = vdwg.mxu0
    %v1357 = vsel %vm309, %v275, 0
    %1359 = vmatprep.subr.mxu0 0.0
    %1360 = vmatpush1.xpose.msra.mxu0 %v1357
    %1361 = vmatprep.subr.mxu0 0.0
    %1362 = vmatpush1.xpose.msra.mxu0 0.0
    %1363 = vmatprep.subr.mxu0 0.0
    %1364 = vmatpush1.xpose.msra.mxu0 0.0
    %1365 = vmatprep.subr.mxu0 0.0
    %1366 = vmatpush1.xpose.msra.mxu0 0.0
    %1367 = vmatprep.subr.mxu0 0.0
    %1368 = vmatpush1.xpose.msra.mxu0 0.0
    %1369 = vmatprep.subr.mxu0 0.0
    %1370 = vmatpush1.xpose.msra.mxu0 0.0
    %1371 = vmatprep.subr.mxu0 0.0
    %1372 = vmatpush1.xpose.msra.mxu0 0.0
    %1373 = vmatprep.subr.mxu0 0.0
    %1374 = vmatpush1.xpose.msra.mxu0 0.0
    %1375 = vmatprep.subr.mxu0 0.0
    %1376 = vmatpush1.xpose.msra.mxu0 0.0
    %1377 = vmatprep.subr.mxu0 0.0
    %1378 = vmatpush1.xpose.msra.mxu0 0.0
    %1379 = vmatprep.subr.mxu0 0.0
    %1380 = vmatpush1.xpose.msra.mxu0 0.0
    %1381 = vmatprep.subr.mxu0 0.0
    %1382 = vmatpush1.xpose.msra.mxu0 0.0
    %1383 = vmatprep.subr.mxu0 0.0
    %1384 = vmatpush1.xpose.msra.mxu0 0.0
    %1385 = vmatprep.subr.mxu0 0.0
    %1386 = vmatpush1.xpose.msra.mxu0 0.0
    %1387 = vmatprep.subr.mxu0 0.0
    %1388 = vmatpush1.xpose.msra.mxu0 0.0
    %1389 = vmatprep.subr.mxu0 0.0
    %1390 = vmatpush1.xpose.msra.mxu0 0.0
    %1391 = vmatprep.subr.mxu0 0.0
    %1392 = vmatpush1.xpose.msra.mxu0 0.0
    %1393 = vmatprep.subr.mxu0 0.0
    %1394 = vmatpush1.xpose.msra.mxu0 0.0
    %1395 = vmatprep.subr.mxu0 0.0
    %1396 = vmatpush1.xpose.msra.mxu0 0.0
    %1397 = vmatprep.subr.mxu0 0.0
    %1398 = vmatpush1.xpose.msra.mxu0 0.0
    %1399 = vmatprep.subr.mxu0 0.0
    %1400 = vmatpush1.xpose.msra.mxu0 0.0
    %1401 = vmatprep.subr.mxu0 0.0
    %1402 = vmatpush1.xpose.msra.mxu0 0.0
    %1403 = vmatprep.subr.mxu0 0.0
    %1404 = vmatpush1.xpose.msra.mxu0 0.0
    %1405 = vmatprep.subr.mxu0 0.0
    %1406 = vmatpush1.xpose.msra.mxu0 0.0
    %1407 = vmatprep.subr.mxu0 0.0
    %1408 = vmatpush1.xpose.msra.mxu0 0.0
    %1409 = vmatprep.subr.mxu0 0.0
    %1410 = vmatpush1.xpose.msra.mxu0 0.0
    %1411 = vmatprep.subr.mxu0 0.0
    %1412 = vmatpush1.xpose.msra.mxu0 0.0
    %1413 = vmatprep.subr.mxu0 0.0
    %1414 = vmatpush1.xpose.msra.mxu0 0.0
    %1415 = vmatprep.subr.mxu0 0.0
    %1416 = vmatpush1.xpose.msra.mxu0 0.0
    %1417 = vmatprep.subr.mxu0 0.0
    %1418 = vmatpush1.xpose.msra.mxu0 0.0
    %1419 = vmatprep.subr.mxu0 0.0
    %1420 = vmatpush1.xpose.msra.mxu0 0.0
    %1421 = vmatprep.subr.mxu0 0.0
    %1422 = vmatpush1.xpose.msra.mxu0 0.0
    %1423 = vmatprep.mubr.f32.mxu0 0.0
    %1424 = vmatmul.mubr.f32.gmra.mrb[0].mxu0 %v767
    %v1425 = vpop.f32.mrb[0].mxu0
    %v1426 = vadd.f32 %v299, %v1425
    %v1427 = vpop.f32.mrb[0].mxu0
    %1428 = vdwg.mxu0
    %v1430 = vsel %vm309, %v276, 0
    %1432 = vmatprep.subr.mxu0 0.0
    %1433 = vmatpush1.xpose.msra.mxu0 %v1430
    %1434 = vmatprep.subr.mxu0 0.0
    %1435 = vmatpush1.xpose.msra.mxu0 0.0
    %1436 = vmatprep.subr.mxu0 0.0
    %1437 = vmatpush1.xpose.msra.mxu0 0.0
    %1438 = vmatprep.subr.mxu0 0.0
    %1439 = vmatpush1.xpose.msra.mxu0 0.0
    %1440 = vmatprep.subr.mxu0 0.0
    %1441 = vmatpush1.xpose.msra.mxu0 0.0
    %1442 = vmatprep.subr.mxu0 0.0
    %1443 = vmatpush1.xpose.msra.mxu0 0.0
    %1444 = vmatprep.subr.mxu0 0.0
    %1445 = vmatpush1.xpose.msra.mxu0 0.0
    %1446 = vmatprep.subr.mxu0 0.0
    %1447 = vmatpush1.xpose.msra.mxu0 0.0
    %1448 = vmatprep.subr.mxu0 0.0
    %1449 = vmatpush1.xpose.msra.mxu0 0.0
    %1450 = vmatprep.subr.mxu0 0.0
    %1451 = vmatpush1.xpose.msra.mxu0 0.0
    %1452 = vmatprep.subr.mxu0 0.0
    %1453 = vmatpush1.xpose.msra.mxu0 0.0
    %1454 = vmatprep.subr.mxu0 0.0
    %1455 = vmatpush1.xpose.msra.mxu0 0.0
    %1456 = vmatprep.subr.mxu0 0.0
    %1457 = vmatpush1.xpose.msra.mxu0 0.0
    %1458 = vmatprep.subr.mxu0 0.0
    %1459 = vmatpush1.xpose.msra.mxu0 0.0
    %1460 = vmatprep.subr.mxu0 0.0
    %1461 = vmatpush1.xpose.msra.mxu0 0.0
    %1462 = vmatprep.subr.mxu0 0.0
    %1463 = vmatpush1.xpose.msra.mxu0 0.0
    %1464 = vmatprep.subr.mxu0 0.0
    %1465 = vmatpush1.xpose.msra.mxu0 0.0
    %1466 = vmatprep.subr.mxu0 0.0
    %1467 = vmatpush1.xpose.msra.mxu0 0.0
    %1468 = vmatprep.subr.mxu0 0.0
    %1469 = vmatpush1.xpose.msra.mxu0 0.0
    %1470 = vmatprep.subr.mxu0 0.0
    %1471 = vmatpush1.xpose.msra.mxu0 0.0
    %1472 = vmatprep.subr.mxu0 0.0
    %1473 = vmatpush1.xpose.msra.mxu0 0.0
    %1474 = vmatprep.subr.mxu0 0.0
    %1475 = vmatpush1.xpose.msra.mxu0 0.0
    %1476 = vmatprep.subr.mxu0 0.0
    %1477 = vmatpush1.xpose.msra.mxu0 0.0
    %1478 = vmatprep.subr.mxu0 0.0
    %1479 = vmatpush1.xpose.msra.mxu0 0.0
    %1480 = vmatprep.subr.mxu0 0.0
    %1481 = vmatpush1.xpose.msra.mxu0 0.0
    %1482 = vmatprep.subr.mxu0 0.0
    %1483 = vmatpush1.xpose.msra.mxu0 0.0
    %1484 = vmatprep.subr.mxu0 0.0
    %1485 = vmatpush1.xpose.msra.mxu0 0.0
    %1486 = vmatprep.subr.mxu0 0.0
    %1487 = vmatpush1.xpose.msra.mxu0 0.0
    %1488 = vmatprep.subr.mxu0 0.0
    %1489 = vmatpush1.xpose.msra.mxu0 0.0
    %1490 = vmatprep.subr.mxu0 0.0
    %1491 = vmatpush1.xpose.msra.mxu0 0.0
    %1492 = vmatprep.subr.mxu0 0.0
    %1493 = vmatpush1.xpose.msra.mxu0 0.0
    %1494 = vmatprep.subr.mxu0 0.0
    %1495 = vmatpush1.xpose.msra.mxu0 0.0
    %1496 = vmatprep.mubr.f32.mxu0 0.0
    %1497 = vmatmul.mubr.f32.gmra.mrb[0].mxu0 %v843
    %v1498 = vpop.f32.mrb[0].mxu0
    %v1499 = vadd.f32 %v300, %v1498
    %v1500 = vpop.f32.mrb[0].mxu0
    %1501 = vdwg.mxu0
    %v1503 = vsel %vm309, %v277, 0
    %1505 = vmatprep.subr.mxu0 0.0
    %1506 = vmatpush1.xpose.msra.mxu0 %v1503
    %1507 = vmatprep.subr.mxu0 0.0
    %1508 = vmatpush1.xpose.msra.mxu0 0.0
    %1509 = vmatprep.subr.mxu0 0.0
    %1510 = vmatpush1.xpose.msra.mxu0 0.0
    %1511 = vmatprep.subr.mxu0 0.0
    %1512 = vmatpush1.xpose.msra.mxu0 0.0
    %1513 = vmatprep.subr.mxu0 0.0
    %1514 = vmatpush1.xpose.msra.mxu0 0.0
    %1515 = vmatprep.subr.mxu0 0.0
    %1516 = vmatpush1.xpose.msra.mxu0 0.0
    %1517 = vmatprep.subr.mxu0 0.0
    %1518 = vmatpush1.xpose.msra.mxu0 0.0
    %1519 = vmatprep.subr.mxu0 0.0
    %1520 = vmatpush1.xpose.msra.mxu0 0.0
    %1521 = vmatprep.subr.mxu0 0.0
    %1522 = vmatpush1.xpose.msra.mxu0 0.0
    %1523 = vmatprep.subr.mxu0 0.0
    %1524 = vmatpush1.xpose.msra.mxu0 0.0
    %1525 = vmatprep.subr.mxu0 0.0
    %1526 = vmatpush1.xpose.msra.mxu0 0.0
    %1527 = vmatprep.subr.mxu0 0.0
    %1528 = vmatpush1.xpose.msra.mxu0 0.0
    %1529 = vmatprep.subr.mxu0 0.0
    %1530 = vmatpush1.xpose.msra.mxu0 0.0
    %1531 = vmatprep.subr.mxu0 0.0
    %1532 = vmatpush1.xpose.msra.mxu0 0.0
    %1533 = vmatprep.subr.mxu0 0.0
    %1534 = vmatpush1.xpose.msra.mxu0 0.0
    %1535 = vmatprep.subr.mxu0 0.0
    %1536 = vmatpush1.xpose.msra.mxu0 0.0
    %1537 = vmatprep.subr.mxu0 0.0
    %1538 = vmatpush1.xpose.msra.mxu0 0.0
    %1539 = vmatprep.subr.mxu0 0.0
    %1540 = vmatpush1.xpose.msra.mxu0 0.0
    %1541 = vmatprep.subr.mxu0 0.0
    %1542 = vmatpush1.xpose.msra.mxu0 0.0
    %1543 = vmatprep.subr.mxu0 0.0
    %1544 = vmatpush1.xpose.msra.mxu0 0.0
    %1545 = vmatprep.subr.mxu0 0.0
    %1546 = vmatpush1.xpose.msra.mxu0 0.0
    %1547 = vmatprep.subr.mxu0 0.0
    %1548 = vmatpush1.xpose.msra.mxu0 0.0
    %1549 = vmatprep.subr.mxu0 0.0
    %1550 = vmatpush1.xpose.msra.mxu0 0.0
    %1551 = vmatprep.subr.mxu0 0.0
    %1552 = vmatpush1.xpose.msra.mxu0 0.0
    %1553 = vmatprep.subr.mxu0 0.0
    %1554 = vmatpush1.xpose.msra.mxu0 0.0
    %1555 = vmatprep.subr.mxu0 0.0
    %1556 = vmatpush1.xpose.msra.mxu0 0.0
    %1557 = vmatprep.subr.mxu0 0.0
    %1558 = vmatpush1.xpose.msra.mxu0 0.0
    %1559 = vmatprep.subr.mxu0 0.0
    %1560 = vmatpush1.xpose.msra.mxu0 0.0
    %1561 = vmatprep.subr.mxu0 0.0
    %1562 = vmatpush1.xpose.msra.mxu0 0.0
    %1563 = vmatprep.subr.mxu0 0.0
    %1564 = vmatpush1.xpose.msra.mxu0 0.0
    %1565 = vmatprep.subr.mxu0 0.0
    %1566 = vmatpush1.xpose.msra.mxu0 0.0
    %1567 = vmatprep.subr.mxu0 0.0
    %1568 = vmatpush1.xpose.msra.mxu0 0.0
    %1569 = vmatprep.mubr.f32.mxu0 0.0
    %1570 = vmatmul.mubr.f32.gmra.mrb[0].mxu0 %v311
    %v1571 = vpop.f32.mrb[0].mxu0
    %v1572 = vadd.f32 %v301, %v1571
    %v1573 = vpop.f32.mrb[0].mxu0
    %1574 = vdwg.mxu0
    %v1576 = vsel %vm309, %v278, 0
    %1578 = vmatprep.subr.mxu0 0.0
    %1579 = vmatpush1.xpose.msra.mxu0 %v1576
    %1580 = vmatprep.subr.mxu0 0.0
    %1581 = vmatpush1.xpose.msra.mxu0 0.0
    %1582 = vmatprep.subr.mxu0 0.0
    %1583 = vmatpush1.xpose.msra.mxu0 0.0
    %1584 = vmatprep.subr.mxu0 0.0
    %1585 = vmatpush1.xpose.msra.mxu0 0.0
    %1586 = vmatprep.subr.mxu0 0.0
    %1587 = vmatpush1.xpose.msra.mxu0 0.0
    %1588 = vmatprep.subr.mxu0 0.0
    %1589 = vmatpush1.xpose.msra.mxu0 0.0
    %1590 = vmatprep.subr.mxu0 0.0
    %1591 = vmatpush1.xpose.msra.mxu0 0.0
    %1592 = vmatprep.subr.mxu0 0.0
    %1593 = vmatpush1.xpose.msra.mxu0 0.0
    %1594 = vmatprep.subr.mxu0 0.0
    %1595 = vmatpush1.xpose.msra.mxu0 0.0
    %1596 = vmatprep.subr.mxu0 0.0
    %1597 = vmatpush1.xpose.msra.mxu0 0.0
    %1598 = vmatprep.subr.mxu0 0.0
    %1599 = vmatpush1.xpose.msra.mxu0 0.0
    %1600 = vmatprep.subr.mxu0 0.0
    %1601 = vmatpush1.xpose.msra.mxu0 0.0
    %1602 = vmatprep.subr.mxu0 0.0
    %1603 = vmatpush1.xpose.msra.mxu0 0.0
    %1604 = vmatprep.subr.mxu0 0.0
    %1605 = vmatpush1.xpose.msra.mxu0 0.0
    %1606 = vmatprep.subr.mxu0 0.0
    %1607 = vmatpush1.xpose.msra.mxu0 0.0
    %1608 = vmatprep.subr.mxu0 0.0
    %1609 = vmatpush1.xpose.msra.mxu0 0.0
    %1610 = vmatprep.subr.mxu0 0.0
    %1611 = vmatpush1.xpose.msra.mxu0 0.0
    %1612 = vmatprep.subr.mxu0 0.0
    %1613 = vmatpush1.xpose.msra.mxu0 0.0
    %1614 = vmatprep.subr.mxu0 0.0
    %1615 = vmatpush1.xpose.msra.mxu0 0.0
    %1616 = vmatprep.subr.mxu0 0.0
    %1617 = vmatpush1.xpose.msra.mxu0 0.0
    %1618 = vmatprep.subr.mxu0 0.0
    %1619 = vmatpush1.xpose.msra.mxu0 0.0
    %1620 = vmatprep.subr.mxu0 0.0
    %1621 = vmatpush1.xpose.msra.mxu0 0.0
    %1622 = vmatprep.subr.mxu0 0.0
    %1623 = vmatpush1.xpose.msra.mxu0 0.0
    %1624 = vmatprep.subr.mxu0 0.0
    %1625 = vmatpush1.xpose.msra.mxu0 0.0
    %1626 = vmatprep.subr.mxu0 0.0
    %1627 = vmatpush1.xpose.msra.mxu0 0.0
    %1628 = vmatprep.subr.mxu0 0.0
    %1629 = vmatpush1.xpose.msra.mxu0 0.0
    %1630 = vmatprep.subr.mxu0 0.0
    %1631 = vmatpush1.xpose.msra.mxu0 0.0
    %1632 = vmatprep.subr.mxu0 0.0
    %1633 = vmatpush1.xpose.msra.mxu0 0.0
    %1634 = vmatprep.subr.mxu0 0.0
    %1635 = vmatpush1.xpose.msra.mxu0 0.0
    %1636 = vmatprep.subr.mxu0 0.0
    %1637 = vmatpush1.xpose.msra.mxu0 0.0
    %1638 = vmatprep.subr.mxu0 0.0
    %1639 = vmatpush1.xpose.msra.mxu0 0.0
    %1640 = vmatprep.subr.mxu0 0.0
    %1641 = vmatpush1.xpose.msra.mxu0 0.0
    %1642 = vmatprep.mubr.f32.mxu0 0.0
    %1643 = vmatmul.mubr.f32.gmra.mrb[0].mxu0 %v387
    %v1644 = vpop.f32.mrb[0].mxu0
    %v1645 = vadd.f32 %v302, %v1644
    %v1646 = vpop.f32.mrb[0].mxu0
    %1647 = vdwg.mxu0
    %v1649 = vsel %vm309, %v279, 0
    %1651 = vmatprep.subr.mxu0 0.0
    %1652 = vmatpush1.xpose.msra.mxu0 %v1649
    %1653 = vmatprep.subr.mxu0 0.0
    %1654 = vmatpush1.xpose.msra.mxu0 0.0
    %1655 = vmatprep.subr.mxu0 0.0
    %1656 = vmatpush1.xpose.msra.mxu0 0.0
    %1657 = vmatprep.subr.mxu0 0.0
    %1658 = vmatpush1.xpose.msra.mxu0 0.0
    %1659 = vmatprep.subr.mxu0 0.0
    %1660 = vmatpush1.xpose.msra.mxu0 0.0
    %1661 = vmatprep.subr.mxu0 0.0
    %1662 = vmatpush1.xpose.msra.mxu0 0.0
    %1663 = vmatprep.subr.mxu0 0.0
    %1664 = vmatpush1.xpose.msra.mxu0 0.0
    %1665 = vmatprep.subr.mxu0 0.0
    %1666 = vmatpush1.xpose.msra.mxu0 0.0
    %1667 = vmatprep.subr.mxu0 0.0
    %1668 = vmatpush1.xpose.msra.mxu0 0.0
    %1669 = vmatprep.subr.mxu0 0.0
    %1670 = vmatpush1.xpose.msra.mxu0 0.0
    %1671 = vmatprep.subr.mxu0 0.0
    %1672 = vmatpush1.xpose.msra.mxu0 0.0
    %1673 = vmatprep.subr.mxu0 0.0
    %1674 = vmatpush1.xpose.msra.mxu0 0.0
    %1675 = vmatprep.subr.mxu0 0.0
    %1676 = vmatpush1.xpose.msra.mxu0 0.0
    %1677 = vmatprep.subr.mxu0 0.0
    %1678 = vmatpush1.xpose.msra.mxu0 0.0
    %1679 = vmatprep.subr.mxu0 0.0
    %1680 = vmatpush1.xpose.msra.mxu0 0.0
    %1681 = vmatprep.subr.mxu0 0.0
    %1682 = vmatpush1.xpose.msra.mxu0 0.0
    %1683 = vmatprep.subr.mxu0 0.0
    %1684 = vmatpush1.xpose.msra.mxu0 0.0
    %1685 = vmatprep.subr.mxu0 0.0
    %1686 = vmatpush1.xpose.msra.mxu0 0.0
    %1687 = vmatprep.subr.mxu0 0.0
    %1688 = vmatpush1.xpose.msra.mxu0 0.0
    %1689 = vmatprep.subr.mxu0 0.0
    %1690 = vmatpush1.xpose.msra.mxu0 0.0
    %1691 = vmatprep.subr.mxu0 0.0
    %1692 = vmatpush1.xpose.msra.mxu0 0.0
    %1693 = vmatprep.subr.mxu0 0.0
    %1694 = vmatpush1.xpose.msra.mxu0 0.0
    %1695 = vmatprep.subr.mxu0 0.0
    %1696 = vmatpush1.xpose.msra.mxu0 0.0
    %1697 = vmatprep.subr.mxu0 0.0
    %1698 = vmatpush1.xpose.msra.mxu0 0.0
    %1699 = vmatprep.subr.mxu0 0.0
    %1700 = vmatpush1.xpose.msra.mxu0 0.0
    %1701 = vmatprep.subr.mxu0 0.0
    %1702 = vmatpush1.xpose.msra.mxu0 0.0
    %1703 = vmatprep.subr.mxu0 0.0
    %1704 = vmatpush1.xpose.msra.mxu0 0.0
    %1705 = vmatprep.subr.mxu0 0.0
    %1706 = vmatpush1.xpose.msra.mxu0 0.0
    %1707 = vmatprep.subr.mxu0 0.0
    %1708 = vmatpush1.xpose.msra.mxu0 0.0
    %1709 = vmatprep.subr.mxu0 0.0
    %1710 = vmatpush1.xpose.msra.mxu0 0.0
    %1711 = vmatprep.subr.mxu0 0.0
    %1712 = vmatpush1.xpose.msra.mxu0 0.0
    %1713 = vmatprep.subr.mxu0 0.0
    %1714 = vmatpush1.xpose.msra.mxu0 0.0
    %1715 = vmatprep.mubr.f32.mxu0 0.0
    %1716 = vmatmul.mubr.f32.gmra.mrb[0].mxu0 %v463
    %v1717 = vpop.f32.mrb[0].mxu0
    %v1718 = vadd.f32 %v303, %v1717
    %v1719 = vpop.f32.mrb[0].mxu0
    %1720 = vdwg.mxu0
    %v1722 = vsel %vm309, %v280, 0
    %1724 = vmatprep.subr.mxu0 0.0
    %1725 = vmatpush1.xpose.msra.mxu0 %v1722
    %1726 = vmatprep.subr.mxu0 0.0
    %1727 = vmatpush1.xpose.msra.mxu0 0.0
    %1728 = vmatprep.subr.mxu0 0.0
    %1729 = vmatpush1.xpose.msra.mxu0 0.0
    %1730 = vmatprep.subr.mxu0 0.0
    %1731 = vmatpush1.xpose.msra.mxu0 0.0
    %1732 = vmatprep.subr.mxu0 0.0
    %1733 = vmatpush1.xpose.msra.mxu0 0.0
    %1734 = vmatprep.subr.mxu0 0.0
    %1735 = vmatpush1.xpose.msra.mxu0 0.0
    %1736 = vmatprep.subr.mxu0 0.0
    %1737 = vmatpush1.xpose.msra.mxu0 0.0
    %1738 = vmatprep.subr.mxu0 0.0
    %1739 = vmatpush1.xpose.msra.mxu0 0.0
    %1740 = vmatprep.subr.mxu0 0.0
    %1741 = vmatpush1.xpose.msra.mxu0 0.0
    %1742 = vmatprep.subr.mxu0 0.0
    %1743 = vmatpush1.xpose.msra.mxu0 0.0
    %1744 = vmatprep.subr.mxu0 0.0
    %1745 = vmatpush1.xpose.msra.mxu0 0.0
    %1746 = vmatprep.subr.mxu0 0.0
    %1747 = vmatpush1.xpose.msra.mxu0 0.0
    %1748 = vmatprep.subr.mxu0 0.0
    %1749 = vmatpush1.xpose.msra.mxu0 0.0
    %1750 = vmatprep.subr.mxu0 0.0
    %1751 = vmatpush1.xpose.msra.mxu0 0.0
    %1752 = vmatprep.subr.mxu0 0.0
    %1753 = vmatpush1.xpose.msra.mxu0 0.0
    %1754 = vmatprep.subr.mxu0 0.0
    %1755 = vmatpush1.xpose.msra.mxu0 0.0
    %1756 = vmatprep.subr.mxu0 0.0
    %1757 = vmatpush1.xpose.msra.mxu0 0.0
    %1758 = vmatprep.subr.mxu0 0.0
    %1759 = vmatpush1.xpose.msra.mxu0 0.0
    %1760 = vmatprep.subr.mxu0 0.0
    %1761 = vmatpush1.xpose.msra.mxu0 0.0
    %1762 = vmatprep.subr.mxu0 0.0
    %1763 = vmatpush1.xpose.msra.mxu0 0.0
    %1764 = vmatprep.subr.mxu0 0.0
    %1765 = vmatpush1.xpose.msra.mxu0 0.0
    %1766 = vmatprep.subr.mxu0 0.0
    %1767 = vmatpush1.xpose.msra.mxu0 0.0
    %1768 = vmatprep.subr.mxu0 0.0
    %1769 = vmatpush1.xpose.msra.mxu0 0.0
    %1770 = vmatprep.subr.mxu0 0.0
    %1771 = vmatpush1.xpose.msra.mxu0 0.0
    %1772 = vmatprep.subr.mxu0 0.0
    %1773 = vmatpush1.xpose.msra.mxu0 0.0
    %1774 = vmatprep.subr.mxu0 0.0
    %1775 = vmatpush1.xpose.msra.mxu0 0.0
    %1776 = vmatprep.subr.mxu0 0.0
    %1777 = vmatpush1.xpose.msra.mxu0 0.0
    %1778 = vmatprep.subr.mxu0 0.0
    %1779 = vmatpush1.xpose.msra.mxu0 0.0
    %1780 = vmatprep.subr.mxu0 0.0
    %1781 = vmatpush1.xpose.msra.mxu0 0.0
    %1782 = vmatprep.subr.mxu0 0.0
    %1783 = vmatpush1.xpose.msra.mxu0 0.0
    %1784 = vmatprep.subr.mxu0 0.0
    %1785 = vmatpush1.xpose.msra.mxu0 0.0
    %1786 = vmatprep.subr.mxu0 0.0
    %1787 = vmatpush1.xpose.msra.mxu0 0.0
    %1788 = vmatprep.mubr.f32.mxu0 0.0
    %1789 = vmatmul.mubr.f32.gmra.mrb[0].mxu0 %v539
    %v1790 = vpop.f32.mrb[0].mxu0
    %v1791 = vadd.f32 %v304, %v1790
    %v1792 = vpop.f32.mrb[0].mxu0
    %1793 = vdwg.mxu0
    %v1795 = vsel %vm309, %v281, 0
    %1797 = vmatprep.subr.mxu0 0.0
    %1798 = vmatpush1.xpose.msra.mxu0 %v1795
    %1799 = vmatprep.subr.mxu0 0.0
    %1800 = vmatpush1.xpose.msra.mxu0 0.0
    %1801 = vmatprep.subr.mxu0 0.0
    %1802 = vmatpush1.xpose.msra.mxu0 0.0
    %1803 = vmatprep.subr.mxu0 0.0
    %1804 = vmatpush1.xpose.msra.mxu0 0.0
    %1805 = vmatprep.subr.mxu0 0.0
    %1806 = vmatpush1.xpose.msra.mxu0 0.0
    %1807 = vmatprep.subr.mxu0 0.0
    %1808 = vmatpush1.xpose.msra.mxu0 0.0
    %1809 = vmatprep.subr.mxu0 0.0
    %1810 = vmatpush1.xpose.msra.mxu0 0.0
    %1811 = vmatprep.subr.mxu0 0.0
    %1812 = vmatpush1.xpose.msra.mxu0 0.0
    %1813 = vmatprep.subr.mxu0 0.0
    %1814 = vmatpush1.xpose.msra.mxu0 0.0
    %1815 = vmatprep.subr.mxu0 0.0
    %1816 = vmatpush1.xpose.msra.mxu0 0.0
    %1817 = vmatprep.subr.mxu0 0.0
    %1818 = vmatpush1.xpose.msra.mxu0 0.0
    %1819 = vmatprep.subr.mxu0 0.0
    %1820 = vmatpush1.xpose.msra.mxu0 0.0
    %1821 = vmatprep.subr.mxu0 0.0
    %1822 = vmatpush1.xpose.msra.mxu0 0.0
    %1823 = vmatprep.subr.mxu0 0.0
    %1824 = vmatpush1.xpose.msra.mxu0 0.0
    %1825 = vmatprep.subr.mxu0 0.0
    %1826 = vmatpush1.xpose.msra.mxu0 0.0
    %1827 = vmatprep.subr.mxu0 0.0
    %1828 = vmatpush1.xpose.msra.mxu0 0.0
    %1829 = vmatprep.subr.mxu0 0.0
    %1830 = vmatpush1.xpose.msra.mxu0 0.0
    %1831 = vmatprep.subr.mxu0 0.0
    %1832 = vmatpush1.xpose.msra.mxu0 0.0
    %1833 = vmatprep.subr.mxu0 0.0
    %1834 = vmatpush1.xpose.msra.mxu0 0.0
    %1835 = vmatprep.subr.mxu0 0.0
    %1836 = vmatpush1.xpose.msra.mxu0 0.0
    %1837 = vmatprep.subr.mxu0 0.0
    %1838 = vmatpush1.xpose.msra.mxu0 0.0
    %1839 = vmatprep.subr.mxu0 0.0
    %1840 = vmatpush1.xpose.msra.mxu0 0.0
    %1841 = vmatprep.subr.mxu0 0.0
    %1842 = vmatpush1.xpose.msra.mxu0 0.0
    %1843 = vmatprep.subr.mxu0 0.0
    %1844 = vmatpush1.xpose.msra.mxu0 0.0
    %1845 = vmatprep.subr.mxu0 0.0
    %1846 = vmatpush1.xpose.msra.mxu0 0.0
    %1847 = vmatprep.subr.mxu0 0.0
    %1848 = vmatpush1.xpose.msra.mxu0 0.0
    %1849 = vmatprep.subr.mxu0 0.0
    %1850 = vmatpush1.xpose.msra.mxu0 0.0
    %1851 = vmatprep.subr.mxu0 0.0
    %1852 = vmatpush1.xpose.msra.mxu0 0.0
    %1853 = vmatprep.subr.mxu0 0.0
    %1854 = vmatpush1.xpose.msra.mxu0 0.0
    %1855 = vmatprep.subr.mxu0 0.0
    %1856 = vmatpush1.xpose.msra.mxu0 0.0
    %1857 = vmatprep.subr.mxu0 0.0
    %1858 = vmatpush1.xpose.msra.mxu0 0.0
    %1859 = vmatprep.subr.mxu0 0.0
    %1860 = vmatpush1.xpose.msra.mxu0 0.0
    %1861 = vmatprep.mubr.f32.mxu0 0.0
    %1862 = vmatmul.mubr.f32.gmra.mrb[0].mxu0 %v615
    %v1863 = vpop.f32.mrb[0].mxu0
    %v1864 = vadd.f32 %v305, %v1863
    %v1865 = vpop.f32.mrb[0].mxu0
    %1866 = vdwg.mxu0
    %v1868 = vsel %vm309, %v282, 0
    %1870 = vmatprep.subr.mxu0 0.0
    %1871 = vmatpush1.xpose.msra.mxu0 %v1868
    %1872 = vmatprep.subr.mxu0 0.0
    %1873 = vmatpush1.xpose.msra.mxu0 0.0
    %1874 = vmatprep.subr.mxu0 0.0
    %1875 = vmatpush1.xpose.msra.mxu0 0.0
    %1876 = vmatprep.subr.mxu0 0.0
    %1877 = vmatpush1.xpose.msra.mxu0 0.0
    %1878 = vmatprep.subr.mxu0 0.0
    %1879 = vmatpush1.xpose.msra.mxu0 0.0
    %1880 = vmatprep.subr.mxu0 0.0
    %1881 = vmatpush1.xpose.msra.mxu0 0.0
    %1882 = vmatprep.subr.mxu0 0.0
    %1883 = vmatpush1.xpose.msra.mxu0 0.0
    %1884 = vmatprep.subr.mxu0 0.0
    %1885 = vmatpush1.xpose.msra.mxu0 0.0
    %1886 = vmatprep.subr.mxu0 0.0
    %1887 = vmatpush1.xpose.msra.mxu0 0.0
    %1888 = vmatprep.subr.mxu0 0.0
    %1889 = vmatpush1.xpose.msra.mxu0 0.0
    %1890 = vmatprep.subr.mxu0 0.0
    %1891 = vmatpush1.xpose.msra.mxu0 0.0
    %1892 = vmatprep.subr.mxu0 0.0
    %1893 = vmatpush1.xpose.msra.mxu0 0.0
    %1894 = vmatprep.subr.mxu0 0.0
    %1895 = vmatpush1.xpose.msra.mxu0 0.0
    %1896 = vmatprep.subr.mxu0 0.0
    %1897 = vmatpush1.xpose.msra.mxu0 0.0
    %1898 = vmatprep.subr.mxu0 0.0
    %1899 = vmatpush1.xpose.msra.mxu0 0.0
    %1900 = vmatprep.subr.mxu0 0.0
    %1901 = vmatpush1.xpose.msra.mxu0 0.0
    %1902 = vmatprep.subr.mxu0 0.0
    %1903 = vmatpush1.xpose.msra.mxu0 0.0
    %1904 = vmatprep.subr.mxu0 0.0
    %1905 = vmatpush1.xpose.msra.mxu0 0.0
    %1906 = vmatprep.subr.mxu0 0.0
    %1907 = vmatpush1.xpose.msra.mxu0 0.0
    %1908 = vmatprep.subr.mxu0 0.0
    %1909 = vmatpush1.xpose.msra.mxu0 0.0
    %1910 = vmatprep.subr.mxu0 0.0
    %1911 = vmatpush1.xpose.msra.mxu0 0.0
    %1912 = vmatprep.subr.mxu0 0.0
    %1913 = vmatpush1.xpose.msra.mxu0 0.0
    %1914 = vmatprep.subr.mxu0 0.0
    %1915 = vmatpush1.xpose.msra.mxu0 0.0
    %1916 = vmatprep.subr.mxu0 0.0
    %1917 = vmatpush1.xpose.msra.mxu0 0.0
    %1918 = vmatprep.subr.mxu0 0.0
    %1919 = vmatpush1.xpose.msra.mxu0 0.0
    %1920 = vmatprep.subr.mxu0 0.0
    %1921 = vmatpush1.xpose.msra.mxu0 0.0
    %1922 = vmatprep.subr.mxu0 0.0
    %1923 = vmatpush1.xpose.msra.mxu0 0.0
    %1924 = vmatprep.subr.mxu0 0.0
    %1925 = vmatpush1.xpose.msra.mxu0 0.0
    %1926 = vmatprep.subr.mxu0 0.0
    %1927 = vmatpush1.xpose.msra.mxu0 0.0
    %1928 = vmatprep.subr.mxu0 0.0
    %1929 = vmatpush1.xpose.msra.mxu0 0.0
    %1930 = vmatprep.subr.mxu0 0.0
    %1931 = vmatpush1.xpose.msra.mxu0 0.0
    %1932 = vmatprep.subr.mxu0 0.0
    %1933 = vmatpush1.xpose.msra.mxu0 0.0
    %1934 = vmatprep.mubr.f32.mxu0 0.0
    %1935 = vmatmul.mubr.f32.gmra.mrb[0].mxu0 %v691
    %v1936 = vpop.f32.mrb[0].mxu0
    %v1937 = vadd.f32 %v306, %v1936
    %v1938 = vpop.f32.mrb[0].mxu0
    %1939 = vdwg.mxu0
    %v1941 = vsel %vm309, %v283, 0
    %1943 = vmatprep.subr.mxu0 0.0
    %1944 = vmatpush1.xpose.msra.mxu0 %v1941
    %1945 = vmatprep.subr.mxu0 0.0
    %1946 = vmatpush1.xpose.msra.mxu0 0.0
    %1947 = vmatprep.subr.mxu0 0.0
    %1948 = vmatpush1.xpose.msra.mxu0 0.0
    %1949 = vmatprep.subr.mxu0 0.0
    %1950 = vmatpush1.xpose.msra.mxu0 0.0
    %1951 = vmatprep.subr.mxu0 0.0
    %1952 = vmatpush1.xpose.msra.mxu0 0.0
    %1953 = vmatprep.subr.mxu0 0.0
    %1954 = vmatpush1.xpose.msra.mxu0 0.0
    %1955 = vmatprep.subr.mxu0 0.0
    %1956 = vmatpush1.xpose.msra.mxu0 0.0
    %1957 = vmatprep.subr.mxu0 0.0
    %1958 = vmatpush1.xpose.msra.mxu0 0.0
    %1959 = vmatprep.subr.mxu0 0.0
    %1960 = vmatpush1.xpose.msra.mxu0 0.0
    %1961 = vmatprep.subr.mxu0 0.0
    %1962 = vmatpush1.xpose.msra.mxu0 0.0
    %1963 = vmatprep.subr.mxu0 0.0
    %1964 = vmatpush1.xpose.msra.mxu0 0.0
    %1965 = vmatprep.subr.mxu0 0.0
    %1966 = vmatpush1.xpose.msra.mxu0 0.0
    %1967 = vmatprep.subr.mxu0 0.0
    %1968 = vmatpush1.xpose.msra.mxu0 0.0
    %1969 = vmatprep.subr.mxu0 0.0
    %1970 = vmatpush1.xpose.msra.mxu0 0.0
    %1971 = vmatprep.subr.mxu0 0.0
    %1972 = vmatpush1.xpose.msra.mxu0 0.0
    %1973 = vmatprep.subr.mxu0 0.0
    %1974 = vmatpush1.xpose.msra.mxu0 0.0
    %1975 = vmatprep.subr.mxu0 0.0
    %1976 = vmatpush1.xpose.msra.mxu0 0.0
    %1977 = vmatprep.subr.mxu0 0.0
    %1978 = vmatpush1.xpose.msra.mxu0 0.0
    %1979 = vmatprep.subr.mxu0 0.0
    %1980 = vmatpush1.xpose.msra.mxu0 0.0
    %1981 = vmatprep.subr.mxu0 0.0
    %1982 = vmatpush1.xpose.msra.mxu0 0.0
    %1983 = vmatprep.subr.mxu0 0.0
    %1984 = vmatpush1.xpose.msra.mxu0 0.0
    %1985 = vmatprep.subr.mxu0 0.0
    %1986 = vmatpush1.xpose.msra.mxu0 0.0
    %1987 = vmatprep.subr.mxu0 0.0
    %1988 = vmatpush1.xpose.msra.mxu0 0.0
    %1989 = vmatprep.subr.mxu0 0.0
    %1990 = vmatpush1.xpose.msra.mxu0 0.0
    %1991 = vmatprep.subr.mxu0 0.0
    %1992 = vmatpush1.xpose.msra.mxu0 0.0
    %1993 = vmatprep.subr.mxu0 0.0
    %1994 = vmatpush1.xpose.msra.mxu0 0.0
    %1995 = vmatprep.subr.mxu0 0.0
    %1996 = vmatpush1.xpose.msra.mxu0 0.0
    %1997 = vmatprep.subr.mxu0 0.0
    %1998 = vmatpush1.xpose.msra.mxu0 0.0
    %1999 = vmatprep.subr.mxu0 0.0
    %2000 = vmatpush1.xpose.msra.mxu0 0.0
    %2001 = vmatprep.subr.mxu0 0.0
    %2002 = vmatpush1.xpose.msra.mxu0 0.0
    %2003 = vmatprep.subr.mxu0 0.0
    %2004 = vmatpush1.xpose.msra.mxu0 0.0
    %2005 = vmatprep.subr.mxu0 0.0
    %2006 = vmatpush1.xpose.msra.mxu0 0.0
    %2007 = vmatprep.mubr.f32.mxu0 0.0
    %2008 = vmatmul.mubr.f32.gmra.mrb[0].mxu0 %v767
    %v2009 = vpop.f32.mrb[0].mxu0
    %v2010 = vadd.f32 %v307, %v2009
    %v2011 = vpop.f32.mrb[0].mxu0
    %2012 = vdwg.mxu0
    %v2014 = vsel %vm309, %v284, 0
    %2016 = vmatprep.subr.mxu0 0.0
    %2017 = vmatpush1.xpose.msra.mxu0 %v2014
    %2018 = vmatprep.subr.mxu0 0.0
    %2019 = vmatpush1.xpose.msra.mxu0 0.0
    %2020 = vmatprep.subr.mxu0 0.0
    %2021 = vmatpush1.xpose.msra.mxu0 0.0
    %2022 = vmatprep.subr.mxu0 0.0
    %2023 = vmatpush1.xpose.msra.mxu0 0.0
    %2024 = vmatprep.subr.mxu0 0.0
    %2025 = vmatpush1.xpose.msra.mxu0 0.0
    %2026 = vmatprep.subr.mxu0 0.0
    %2027 = vmatpush1.xpose.msra.mxu0 0.0
    %2028 = vmatprep.subr.mxu0 0.0
    %2029 = vmatpush1.xpose.msra.mxu0 0.0
    %2030 = vmatprep.subr.mxu0 0.0
    %2031 = vmatpush1.xpose.msra.mxu0 0.0
    %2032 = vmatprep.subr.mxu0 0.0
    %2033 = vmatpush1.xpose.msra.mxu0 0.0
    %2034 = vmatprep.subr.mxu0 0.0
    %2035 = vmatpush1.xpose.msra.mxu0 0.0
    %2036 = vmatprep.subr.mxu0 0.0
    %2037 = vmatpush1.xpose.msra.mxu0 0.0
    %2038 = vmatprep.subr.mxu0 0.0
    %2039 = vmatpush1.xpose.msra.mxu0 0.0
    %2040 = vmatprep.subr.mxu0 0.0
    %2041 = vmatpush1.xpose.msra.mxu0 0.0
    %2042 = vmatprep.subr.mxu0 0.0
    %2043 = vmatpush1.xpose.msra.mxu0 0.0
    %2044 = vmatprep.subr.mxu0 0.0
    %2045 = vmatpush1.xpose.msra.mxu0 0.0
    %2046 = vmatprep.subr.mxu0 0.0
    %2047 = vmatpush1.xpose.msra.mxu0 0.0
    %2048 = vmatprep.subr.mxu0 0.0
    %2049 = vmatpush1.xpose.msra.mxu0 0.0
    %2050 = vmatprep.subr.mxu0 0.0
    %2051 = vmatpush1.xpose.msra.mxu0 0.0
    %2052 = vmatprep.subr.mxu0 0.0
    %2053 = vmatpush1.xpose.msra.mxu0 0.0
    %2054 = vmatprep.subr.mxu0 0.0
    %2055 = vmatpush1.xpose.msra.mxu0 0.0
    %2056 = vmatprep.subr.mxu0 0.0
    %2057 = vmatpush1.xpose.msra.mxu0 0.0
    %2058 = vmatprep.subr.mxu0 0.0
    %2059 = vmatpush1.xpose.msra.mxu0 0.0
    %2060 = vmatprep.subr.mxu0 0.0
    %2061 = vmatpush1.xpose.msra.mxu0 0.0
    %2062 = vmatprep.subr.mxu0 0.0
    %2063 = vmatpush1.xpose.msra.mxu0 0.0
    %2064 = vmatprep.subr.mxu0 0.0
    %2065 = vmatpush1.xpose.msra.mxu0 0.0
    %2066 = vmatprep.subr.mxu0 0.0
    %2067 = vmatpush1.xpose.msra.mxu0 0.0
    %2068 = vmatprep.subr.mxu0 0.0
    %2069 = vmatpush1.xpose.msra.mxu0 0.0
    %2070 = vmatprep.subr.mxu0 0.0
    %2071 = vmatpush1.xpose.msra.mxu0 0.0
    %2072 = vmatprep.subr.mxu0 0.0
    %2073 = vmatpush1.xpose.msra.mxu0 0.0
    %2074 = vmatprep.subr.mxu0 0.0
    %2075 = vmatpush1.xpose.msra.mxu0 0.0
    %2076 = vmatprep.subr.mxu0 0.0
    %2077 = vmatpush1.xpose.msra.mxu0 0.0
    %2078 = vmatprep.subr.mxu0 0.0
    %2079 = vmatpush1.xpose.msra.mxu0 0.0
    %2080 = vmatprep.mubr.f32.mxu0 0.0
    %2081 = vmatmul.mubr.f32.gmra.mrb[0].mxu0 %v843
    %v2082 = vpop.f32.mrb[0].mxu0
    %v2083 = vadd.f32 %v308, %v2082
    %v2084 = vpop.f32.mrb[0].mxu0
    %2085 = vdwg.mxu0
    %vm2086 = vcmask 64512
    %v2088 = vsel %vm2086, %v383, 0
    %v2091 = vsel %vm2086, %v988, 0
    %2093 = vmatprep.subr.mxu0 0.0
    %2094 = vmatpush1.xpose.msra.mxu0 %v2091
    %2095 = vmatprep.subr.mxu0 0.0
    %2096 = vmatpush1.xpose.msra.mxu0 0.0
    %2097 = vmatprep.subr.mxu0 0.0
    %2098 = vmatpush1.xpose.msra.mxu0 0.0
    %2099 = vmatprep.subr.mxu0 0.0
    %2100 = vmatpush1.xpose.msra.mxu0 0.0
    %2101 = vmatprep.subr.mxu0 0.0
    %2102 = vmatpush1.xpose.msra.mxu0 0.0
    %2103 = vmatprep.subr.mxu0 0.0
    %2104 = vmatpush1.xpose.msra.mxu0 0.0
    %2105 = vmatprep.subr.mxu0 0.0
    %2106 = vmatpush1.xpose.msra.mxu0 0.0
    %2107 = vmatprep.subr.mxu0 0.0
    %2108 = vmatpush1.xpose.msra.mxu0 0.0
    %2109 = vmatprep.subr.mxu0 0.0
    %2110 = vmatpush1.xpose.msra.mxu0 0.0
    %2111 = vmatprep.subr.mxu0 0.0
    %2112 = vmatpush1.xpose.msra.mxu0 0.0
    %2113 = vmatprep.subr.mxu0 0.0
    %2114 = vmatpush1.xpose.msra.mxu0 0.0
    %2115 = vmatprep.subr.mxu0 0.0
    %2116 = vmatpush1.xpose.msra.mxu0 0.0
    %2117 = vmatprep.subr.mxu0 0.0
    %2118 = vmatpush1.xpose.msra.mxu0 0.0
    %2119 = vmatprep.subr.mxu0 0.0
    %2120 = vmatpush1.xpose.msra.mxu0 0.0
    %2121 = vmatprep.subr.mxu0 0.0
    %2122 = vmatpush1.xpose.msra.mxu0 0.0
    %2123 = vmatprep.subr.mxu0 0.0
    %2124 = vmatpush1.xpose.msra.mxu0 0.0
    %2125 = vmatprep.subr.mxu0 0.0
    %2126 = vmatpush1.xpose.msra.mxu0 0.0
    %2127 = vmatprep.subr.mxu0 0.0
    %2128 = vmatpush1.xpose.msra.mxu0 0.0
    %2129 = vmatprep.subr.mxu0 0.0
    %2130 = vmatpush1.xpose.msra.mxu0 0.0
    %2131 = vmatprep.subr.mxu0 0.0
    %2132 = vmatpush1.xpose.msra.mxu0 0.0
    %2133 = vmatprep.subr.mxu0 0.0
    %2134 = vmatpush1.xpose.msra.mxu0 0.0
    %2135 = vmatprep.subr.mxu0 0.0
    %2136 = vmatpush1.xpose.msra.mxu0 0.0
    %2137 = vmatprep.subr.mxu0 0.0
    %2138 = vmatpush1.xpose.msra.mxu0 0.0
    %2139 = vmatprep.subr.mxu0 0.0
    %2140 = vmatpush1.xpose.msra.mxu0 0.0
    %2141 = vmatprep.subr.mxu0 0.0
    %2142 = vmatpush1.xpose.msra.mxu0 0.0
    %2143 = vmatprep.subr.mxu0 0.0
    %2144 = vmatpush1.xpose.msra.mxu0 0.0
    %2145 = vmatprep.subr.mxu0 0.0
    %2146 = vmatpush1.xpose.msra.mxu0 0.0
    %2147 = vmatprep.subr.mxu0 0.0
    %2148 = vmatpush1.xpose.msra.mxu0 0.0
    %2149 = vmatprep.subr.mxu0 0.0
    %2150 = vmatpush1.xpose.msra.mxu0 0.0
    %2151 = vmatprep.subr.mxu0 0.0
    %2152 = vmatpush1.xpose.msra.mxu0 0.0
    %2153 = vmatprep.subr.mxu0 0.0
    %2154 = vmatpush1.xpose.msra.mxu0 0.0
    %2155 = vmatprep.subr.mxu0 0.0
    %2156 = vmatpush1.xpose.msra.mxu0 0.0
    %2157 = vmatprep.mubr.f32.mxu0 0.0
    %2158 = vmatmul.mubr.f32.gmra.mrb[0].mxu0 %v2088
    %v2159 = vpop.f32.mrb[0].mxu0
    %v2160 = vadd.f32 0.0, %v2159
    %v2161 = vpop.f32.mrb[0].mxu0
    %2162 = vdwg.mxu0
    %v2164 = vsel %vm2086, %v459, 0
    %v2167 = vsel %vm2086, %v1061, 0
    %2169 = vmatprep.subr.mxu0 0.0
    %2170 = vmatpush1.xpose.msra.mxu0 %v2167
    %2171 = vmatprep.subr.mxu0 0.0
    %2172 = vmatpush1.xpose.msra.mxu0 0.0
    %2173 = vmatprep.subr.mxu0 0.0
    %2174 = vmatpush1.xpose.msra.mxu0 0.0
    %2175 = vmatprep.subr.mxu0 0.0
    %2176 = vmatpush1.xpose.msra.mxu0 0.0
    %2177 = vmatprep.subr.mxu0 0.0
    %2178 = vmatpush1.xpose.msra.mxu0 0.0
    %2179 = vmatprep.subr.mxu0 0.0
    %2180 = vmatpush1.xpose.msra.mxu0 0.0
    %2181 = vmatprep.subr.mxu0 0.0
    %2182 = vmatpush1.xpose.msra.mxu0 0.0
    %2183 = vmatprep.subr.mxu0 0.0
    %2184 = vmatpush1.xpose.msra.mxu0 0.0
    %2185 = vmatprep.subr.mxu0 0.0
    %2186 = vmatpush1.xpose.msra.mxu0 0.0
    %2187 = vmatprep.subr.mxu0 0.0
    %2188 = vmatpush1.xpose.msra.mxu0 0.0
    %2189 = vmatprep.subr.mxu0 0.0
    %2190 = vmatpush1.xpose.msra.mxu0 0.0
    %2191 = vmatprep.subr.mxu0 0.0
    %2192 = vmatpush1.xpose.msra.mxu0 0.0
    %2193 = vmatprep.subr.mxu0 0.0
    %2194 = vmatpush1.xpose.msra.mxu0 0.0
    %2195 = vmatprep.subr.mxu0 0.0
    %2196 = vmatpush1.xpose.msra.mxu0 0.0
    %2197 = vmatprep.subr.mxu0 0.0
    %2198 = vmatpush1.xpose.msra.mxu0 0.0
    %2199 = vmatprep.subr.mxu0 0.0
    %2200 = vmatpush1.xpose.msra.mxu0 0.0
    %2201 = vmatprep.subr.mxu0 0.0
    %2202 = vmatpush1.xpose.msra.mxu0 0.0
    %2203 = vmatprep.subr.mxu0 0.0
    %2204 = vmatpush1.xpose.msra.mxu0 0.0
    %2205 = vmatprep.subr.mxu0 0.0
    %2206 = vmatpush1.xpose.msra.mxu0 0.0
    %2207 = vmatprep.subr.mxu0 0.0
    %2208 = vmatpush1.xpose.msra.mxu0 0.0
    %2209 = vmatprep.subr.mxu0 0.0
    %2210 = vmatpush1.xpose.msra.mxu0 0.0
    %2211 = vmatprep.subr.mxu0 0.0
    %2212 = vmatpush1.xpose.msra.mxu0 0.0
    %2213 = vmatprep.subr.mxu0 0.0
    %2214 = vmatpush1.xpose.msra.mxu0 0.0
    %2215 = vmatprep.subr.mxu0 0.0
    %2216 = vmatpush1.xpose.msra.mxu0 0.0
    %2217 = vmatprep.subr.mxu0 0.0
    %2218 = vmatpush1.xpose.msra.mxu0 0.0
    %2219 = vmatprep.subr.mxu0 0.0
    %2220 = vmatpush1.xpose.msra.mxu0 0.0
    %2221 = vmatprep.subr.mxu0 0.0
    %2222 = vmatpush1.xpose.msra.mxu0 0.0
    %2223 = vmatprep.subr.mxu0 0.0
    %2224 = vmatpush1.xpose.msra.mxu0 0.0
    %2225 = vmatprep.subr.mxu0 0.0
    %2226 = vmatpush1.xpose.msra.mxu0 0.0
    %2227 = vmatprep.subr.mxu0 0.0
    %2228 = vmatpush1.xpose.msra.mxu0 0.0
    %2229 = vmatprep.subr.mxu0 0.0
    %2230 = vmatpush1.xpose.msra.mxu0 0.0
    %2231 = vmatprep.subr.mxu0 0.0
    %2232 = vmatpush1.xpose.msra.mxu0 0.0
    %2233 = vmatprep.mubr.f32.mxu0 0.0
    %2234 = vmatmul.mubr.f32.gmra.mrb[0].mxu0 %v2164
    %v2235 = vpop.f32.mrb[0].mxu0
    %v2236 = vadd.f32 0.0, %v2235
    %v2237 = vpop.f32.mrb[0].mxu0
    %2238 = vdwg.mxu0
    %v2240 = vsel %vm2086, %v535, 0
    %v2243 = vsel %vm2086, %v1134, 0
    %2245 = vmatprep.subr.mxu0 0.0
    %2246 = vmatpush1.xpose.msra.mxu0 %v2243
    %2247 = vmatprep.subr.mxu0 0.0
    %2248 = vmatpush1.xpose.msra.mxu0 0.0
    %2249 = vmatprep.subr.mxu0 0.0
    %2250 = vmatpush1.xpose.msra.mxu0 0.0
    %2251 = vmatprep.subr.mxu0 0.0
    %2252 = vmatpush1.xpose.msra.mxu0 0.0
    %2253 = vmatprep.subr.mxu0 0.0
    %2254 = vmatpush1.xpose.msra.mxu0 0.0
    %2255 = vmatprep.subr.mxu0 0.0
    %2256 = vmatpush1.xpose.msra.mxu0 0.0
    %2257 = vmatprep.subr.mxu0 0.0
    %2258 = vmatpush1.xpose.msra.mxu0 0.0
    %2259 = vmatprep.subr.mxu0 0.0
    %2260 = vmatpush1.xpose.msra.mxu0 0.0
    %2261 = vmatprep.subr.mxu0 0.0
    %2262 = vmatpush1.xpose.msra.mxu0 0.0
    %2263 = vmatprep.subr.mxu0 0.0
    %2264 = vmatpush1.xpose.msra.mxu0 0.0
    %2265 = vmatprep.subr.mxu0 0.0
    %2266 = vmatpush1.xpose.msra.mxu0 0.0
    %2267 = vmatprep.subr.mxu0 0.0
    %2268 = vmatpush1.xpose.msra.mxu0 0.0
    %2269 = vmatprep.subr.mxu0 0.0
    %2270 = vmatpush1.xpose.msra.mxu0 0.0
    %2271 = vmatprep.subr.mxu0 0.0
    %2272 = vmatpush1.xpose.msra.mxu0 0.0
    %2273 = vmatprep.subr.mxu0 0.0
    %2274 = vmatpush1.xpose.msra.mxu0 0.0
    %2275 = vmatprep.subr.mxu0 0.0
    %2276 = vmatpush1.xpose.msra.mxu0 0.0
    %2277 = vmatprep.subr.mxu0 0.0
    %2278 = vmatpush1.xpose.msra.mxu0 0.0
    %2279 = vmatprep.subr.mxu0 0.0
    %2280 = vmatpush1.xpose.msra.mxu0 0.0
    %2281 = vmatprep.subr.mxu0 0.0
    %2282 = vmatpush1.xpose.msra.mxu0 0.0
    %2283 = vmatprep.subr.mxu0 0.0
    %2284 = vmatpush1.xpose.msra.mxu0 0.0
    %2285 = vmatprep.subr.mxu0 0.0
    %2286 = vmatpush1.xpose.msra.mxu0 0.0
    %2287 = vmatprep.subr.mxu0 0.0
    %2288 = vmatpush1.xpose.msra.mxu0 0.0
    %2289 = vmatprep.subr.mxu0 0.0
    %2290 = vmatpush1.xpose.msra.mxu0 0.0
    %2291 = vmatprep.subr.mxu0 0.0
    %2292 = vmatpush1.xpose.msra.mxu0 0.0
    %2293 = vmatprep.subr.mxu0 0.0
    %2294 = vmatpush1.xpose.msra.mxu0 0.0
    %2295 = vmatprep.subr.mxu0 0.0
    %2296 = vmatpush1.xpose.msra.mxu0 0.0
    %2297 = vmatprep.subr.mxu0 0.0
    %2298 = vmatpush1.xpose.msra.mxu0 0.0
    %2299 = vmatprep.subr.mxu0 0.0
    %2300 = vmatpush1.xpose.msra.mxu0 0.0
    %2301 = vmatprep.subr.mxu0 0.0
    %2302 = vmatpush1.xpose.msra.mxu0 0.0
    %2303 = vmatprep.subr.mxu0 0.0
    %2304 = vmatpush1.xpose.msra.mxu0 0.0
    %2305 = vmatprep.subr.mxu0 0.0
    %2306 = vmatpush1.xpose.msra.mxu0 0.0
    %2307 = vmatprep.subr.mxu0 0.0
    %2308 = vmatpush1.xpose.msra.mxu0 0.0
    %2309 = vmatprep.mubr.f32.mxu0 0.0
    %2310 = vmatmul.mubr.f32.gmra.mrb[0].mxu0 %v2240
    %v2311 = vpop.f32.mrb[0].mxu0
    %v2312 = vadd.f32 0.0, %v2311
    %v2313 = vpop.f32.mrb[0].mxu0
    %2314 = vdwg.mxu0
    %v2316 = vsel %vm2086, %v611, 0
    %v2319 = vsel %vm2086, %v1207, 0
    %2321 = vmatprep.subr.mxu0 0.0
    %2322 = vmatpush1.xpose.msra.mxu0 %v2319
    %2323 = vmatprep.subr.mxu0 0.0
    %2324 = vmatpush1.xpose.msra.mxu0 0.0
    %2325 = vmatprep.subr.mxu0 0.0
    %2326 = vmatpush1.xpose.msra.mxu0 0.0
    %2327 = vmatprep.subr.mxu0 0.0
    %2328 = vmatpush1.xpose.msra.mxu0 0.0
    %2329 = vmatprep.subr.mxu0 0.0
    %2330 = vmatpush1.xpose.msra.mxu0 0.0
    %2331 = vmatprep.subr.mxu0 0.0
    %2332 = vmatpush1.xpose.msra.mxu0 0.0
    %2333 = vmatprep.subr.mxu0 0.0
    %2334 = vmatpush1.xpose.msra.mxu0 0.0
    %2335 = vmatprep.subr.mxu0 0.0
    %2336 = vmatpush1.xpose.msra.mxu0 0.0
    %2337 = vmatprep.subr.mxu0 0.0
    %2338 = vmatpush1.xpose.msra.mxu0 0.0
    %2339 = vmatprep.subr.mxu0 0.0
    %2340 = vmatpush1.xpose.msra.mxu0 0.0
    %2341 = vmatprep.subr.mxu0 0.0
    %2342 = vmatpush1.xpose.msra.mxu0 0.0
    %2343 = vmatprep.subr.mxu0 0.0
    %2344 = vmatpush1.xpose.msra.mxu0 0.0
    %2345 = vmatprep.subr.mxu0 0.0
    %2346 = vmatpush1.xpose.msra.mxu0 0.0
    %2347 = vmatprep.subr.mxu0 0.0
    %2348 = vmatpush1.xpose.msra.mxu0 0.0
    %2349 = vmatprep.subr.mxu0 0.0
    %2350 = vmatpush1.xpose.msra.mxu0 0.0
    %2351 = vmatprep.subr.mxu0 0.0
    %2352 = vmatpush1.xpose.msra.mxu0 0.0
    %2353 = vmatprep.subr.mxu0 0.0
    %2354 = vmatpush1.xpose.msra.mxu0 0.0
    %2355 = vmatprep.subr.mxu0 0.0
    %2356 = vmatpush1.xpose.msra.mxu0 0.0
    %2357 = vmatprep.subr.mxu0 0.0
    %2358 = vmatpush1.xpose.msra.mxu0 0.0
    %2359 = vmatprep.subr.mxu0 0.0
    %2360 = vmatpush1.xpose.msra.mxu0 0.0
    %2361 = vmatprep.subr.mxu0 0.0
    %2362 = vmatpush1.xpose.msra.mxu0 0.0
    %2363 = vmatprep.subr.mxu0 0.0
    %2364 = vmatpush1.xpose.msra.mxu0 0.0
    %2365 = vmatprep.subr.mxu0 0.0
    %2366 = vmatpush1.xpose.msra.mxu0 0.0
    %2367 = vmatprep.subr.mxu0 0.0
    %2368 = vmatpush1.xpose.msra.mxu0 0.0
    %2369 = vmatprep.subr.mxu0 0.0
    %2370 = vmatpush1.xpose.msra.mxu0 0.0
    %2371 = vmatprep.subr.mxu0 0.0
    %2372 = vmatpush1.xpose.msra.mxu0 0.0
    %2373 = vmatprep.subr.mxu0 0.0
    %2374 = vmatpush1.xpose.msra.mxu0 0.0
    %2375 = vmatprep.subr.mxu0 0.0
    %2376 = vmatpush1.xpose.msra.mxu0 0.0
    %2377 = vmatprep.subr.mxu0 0.0
    %2378 = vmatpush1.xpose.msra.mxu0 0.0
    %2379 = vmatprep.subr.mxu0 0.0
    %2380 = vmatpush1.xpose.msra.mxu0 0.0
    %2381 = vmatprep.subr.mxu0 0.0
    %2382 = vmatpush1.xpose.msra.mxu0 0.0
    %2383 = vmatprep.subr.mxu0 0.0
    %2384 = vmatpush1.xpose.msra.mxu0 0.0
    %2385 = vmatprep.mubr.f32.mxu0 0.0
    %2386 = vmatmul.mubr.f32.gmra.mrb[0].mxu0 %v2316
    %v2387 = vpop.f32.mrb[0].mxu0
    %v2388 = vadd.f32 0.0, %v2387
    %v2389 = vpop.f32.mrb[0].mxu0
    %2390 = vdwg.mxu0
    %v2392 = vsel %vm2086, %v687, 0
    %v2395 = vsel %vm2086, %v1280, 0
    %2397 = vmatprep.subr.mxu0 0.0
    %2398 = vmatpush1.xpose.msra.mxu0 %v2395
    %2399 = vmatprep.subr.mxu0 0.0
    %2400 = vmatpush1.xpose.msra.mxu0 0.0
    %2401 = vmatprep.subr.mxu0 0.0
    %2402 = vmatpush1.xpose.msra.mxu0 0.0
    %2403 = vmatprep.subr.mxu0 0.0
    %2404 = vmatpush1.xpose.msra.mxu0 0.0
    %2405 = vmatprep.subr.mxu0 0.0
    %2406 = vmatpush1.xpose.msra.mxu0 0.0
    %2407 = vmatprep.subr.mxu0 0.0
    %2408 = vmatpush1.xpose.msra.mxu0 0.0
    %2409 = vmatprep.subr.mxu0 0.0
    %2410 = vmatpush1.xpose.msra.mxu0 0.0
    %2411 = vmatprep.subr.mxu0 0.0
    %2412 = vmatpush1.xpose.msra.mxu0 0.0
    %2413 = vmatprep.subr.mxu0 0.0
    %2414 = vmatpush1.xpose.msra.mxu0 0.0
    %2415 = vmatprep.subr.mxu0 0.0
    %2416 = vmatpush1.xpose.msra.mxu0 0.0
    %2417 = vmatprep.subr.mxu0 0.0
    %2418 = vmatpush1.xpose.msra.mxu0 0.0
    %2419 = vmatprep.subr.mxu0 0.0
    %2420 = vmatpush1.xpose.msra.mxu0 0.0
    %2421 = vmatprep.subr.mxu0 0.0
    %2422 = vmatpush1.xpose.msra.mxu0 0.0
    %2423 = vmatprep.subr.mxu0 0.0
    %2424 = vmatpush1.xpose.msra.mxu0 0.0
    %2425 = vmatprep.subr.mxu0 0.0
    %2426 = vmatpush1.xpose.msra.mxu0 0.0
    %2427 = vmatprep.subr.mxu0 0.0
    %2428 = vmatpush1.xpose.msra.mxu0 0.0
    %2429 = vmatprep.subr.mxu0 0.0
    %2430 = vmatpush1.xpose.msra.mxu0 0.0
    %2431 = vmatprep.subr.mxu0 0.0
    %2432 = vmatpush1.xpose.msra.mxu0 0.0
    %2433 = vmatprep.subr.mxu0 0.0
    %2434 = vmatpush1.xpose.msra.mxu0 0.0
    %2435 = vmatprep.subr.mxu0 0.0
    %2436 = vmatpush1.xpose.msra.mxu0 0.0
    %2437 = vmatprep.subr.mxu0 0.0
    %2438 = vmatpush1.xpose.msra.mxu0 0.0
    %2439 = vmatprep.subr.mxu0 0.0
    %2440 = vmatpush1.xpose.msra.mxu0 0.0
    %2441 = vmatprep.subr.mxu0 0.0
    %2442 = vmatpush1.xpose.msra.mxu0 0.0
    %2443 = vmatprep.subr.mxu0 0.0
    %2444 = vmatpush1.xpose.msra.mxu0 0.0
    %2445 = vmatprep.subr.mxu0 0.0
    %2446 = vmatpush1.xpose.msra.mxu0 0.0
    %2447 = vmatprep.subr.mxu0 0.0
    %2448 = vmatpush1.xpose.msra.mxu0 0.0
    %2449 = vmatprep.subr.mxu0 0.0
    %2450 = vmatpush1.xpose.msra.mxu0 0.0
    %2451 = vmatprep.subr.mxu0 0.0
    %2452 = vmatpush1.xpose.msra.mxu0 0.0
    %2453 = vmatprep.subr.mxu0 0.0
    %2454 = vmatpush1.xpose.msra.mxu0 0.0
    %2455 = vmatprep.subr.mxu0 0.0
    %2456 = vmatpush1.xpose.msra.mxu0 0.0
    %2457 = vmatprep.subr.mxu0 0.0
    %2458 = vmatpush1.xpose.msra.mxu0 0.0
    %2459 = vmatprep.subr.mxu0 0.0
    %2460 = vmatpush1.xpose.msra.mxu0 0.0
    %2461 = vmatprep.mubr.f32.mxu0 0.0
    %2462 = vmatmul.mubr.f32.gmra.mrb[0].mxu0 %v2392
    %v2463 = vpop.f32.mrb[0].mxu0
    %v2464 = vadd.f32 0.0, %v2463
    %v2465 = vpop.f32.mrb[0].mxu0
    %2466 = vdwg.mxu0
    %v2468 = vsel %vm2086, %v763, 0
    %v2471 = vsel %vm2086, %v1353, 0
    %2473 = vmatprep.subr.mxu0 0.0
    %2474 = vmatpush1.xpose.msra.mxu0 %v2471
    %2475 = vmatprep.subr.mxu0 0.0
    %2476 = vmatpush1.xpose.msra.mxu0 0.0
    %2477 = vmatprep.subr.mxu0 0.0
    %2478 = vmatpush1.xpose.msra.mxu0 0.0
    %2479 = vmatprep.subr.mxu0 0.0
    %2480 = vmatpush1.xpose.msra.mxu0 0.0
    %2481 = vmatprep.subr.mxu0 0.0
    %2482 = vmatpush1.xpose.msra.mxu0 0.0
    %2483 = vmatprep.subr.mxu0 0.0
    %2484 = vmatpush1.xpose.msra.mxu0 0.0
    %2485 = vmatprep.subr.mxu0 0.0
    %2486 = vmatpush1.xpose.msra.mxu0 0.0
    %2487 = vmatprep.subr.mxu0 0.0
    %2488 = vmatpush1.xpose.msra.mxu0 0.0
    %2489 = vmatprep.subr.mxu0 0.0
    %2490 = vmatpush1.xpose.msra.mxu0 0.0
    %2491 = vmatprep.subr.mxu0 0.0
    %2492 = vmatpush1.xpose.msra.mxu0 0.0
    %2493 = vmatprep.subr.mxu0 0.0
    %2494 = vmatpush1.xpose.msra.mxu0 0.0
    %2495 = vmatprep.subr.mxu0 0.0
    %2496 = vmatpush1.xpose.msra.mxu0 0.0
    %2497 = vmatprep.subr.mxu0 0.0
    %2498 = vmatpush1.xpose.msra.mxu0 0.0
    %2499 = vmatprep.subr.mxu0 0.0
    %2500 = vmatpush1.xpose.msra.mxu0 0.0
    %2501 = vmatprep.subr.mxu0 0.0
    %2502 = vmatpush1.xpose.msra.mxu0 0.0
    %2503 = vmatprep.subr.mxu0 0.0
    %2504 = vmatpush1.xpose.msra.mxu0 0.0
    %2505 = vmatprep.subr.mxu0 0.0
    %2506 = vmatpush1.xpose.msra.mxu0 0.0
    %2507 = vmatprep.subr.mxu0 0.0
    %2508 = vmatpush1.xpose.msra.mxu0 0.0
    %2509 = vmatprep.subr.mxu0 0.0
    %2510 = vmatpush1.xpose.msra.mxu0 0.0
    %2511 = vmatprep.subr.mxu0 0.0
    %2512 = vmatpush1.xpose.msra.mxu0 0.0
    %2513 = vmatprep.subr.mxu0 0.0
    %2514 = vmatpush1.xpose.msra.mxu0 0.0
    %2515 = vmatprep.subr.mxu0 0.0
    %2516 = vmatpush1.xpose.msra.mxu0 0.0
    %2517 = vmatprep.subr.mxu0 0.0
    %2518 = vmatpush1.xpose.msra.mxu0 0.0
    %2519 = vmatprep.subr.mxu0 0.0
    %2520 = vmatpush1.xpose.msra.mxu0 0.0
    %2521 = vmatprep.subr.mxu0 0.0
    %2522 = vmatpush1.xpose.msra.mxu0 0.0
    %2523 = vmatprep.subr.mxu0 0.0
    %2524 = vmatpush1.xpose.msra.mxu0 0.0
    %2525 = vmatprep.subr.mxu0 0.0
    %2526 = vmatpush1.xpose.msra.mxu0 0.0
    %2527 = vmatprep.subr.mxu0 0.0
    %2528 = vmatpush1.xpose.msra.mxu0 0.0
    %2529 = vmatprep.subr.mxu0 0.0
    %2530 = vmatpush1.xpose.msra.mxu0 0.0
    %2531 = vmatprep.subr.mxu0 0.0
    %2532 = vmatpush1.xpose.msra.mxu0 0.0
    %2533 = vmatprep.subr.mxu0 0.0
    %2534 = vmatpush1.xpose.msra.mxu0 0.0
    %2535 = vmatprep.subr.mxu0 0.0
    %2536 = vmatpush1.xpose.msra.mxu0 0.0
    %2537 = vmatprep.mubr.f32.mxu0 0.0
    %2538 = vmatmul.mubr.f32.gmra.mrb[0].mxu0 %v2468
    %v2539 = vpop.f32.mrb[0].mxu0
    %v2540 = vadd.f32 0.0, %v2539
    %v2541 = vpop.f32.mrb[0].mxu0
    %2542 = vdwg.mxu0
    %v2544 = vsel %vm2086, %v839, 0
    %v2547 = vsel %vm2086, %v1426, 0
    %2549 = vmatprep.subr.mxu0 0.0
    %2550 = vmatpush1.xpose.msra.mxu0 %v2547
    %2551 = vmatprep.subr.mxu0 0.0
    %2552 = vmatpush1.xpose.msra.mxu0 0.0
    %2553 = vmatprep.subr.mxu0 0.0
    %2554 = vmatpush1.xpose.msra.mxu0 0.0
    %2555 = vmatprep.subr.mxu0 0.0
    %2556 = vmatpush1.xpose.msra.mxu0 0.0
    %2557 = vmatprep.subr.mxu0 0.0
    %2558 = vmatpush1.xpose.msra.mxu0 0.0
    %2559 = vmatprep.subr.mxu0 0.0
    %2560 = vmatpush1.xpose.msra.mxu0 0.0
    %2561 = vmatprep.subr.mxu0 0.0
    %2562 = vmatpush1.xpose.msra.mxu0 0.0
    %2563 = vmatprep.subr.mxu0 0.0
    %2564 = vmatpush1.xpose.msra.mxu0 0.0
    %2565 = vmatprep.subr.mxu0 0.0
    %2566 = vmatpush1.xpose.msra.mxu0 0.0
    %2567 = vmatprep.subr.mxu0 0.0
    %2568 = vmatpush1.xpose.msra.mxu0 0.0
    %2569 = vmatprep.subr.mxu0 0.0
    %2570 = vmatpush1.xpose.msra.mxu0 0.0
    %2571 = vmatprep.subr.mxu0 0.0
    %2572 = vmatpush1.xpose.msra.mxu0 0.0
    %2573 = vmatprep.subr.mxu0 0.0
    %2574 = vmatpush1.xpose.msra.mxu0 0.0
    %2575 = vmatprep.subr.mxu0 0.0
    %2576 = vmatpush1.xpose.msra.mxu0 0.0
    %2577 = vmatprep.subr.mxu0 0.0
    %2578 = vmatpush1.xpose.msra.mxu0 0.0
    %2579 = vmatprep.subr.mxu0 0.0
    %2580 = vmatpush1.xpose.msra.mxu0 0.0
    %2581 = vmatprep.subr.mxu0 0.0
    %2582 = vmatpush1.xpose.msra.mxu0 0.0
    %2583 = vmatprep.subr.mxu0 0.0
    %2584 = vmatpush1.xpose.msra.mxu0 0.0
    %2585 = vmatprep.subr.mxu0 0.0
    %2586 = vmatpush1.xpose.msra.mxu0 0.0
    %2587 = vmatprep.subr.mxu0 0.0
    %2588 = vmatpush1.xpose.msra.mxu0 0.0
    %2589 = vmatprep.subr.mxu0 0.0
    %2590 = vmatpush1.xpose.msra.mxu0 0.0
    %2591 = vmatprep.subr.mxu0 0.0
    %2592 = vmatpush1.xpose.msra.mxu0 0.0
    %2593 = vmatprep.subr.mxu0 0.0
    %2594 = vmatpush1.xpose.msra.mxu0 0.0
    %2595 = vmatprep.subr.mxu0 0.0
    %2596 = vmatpush1.xpose.msra.mxu0 0.0
    %2597 = vmatprep.subr.mxu0 0.0
    %2598 = vmatpush1.xpose.msra.mxu0 0.0
    %2599 = vmatprep.subr.mxu0 0.0
    %2600 = vmatpush1.xpose.msra.mxu0 0.0
    %2601 = vmatprep.subr.mxu0 0.0
    %2602 = vmatpush1.xpose.msra.mxu0 0.0
    %2603 = vmatprep.subr.mxu0 0.0
    %2604 = vmatpush1.xpose.msra.mxu0 0.0
    %2605 = vmatprep.subr.mxu0 0.0
    %2606 = vmatpush1.xpose.msra.mxu0 0.0
    %2607 = vmatprep.subr.mxu0 0.0
    %2608 = vmatpush1.xpose.msra.mxu0 0.0
    %2609 = vmatprep.subr.mxu0 0.0
    %2610 = vmatpush1.xpose.msra.mxu0 0.0
    %2611 = vmatprep.subr.mxu0 0.0
    %2612 = vmatpush1.xpose.msra.mxu0 0.0
    %2613 = vmatprep.mubr.f32.mxu0 0.0
    %2614 = vmatmul.mubr.f32.gmra.mrb[0].mxu0 %v2544
    %v2615 = vpop.f32.mrb[0].mxu0
    %v2616 = vadd.f32 0.0, %v2615
    %v2617 = vpop.f32.mrb[0].mxu0
    %2618 = vdwg.mxu0
    %v2620 = vsel %vm2086, %v915, 0
    %v2623 = vsel %vm2086, %v1499, 0
    %2625 = vmatprep.subr.mxu0 0.0
    %2626 = vmatpush1.xpose.msra.mxu0 %v2623
    %2627 = vmatprep.subr.mxu0 0.0
    %2628 = vmatpush1.xpose.msra.mxu0 0.0
    %2629 = vmatprep.subr.mxu0 0.0
    %2630 = vmatpush1.xpose.msra.mxu0 0.0
    %2631 = vmatprep.subr.mxu0 0.0
    %2632 = vmatpush1.xpose.msra.mxu0 0.0
    %2633 = vmatprep.subr.mxu0 0.0
    %2634 = vmatpush1.xpose.msra.mxu0 0.0
    %2635 = vmatprep.subr.mxu0 0.0
    %2636 = vmatpush1.xpose.msra.mxu0 0.0
    %2637 = vmatprep.subr.mxu0 0.0
    %2638 = vmatpush1.xpose.msra.mxu0 0.0
    %2639 = vmatprep.subr.mxu0 0.0
    %2640 = vmatpush1.xpose.msra.mxu0 0.0
    %2641 = vmatprep.subr.mxu0 0.0
    %2642 = vmatpush1.xpose.msra.mxu0 0.0
    %2643 = vmatprep.subr.mxu0 0.0
    %2644 = vmatpush1.xpose.msra.mxu0 0.0
    %2645 = vmatprep.subr.mxu0 0.0
    %2646 = vmatpush1.xpose.msra.mxu0 0.0
    %2647 = vmatprep.subr.mxu0 0.0
    %2648 = vmatpush1.xpose.msra.mxu0 0.0
    %2649 = vmatprep.subr.mxu0 0.0
    %2650 = vmatpush1.xpose.msra.mxu0 0.0
    %2651 = vmatprep.subr.mxu0 0.0
    %2652 = vmatpush1.xpose.msra.mxu0 0.0
    %2653 = vmatprep.subr.mxu0 0.0
    %2654 = vmatpush1.xpose.msra.mxu0 0.0
    %2655 = vmatprep.subr.mxu0 0.0
    %2656 = vmatpush1.xpose.msra.mxu0 0.0
    %2657 = vmatprep.subr.mxu0 0.0
    %2658 = vmatpush1.xpose.msra.mxu0 0.0
    %2659 = vmatprep.subr.mxu0 0.0
    %2660 = vmatpush1.xpose.msra.mxu0 0.0
    %2661 = vmatprep.subr.mxu0 0.0
    %2662 = vmatpush1.xpose.msra.mxu0 0.0
    %2663 = vmatprep.subr.mxu0 0.0
    %2664 = vmatpush1.xpose.msra.mxu0 0.0
    %2665 = vmatprep.subr.mxu0 0.0
    %2666 = vmatpush1.xpose.msra.mxu0 0.0
    %2667 = vmatprep.subr.mxu0 0.0
    %2668 = vmatpush1.xpose.msra.mxu0 0.0
    %2669 = vmatprep.subr.mxu0 0.0
    %2670 = vmatpush1.xpose.msra.mxu0 0.0
    %2671 = vmatprep.subr.mxu0 0.0
    %2672 = vmatpush1.xpose.msra.mxu0 0.0
    %2673 = vmatprep.subr.mxu0 0.0
    %2674 = vmatpush1.xpose.msra.mxu0 0.0
    %2675 = vmatprep.subr.mxu0 0.0
    %2676 = vmatpush1.xpose.msra.mxu0 0.0
    %2677 = vmatprep.subr.mxu0 0.0
    %2678 = vmatpush1.xpose.msra.mxu0 0.0
    %2679 = vmatprep.subr.mxu0 0.0
    %2680 = vmatpush1.xpose.msra.mxu0 0.0
    %2681 = vmatprep.subr.mxu0 0.0
    %2682 = vmatpush1.xpose.msra.mxu0 0.0
    %2683 = vmatprep.subr.mxu0 0.0
    %2684 = vmatpush1.xpose.msra.mxu0 0.0
    %2685 = vmatprep.subr.mxu0 0.0
    %2686 = vmatpush1.xpose.msra.mxu0 0.0
    %2687 = vmatprep.subr.mxu0 0.0
    %2688 = vmatpush1.xpose.msra.mxu0 0.0
    %2689 = vmatprep.mubr.f32.mxu0 0.0
    %2690 = vmatmul.mubr.f32.gmra.mrb[0].mxu0 %v2620
    %v2691 = vpop.f32.mrb[0].mxu0
    %v2692 = vadd.f32 0.0, %v2691
    %v2693 = vpop.f32.mrb[0].mxu0
    %2694 = vdwg.mxu0
    %v2695 = vsel %vm2086, %v2160, -inf
    %2696 = vmax.xlane.f32.xlu0 %v2695
    %v2697 = vpop.xlane.xlu0 %2696
    %v2698 = vsel %vm2086, %v2236, -inf
    %2699 = vmax.xlane.f32.xlu0 %v2698
    %v2700 = vpop.xlane.xlu0 %2699
    %v2701 = vsel %vm2086, %v2312, -inf
    %2702 = vmax.xlane.f32.xlu0 %v2701
    %v2703 = vpop.xlane.xlu0 %2702
    %v2704 = vsel %vm2086, %v2388, -inf
    %2705 = vmax.xlane.f32.xlu0 %v2704
    %v2706 = vpop.xlane.xlu0 %2705
    %v2707 = vsel %vm2086, %v2464, -inf
    %2708 = vmax.xlane.f32.xlu0 %v2707
    %v2709 = vpop.xlane.xlu0 %2708
    %v2710 = vsel %vm2086, %v2540, -inf
    %2711 = vmax.xlane.f32.xlu0 %v2710
    %v2712 = vpop.xlane.xlu0 %2711
    %v2713 = vsel %vm2086, %v2616, -inf
    %2714 = vmax.xlane.f32.xlu0 %v2713
    %v2715 = vpop.xlane.xlu0 %2714
    %v2716 = vsel %vm2086, %v2692, -inf
    %2717 = vmax.xlane.f32.xlu0 %v2716
    %v2718 = vpop.xlane.xlu0 %2717
    %v2719 = vsub.f32 %v2160, %v2697
    %v2720 = vsub.f32 %v2236, %v2700
    %v2721 = vsub.f32 %v2312, %v2703
    %v2722 = vsub.f32 %v2388, %v2706
    %v2723 = vsub.f32 %v2464, %v2709
    %v2724 = vsub.f32 %v2540, %v2712
    %v2725 = vsub.f32 %v2616, %v2715
    %v2726 = vsub.f32 %v2692, %v2718
    %v2727 = vmul.f32 %v2719, 1.442695
    %v2728 = vpow.pop %v2727
    %v2729 = vmul.f32 %v2720, 1.442695
    %v2730 = vpow.pop %v2729
    %v2731 = vmul.f32 %v2721, 1.442695
    %v2732 = vpow.pop %v2731
    %v2733 = vmul.f32 %v2722, 1.442695
    %v2734 = vpow.pop %v2733
    %v2735 = vmul.f32 %v2723, 1.442695
    %v2736 = vpow.pop %v2735
    %v2737 = vmul.f32 %v2724, 1.442695
    %v2738 = vpow.pop %v2737
    %v2739 = vmul.f32 %v2725, 1.442695
    %v2740 = vpow.pop %v2739
    %v2741 = vmul.f32 %v2726, 1.442695
    %v2742 = vpow.pop %v2741
    %v2743 = vsel %vm2086, %v2728, 0.0
    %2744 = vadd.xlane.f32.xlu0 %v2743
    %v2745 = vpop.xlane.xlu0 %2744
    %v2746 = vsel %vm2086, %v2730, 0.0
    %2747 = vadd.xlane.f32.xlu0 %v2746
    %v2748 = vpop.xlane.xlu0 %2747
    %v2749 = vsel %vm2086, %v2732, 0.0
    %2750 = vadd.xlane.f32.xlu0 %v2749
    %v2751 = vpop.xlane.xlu0 %2750
    %v2752 = vsel %vm2086, %v2734, 0.0
    %2753 = vadd.xlane.f32.xlu0 %v2752
    %v2754 = vpop.xlane.xlu0 %2753
    %v2755 = vsel %vm2086, %v2736, 0.0
    %2756 = vadd.xlane.f32.xlu0 %v2755
    %v2757 = vpop.xlane.xlu0 %2756
    %v2758 = vsel %vm2086, %v2738, 0.0
    %2759 = vadd.xlane.f32.xlu0 %v2758
    %v2760 = vpop.xlane.xlu0 %2759
    %v2761 = vsel %vm2086, %v2740, 0.0
    %2762 = vadd.xlane.f32.xlu0 %v2761
    %v2763 = vpop.xlane.xlu0 %2762
    %v2764 = vsel %vm2086, %v2742, 0.0
    %2765 = vadd.xlane.f32.xlu0 %v2764
    %v2766 = vpop.xlane.xlu0 %2765
    %v2767 = vrcp.pop %v2745
    %v2768 = vrcp.pop %v2748
    %v2769 = vrcp.pop %v2751
    %v2770 = vrcp.pop %v2754
    %v2771 = vrcp.pop %v2757
    %v2772 = vrcp.pop %v2760
    %v2773 = vrcp.pop %v2763
    %v2774 = vrcp.pop %v2766
    %v2775 = vmul.f32 %v2728, %v2767
    %v2776 = vmul.f32 %v2730, %v2768
    %v2777 = vmul.f32 %v2732, %v2769
    %v2778 = vmul.f32 %v2734, %v2770
    %v2779 = vmul.f32 %v2736, %v2771
    %v2780 = vmul.f32 %v2738, %v2772
    %v2781 = vmul.f32 %v2740, %v2773
    %v2782 = vmul.f32 %v2742, %v2774
    %2783 = vst.msk [vmem:[#allocation14] sm:$0xff] %vm2086, %v2775
    %2784 = vst.msk [vmem:[#allocation14 + $0x8] sm:$0xff] %vm2086, %v2776
    %2785 = vst.msk [vmem:[#allocation14 + $0x10] sm:$0xff] %vm2086, %v2777
    %2786 = vst.msk [vmem:[#allocation14 + $0x18] sm:$0xff] %vm2086, %v2778
    %2787 = vst.msk [vmem:[#allocation14 + $0x20] sm:$0xff] %vm2086, %v2779
    %2788 = vst.msk [vmem:[#allocation14 + $0x28] sm:$0xff] %vm2086, %v2780
    %2789 = vst.msk [vmem:[#allocation14 + $0x30] sm:$0xff] %vm2086, %v2781
    %2790 = vst.msk [vmem:[#allocation14 + $0x38] sm:$0xff] %vm2086, %v2782
    %v2792 = vsel %vm2086, %v2775, 0
    %2794 = vmatprep.subr.mxu0 0.0
    %2795 = vmatpush1.msra.mxu0 %v1572
    %2796 = vmatprep.subr.mxu0 0.0
    %2797 = vmatpush1.msra.mxu0 0.0
    %2798 = vmatprep.subr.mxu0 0.0
    %2799 = vmatpush1.msra.mxu0 0.0
    %2800 = vmatprep.subr.mxu0 0.0
    %2801 = vmatpush1.msra.mxu0 0.0
    %2802 = vmatprep.subr.mxu0 0.0
    %2803 = vmatpush1.msra.mxu0 0.0
    %2804 = vmatprep.subr.mxu0 0.0
    %2805 = vmatpush1.msra.mxu0 0.0
    %2806 = vmatprep.subr.mxu0 0.0
    %2807 = vmatpush1.msra.mxu0 0.0
    %2808 = vmatprep.subr.mxu0 0.0
    %2809 = vmatpush1.msra.mxu0 0.0
    %2810 = vmatprep.subr.mxu0 0.0
    %2811 = vmatpush1.msra.mxu0 0.0
    %2812 = vmatprep.subr.mxu0 0.0
    %2813 = vmatpush1.msra.mxu0 0.0
    %2814 = vmatprep.subr.mxu0 0.0
    %2815 = vmatpush1.msra.mxu0 0.0
    %2816 = vmatprep.subr.mxu0 0.0
    %2817 = vmatpush1.msra.mxu0 0.0
    %2818 = vmatprep.subr.mxu0 0.0
    %2819 = vmatpush1.msra.mxu0 0.0
    %2820 = vmatprep.subr.mxu0 0.0
    %2821 = vmatpush1.msra.mxu0 0.0
    %2822 = vmatprep.subr.mxu0 0.0
    %2823 = vmatpush1.msra.mxu0 0.0
    %2824 = vmatprep.subr.mxu0 0.0
    %2825 = vmatpush1.msra.mxu0 0.0
    %2826 = vmatprep.subr.mxu0 0.0
    %2827 = vmatpush1.msra.mxu0 0.0
    %2828 = vmatprep.subr.mxu0 0.0
    %2829 = vmatpush1.msra.mxu0 0.0
    %2830 = vmatprep.subr.mxu0 0.0
    %2831 = vmatpush1.msra.mxu0 0.0
    %2832 = vmatprep.subr.mxu0 0.0
    %2833 = vmatpush1.msra.mxu0 0.0
    %2834 = vmatprep.subr.mxu0 0.0
    %2835 = vmatpush1.msra.mxu0 0.0
    %2836 = vmatprep.subr.mxu0 0.0
    %2837 = vmatpush1.msra.mxu0 0.0
    %2838 = vmatprep.subr.mxu0 0.0
    %2839 = vmatpush1.msra.mxu0 0.0
    %2840 = vmatprep.subr.mxu0 0.0
    %2841 = vmatpush1.msra.mxu0 0.0
    %2842 = vmatprep.subr.mxu0 0.0
    %2843 = vmatpush1.msra.mxu0 0.0
    %2844 = vmatprep.subr.mxu0 0.0
    %2845 = vmatpush1.msra.mxu0 0.0
    %2846 = vmatprep.subr.mxu0 0.0
    %2847 = vmatpush1.msra.mxu0 0.0
    %2848 = vmatprep.subr.mxu0 0.0
    %2849 = vmatpush1.msra.mxu0 0.0
    %2850 = vmatprep.subr.mxu0 0.0
    %2851 = vmatpush1.msra.mxu0 0.0
    %2852 = vmatprep.subr.mxu0 0.0
    %2853 = vmatpush1.msra.mxu0 0.0
    %2854 = vmatprep.subr.mxu0 0.0
    %2855 = vmatpush1.msra.mxu0 0.0
    %2856 = vmatprep.subr.mxu0 0.0
    %2857 = vmatpush1.msra.mxu0 0.0
    %2858 = vmatprep.mubr.f32.mxu0 0.0
    %2859 = vmatmul.mubr.f32.gmra.mrb[0].mxu0 %v2792
    %v2860 = vpop.f32.mrb[0].mxu0
    %v2861 = vadd.f32 0.0, %v2860
    %v2862 = vpop.f32.mrb[0].mxu0
    %2863 = vdwg.mxu0
    %v2865 = vsel %vm2086, %v2776, 0
    %2867 = vmatprep.subr.mxu0 0.0
    %2868 = vmatpush1.msra.mxu0 %v1645
    %2869 = vmatprep.subr.mxu0 0.0
    %2870 = vmatpush1.msra.mxu0 0.0
    %2871 = vmatprep.subr.mxu0 0.0
    %2872 = vmatpush1.msra.mxu0 0.0
    %2873 = vmatprep.subr.mxu0 0.0
    %2874 = vmatpush1.msra.mxu0 0.0
    %2875 = vmatprep.subr.mxu0 0.0
    %2876 = vmatpush1.msra.mxu0 0.0
    %2877 = vmatprep.subr.mxu0 0.0
    %2878 = vmatpush1.msra.mxu0 0.0
    %2879 = vmatprep.subr.mxu0 0.0
    %2880 = vmatpush1.msra.mxu0 0.0
    %2881 = vmatprep.subr.mxu0 0.0
    %2882 = vmatpush1.msra.mxu0 0.0
    %2883 = vmatprep.subr.mxu0 0.0
    %2884 = vmatpush1.msra.mxu0 0.0
    %2885 = vmatprep.subr.mxu0 0.0
    %2886 = vmatpush1.msra.mxu0 0.0
    %2887 = vmatprep.subr.mxu0 0.0
    %2888 = vmatpush1.msra.mxu0 0.0
    %2889 = vmatprep.subr.mxu0 0.0
    %2890 = vmatpush1.msra.mxu0 0.0
    %2891 = vmatprep.subr.mxu0 0.0
    %2892 = vmatpush1.msra.mxu0 0.0
    %2893 = vmatprep.subr.mxu0 0.0
    %2894 = vmatpush1.msra.mxu0 0.0
    %2895 = vmatprep.subr.mxu0 0.0
    %2896 = vmatpush1.msra.mxu0 0.0
    %2897 = vmatprep.subr.mxu0 0.0
    %2898 = vmatpush1.msra.mxu0 0.0
    %2899 = vmatprep.subr.mxu0 0.0
    %2900 = vmatpush1.msra.mxu0 0.0
    %2901 = vmatprep.subr.mxu0 0.0
    %2902 = vmatpush1.msra.mxu0 0.0
    %2903 = vmatprep.subr.mxu0 0.0
    %2904 = vmatpush1.msra.mxu0 0.0
    %2905 = vmatprep.subr.mxu0 0.0
    %2906 = vmatpush1.msra.mxu0 0.0
    %2907 = vmatprep.subr.mxu0 0.0
    %2908 = vmatpush1.msra.mxu0 0.0
    %2909 = vmatprep.subr.mxu0 0.0
    %2910 = vmatpush1.msra.mxu0 0.0
    %2911 = vmatprep.subr.mxu0 0.0
    %2912 = vmatpush1.msra.mxu0 0.0
    %2913 = vmatprep.subr.mxu0 0.0
    %2914 = vmatpush1.msra.mxu0 0.0
    %2915 = vmatprep.subr.mxu0 0.0
    %2916 = vmatpush1.msra.mxu0 0.0
    %2917 = vmatprep.subr.mxu0 0.0
    %2918 = vmatpush1.msra.mxu0 0.0
    %2919 = vmatprep.subr.mxu0 0.0
    %2920 = vmatpush1.msra.mxu0 0.0
    %2921 = vmatprep.subr.mxu0 0.0
    %2922 = vmatpush1.msra.mxu0 0.0
    %2923 = vmatprep.subr.mxu0 0.0
    %2924 = vmatpush1.msra.mxu0 0.0
    %2925 = vmatprep.subr.mxu0 0.0
    %2926 = vmatpush1.msra.mxu0 0.0
    %2927 = vmatprep.subr.mxu0 0.0
    %2928 = vmatpush1.msra.mxu0 0.0
    %2929 = vmatprep.subr.mxu0 0.0
    %2930 = vmatpush1.msra.mxu0 0.0
    %2931 = vmatprep.mubr.f32.mxu0 0.0
    %2932 = vmatmul.mubr.f32.gmra.mrb[0].mxu0 %v2865
    %v2933 = vpop.f32.mrb[0].mxu0
    %v2934 = vadd.f32 0.0, %v2933
    %v2935 = vpop.f32.mrb[0].mxu0
    %2936 = vdwg.mxu0
    %v2938 = vsel %vm2086, %v2777, 0
    %2940 = vmatprep.subr.mxu0 0.0
    %2941 = vmatpush1.msra.mxu0 %v1718
    %2942 = vmatprep.subr.mxu0 0.0
    %2943 = vmatpush1.msra.mxu0 0.0
    %2944 = vmatprep.subr.mxu0 0.0
    %2945 = vmatpush1.msra.mxu0 0.0
    %2946 = vmatprep.subr.mxu0 0.0
    %2947 = vmatpush1.msra.mxu0 0.0
    %2948 = vmatprep.subr.mxu0 0.0
    %2949 = vmatpush1.msra.mxu0 0.0
    %2950 = vmatprep.subr.mxu0 0.0
    %2951 = vmatpush1.msra.mxu0 0.0
    %2952 = vmatprep.subr.mxu0 0.0
    %2953 = vmatpush1.msra.mxu0 0.0
    %2954 = vmatprep.subr.mxu0 0.0
    %2955 = vmatpush1.msra.mxu0 0.0
    %2956 = vmatprep.subr.mxu0 0.0
    %2957 = vmatpush1.msra.mxu0 0.0
    %2958 = vmatprep.subr.mxu0 0.0
    %2959 = vmatpush1.msra.mxu0 0.0
    %2960 = vmatprep.subr.mxu0 0.0
    %2961 = vmatpush1.msra.mxu0 0.0
    %2962 = vmatprep.subr.mxu0 0.0
    %2963 = vmatpush1.msra.mxu0 0.0
    %2964 = vmatprep.subr.mxu0 0.0
    %2965 = vmatpush1.msra.mxu0 0.0
    %2966 = vmatprep.subr.mxu0 0.0
    %2967 = vmatpush1.msra.mxu0 0.0
    %2968 = vmatprep.subr.mxu0 0.0
    %2969 = vmatpush1.msra.mxu0 0.0
    %2970 = vmatprep.subr.mxu0 0.0
    %2971 = vmatpush1.msra.mxu0 0.0
    %2972 = vmatprep.subr.mxu0 0.0
    %2973 = vmatpush1.msra.mxu0 0.0
    %2974 = vmatprep.subr.mxu0 0.0
    %2975 = vmatpush1.msra.mxu0 0.0
    %2976 = vmatprep.subr.mxu0 0.0
    %2977 = vmatpush1.msra.mxu0 0.0
    %2978 = vmatprep.subr.mxu0 0.0
    %2979 = vmatpush1.msra.mxu0 0.0
    %2980 = vmatprep.subr.mxu0 0.0
    %2981 = vmatpush1.msra.mxu0 0.0
    %2982 = vmatprep.subr.mxu0 0.0
    %2983 = vmatpush1.msra.mxu0 0.0
    %2984 = vmatprep.subr.mxu0 0.0
    %2985 = vmatpush1.msra.mxu0 0.0
    %2986 = vmatprep.subr.mxu0 0.0
    %2987 = vmatpush1.msra.mxu0 0.0
    %2988 = vmatprep.subr.mxu0 0.0
    %2989 = vmatpush1.msra.mxu0 0.0
    %2990 = vmatprep.subr.mxu0 0.0
    %2991 = vmatpush1.msra.mxu0 0.0
    %2992 = vmatprep.subr.mxu0 0.0
    %2993 = vmatpush1.msra.mxu0 0.0
    %2994 = vmatprep.subr.mxu0 0.0
    %2995 = vmatpush1.msra.mxu0 0.0
    %2996 = vmatprep.subr.mxu0 0.0
    %2997 = vmatpush1.msra.mxu0 0.0
    %2998 = vmatprep.subr.mxu0 0.0
    %2999 = vmatpush1.msra.mxu0 0.0
    %3000 = vmatprep.subr.mxu0 0.0
    %3001 = vmatpush1.msra.mxu0 0.0
    %3002 = vmatprep.subr.mxu0 0.0
    %3003 = vmatpush1.msra.mxu0 0.0
    %3004 = vmatprep.mubr.f32.mxu0 0.0
    %3005 = vmatmul.mubr.f32.gmra.mrb[0].mxu0 %v2938
    %v3006 = vpop.f32.mrb[0].mxu0
    %v3007 = vadd.f32 0.0, %v3006
    %v3008 = vpop.f32.mrb[0].mxu0
    %3009 = vdwg.mxu0
    %v3011 = vsel %vm2086, %v2778, 0
    %3013 = vmatprep.subr.mxu0 0.0
    %3014 = vmatpush1.msra.mxu0 %v1791
    %3015 = vmatprep.subr.mxu0 0.0
    %3016 = vmatpush1.msra.mxu0 0.0
    %3017 = vmatprep.subr.mxu0 0.0
    %3018 = vmatpush1.msra.mxu0 0.0
    %3019 = vmatprep.subr.mxu0 0.0
    %3020 = vmatpush1.msra.mxu0 0.0
    %3021 = vmatprep.subr.mxu0 0.0
    %3022 = vmatpush1.msra.mxu0 0.0
    %3023 = vmatprep.subr.mxu0 0.0
    %3024 = vmatpush1.msra.mxu0 0.0
    %3025 = vmatprep.subr.mxu0 0.0
    %3026 = vmatpush1.msra.mxu0 0.0
    %3027 = vmatprep.subr.mxu0 0.0
    %3028 = vmatpush1.msra.mxu0 0.0
    %3029 = vmatprep.subr.mxu0 0.0
    %3030 = vmatpush1.msra.mxu0 0.0
    %3031 = vmatprep.subr.mxu0 0.0
    %3032 = vmatpush1.msra.mxu0 0.0
    %3033 = vmatprep.subr.mxu0 0.0
    %3034 = vmatpush1.msra.mxu0 0.0
    %3035 = vmatprep.subr.mxu0 0.0
    %3036 = vmatpush1.msra.mxu0 0.0
    %3037 = vmatprep.subr.mxu0 0.0
    %3038 = vmatpush1.msra.mxu0 0.0
    %3039 = vmatprep.subr.mxu0 0.0
    %3040 = vmatpush1.msra.mxu0 0.0
    %3041 = vmatprep.subr.mxu0 0.0
    %3042 = vmatpush1.msra.mxu0 0.0
    %3043 = vmatprep.subr.mxu0 0.0
    %3044 = vmatpush1.msra.mxu0 0.0
    %3045 = vmatprep.subr.mxu0 0.0
    %3046 = vmatpush1.msra.mxu0 0.0
    %3047 = vmatprep.subr.mxu0 0.0
    %3048 = vmatpush1.msra.mxu0 0.0
    %3049 = vmatprep.subr.mxu0 0.0
    %3050 = vmatpush1.msra.mxu0 0.0
    %3051 = vmatprep.subr.mxu0 0.0
    %3052 = vmatpush1.msra.mxu0 0.0
    %3053 = vmatprep.subr.mxu0 0.0
    %3054 = vmatpush1.msra.mxu0 0.0
    %3055 = vmatprep.subr.mxu0 0.0
    %3056 = vmatpush1.msra.mxu0 0.0
    %3057 = vmatprep.subr.mxu0 0.0
    %3058 = vmatpush1.msra.mxu0 0.0
    %3059 = vmatprep.subr.mxu0 0.0
    %3060 = vmatpush1.msra.mxu0 0.0
    %3061 = vmatprep.subr.mxu0 0.0
    %3062 = vmatpush1.msra.mxu0 0.0
    %3063 = vmatprep.subr.mxu0 0.0
    %3064 = vmatpush1.msra.mxu0 0.0
    %3065 = vmatprep.subr.mxu0 0.0
    %3066 = vmatpush1.msra.mxu0 0.0
    %3067 = vmatprep.subr.mxu0 0.0
    %3068 = vmatpush1.msra.mxu0 0.0
    %3069 = vmatprep.subr.mxu0 0.0
    %3070 = vmatpush1.msra.mxu0 0.0
    %3071 = vmatprep.subr.mxu0 0.0
    %3072 = vmatpush1.msra.mxu0 0.0
    %3073 = vmatprep.subr.mxu0 0.0
    %3074 = vmatpush1.msra.mxu0 0.0
    %3075 = vmatprep.subr.mxu0 0.0
    %3076 = vmatpush1.msra.mxu0 0.0
    %3077 = vmatprep.mubr.f32.mxu0 0.0
    %3078 = vmatmul.mubr.f32.gmra.mrb[0].mxu0 %v3011
    %v3079 = vpop.f32.mrb[0].mxu0
    %v3080 = vadd.f32 0.0, %v3079
    %v3081 = vpop.f32.mrb[0].mxu0
    %3082 = vdwg.mxu0
    %v3084 = vsel %vm2086, %v2779, 0
    %3086 = vmatprep.subr.mxu0 0.0
    %3087 = vmatpush1.msra.mxu0 %v1864
    %3088 = vmatprep.subr.mxu0 0.0
    %3089 = vmatpush1.msra.mxu0 0.0
    %3090 = vmatprep.subr.mxu0 0.0
    %3091 = vmatpush1.msra.mxu0 0.0
    %3092 = vmatprep.subr.mxu0 0.0
    %3093 = vmatpush1.msra.mxu0 0.0
    %3094 = vmatprep.subr.mxu0 0.0
    %3095 = vmatpush1.msra.mxu0 0.0
    %3096 = vmatprep.subr.mxu0 0.0
    %3097 = vmatpush1.msra.mxu0 0.0
    %3098 = vmatprep.subr.mxu0 0.0
    %3099 = vmatpush1.msra.mxu0 0.0
    %3100 = vmatprep.subr.mxu0 0.0
    %3101 = vmatpush1.msra.mxu0 0.0
    %3102 = vmatprep.subr.mxu0 0.0
    %3103 = vmatpush1.msra.mxu0 0.0
    %3104 = vmatprep.subr.mxu0 0.0
    %3105 = vmatpush1.msra.mxu0 0.0
    %3106 = vmatprep.subr.mxu0 0.0
    %3107 = vmatpush1.msra.mxu0 0.0
    %3108 = vmatprep.subr.mxu0 0.0
    %3109 = vmatpush1.msra.mxu0 0.0
    %3110 = vmatprep.subr.mxu0 0.0
    %3111 = vmatpush1.msra.mxu0 0.0
    %3112 = vmatprep.subr.mxu0 0.0
    %3113 = vmatpush1.msra.mxu0 0.0
    %3114 = vmatprep.subr.mxu0 0.0
    %3115 = vmatpush1.msra.mxu0 0.0
    %3116 = vmatprep.subr.mxu0 0.0
    %3117 = vmatpush1.msra.mxu0 0.0
    %3118 = vmatprep.subr.mxu0 0.0
    %3119 = vmatpush1.msra.mxu0 0.0
    %3120 = vmatprep.subr.mxu0 0.0
    %3121 = vmatpush1.msra.mxu0 0.0
    %3122 = vmatprep.subr.mxu0 0.0
    %3123 = vmatpush1.msra.mxu0 0.0
    %3124 = vmatprep.subr.mxu0 0.0
    %3125 = vmatpush1.msra.mxu0 0.0
    %3126 = vmatprep.subr.mxu0 0.0
    %3127 = vmatpush1.msra.mxu0 0.0
    %3128 = vmatprep.subr.mxu0 0.0
    %3129 = vmatpush1.msra.mxu0 0.0
    %3130 = vmatprep.subr.mxu0 0.0
    %3131 = vmatpush1.msra.mxu0 0.0
    %3132 = vmatprep.subr.mxu0 0.0
    %3133 = vmatpush1.msra.mxu0 0.0
    %3134 = vmatprep.subr.mxu0 0.0
    %3135 = vmatpush1.msra.mxu0 0.0
    %3136 = vmatprep.subr.mxu0 0.0
    %3137 = vmatpush1.msra.mxu0 0.0
    %3138 = vmatprep.subr.mxu0 0.0
    %3139 = vmatpush1.msra.mxu0 0.0
    %3140 = vmatprep.subr.mxu0 0.0
    %3141 = vmatpush1.msra.mxu0 0.0
    %3142 = vmatprep.subr.mxu0 0.0
    %3143 = vmatpush1.msra.mxu0 0.0
    %3144 = vmatprep.subr.mxu0 0.0
    %3145 = vmatpush1.msra.mxu0 0.0
    %3146 = vmatprep.subr.mxu0 0.0
    %3147 = vmatpush1.msra.mxu0 0.0
    %3148 = vmatprep.subr.mxu0 0.0
    %3149 = vmatpush1.msra.mxu0 0.0
    %3150 = vmatprep.mubr.f32.mxu0 0.0
    %3151 = vmatmul.mubr.f32.gmra.mrb[0].mxu0 %v3084
    %v3152 = vpop.f32.mrb[0].mxu0
    %v3153 = vadd.f32 0.0, %v3152
    %v3154 = vpop.f32.mrb[0].mxu0
    %3155 = vdwg.mxu0
    %v3157 = vsel %vm2086, %v2780, 0
    %3159 = vmatprep.subr.mxu0 0.0
    %3160 = vmatpush1.msra.mxu0 %v1937
    %3161 = vmatprep.subr.mxu0 0.0
    %3162 = vmatpush1.msra.mxu0 0.0
    %3163 = vmatprep.subr.mxu0 0.0
    %3164 = vmatpush1.msra.mxu0 0.0
    %3165 = vmatprep.subr.mxu0 0.0
    %3166 = vmatpush1.msra.mxu0 0.0
    %3167 = vmatprep.subr.mxu0 0.0
    %3168 = vmatpush1.msra.mxu0 0.0
    %3169 = vmatprep.subr.mxu0 0.0
    %3170 = vmatpush1.msra.mxu0 0.0
    %3171 = vmatprep.subr.mxu0 0.0
    %3172 = vmatpush1.msra.mxu0 0.0
    %3173 = vmatprep.subr.mxu0 0.0
    %3174 = vmatpush1.msra.mxu0 0.0
    %3175 = vmatprep.subr.mxu0 0.0
    %3176 = vmatpush1.msra.mxu0 0.0
    %3177 = vmatprep.subr.mxu0 0.0
    %3178 = vmatpush1.msra.mxu0 0.0
    %3179 = vmatprep.subr.mxu0 0.0
    %3180 = vmatpush1.msra.mxu0 0.0
    %3181 = vmatprep.subr.mxu0 0.0
    %3182 = vmatpush1.msra.mxu0 0.0
    %3183 = vmatprep.subr.mxu0 0.0
    %3184 = vmatpush1.msra.mxu0 0.0
    %3185 = vmatprep.subr.mxu0 0.0
    %3186 = vmatpush1.msra.mxu0 0.0
    %3187 = vmatprep.subr.mxu0 0.0
    %3188 = vmatpush1.msra.mxu0 0.0
    %3189 = vmatprep.subr.mxu0 0.0
    %3190 = vmatpush1.msra.mxu0 0.0
    %3191 = vmatprep.subr.mxu0 0.0
    %3192 = vmatpush1.msra.mxu0 0.0
    %3193 = vmatprep.subr.mxu0 0.0
    %3194 = vmatpush1.msra.mxu0 0.0
    %3195 = vmatprep.subr.mxu0 0.0
    %3196 = vmatpush1.msra.mxu0 0.0
    %3197 = vmatprep.subr.mxu0 0.0
    %3198 = vmatpush1.msra.mxu0 0.0
    %3199 = vmatprep.subr.mxu0 0.0
    %3200 = vmatpush1.msra.mxu0 0.0
    %3201 = vmatprep.subr.mxu0 0.0
    %3202 = vmatpush1.msra.mxu0 0.0
    %3203 = vmatprep.subr.mxu0 0.0
    %3204 = vmatpush1.msra.mxu0 0.0
    %3205 = vmatprep.subr.mxu0 0.0
    %3206 = vmatpush1.msra.mxu0 0.0
    %3207 = vmatprep.subr.mxu0 0.0
    %3208 = vmatpush1.msra.mxu0 0.0
    %3209 = vmatprep.subr.mxu0 0.0
    %3210 = vmatpush1.msra.mxu0 0.0
    %3211 = vmatprep.subr.mxu0 0.0
    %3212 = vmatpush1.msra.mxu0 0.0
    %3213 = vmatprep.subr.mxu0 0.0
    %3214 = vmatpush1.msra.mxu0 0.0
    %3215 = vmatprep.subr.mxu0 0.0
    %3216 = vmatpush1.msra.mxu0 0.0
    %3217 = vmatprep.subr.mxu0 0.0
    %3218 = vmatpush1.msra.mxu0 0.0
    %3219 = vmatprep.subr.mxu0 0.0
    %3220 = vmatpush1.msra.mxu0 0.0
    %3221 = vmatprep.subr.mxu0 0.0
    %3222 = vmatpush1.msra.mxu0 0.0
    %3223 = vmatprep.mubr.f32.mxu0 0.0
    %3224 = vmatmul.mubr.f32.gmra.mrb[0].mxu0 %v3157
    %v3225 = vpop.f32.mrb[0].mxu0
    %v3226 = vadd.f32 0.0, %v3225
    %v3227 = vpop.f32.mrb[0].mxu0
    %3228 = vdwg.mxu0
    %v3230 = vsel %vm2086, %v2781, 0
    %3232 = vmatprep.subr.mxu0 0.0
    %3233 = vmatpush1.msra.mxu0 %v2010
    %3234 = vmatprep.subr.mxu0 0.0
    %3235 = vmatpush1.msra.mxu0 0.0
    %3236 = vmatprep.subr.mxu0 0.0
    %3237 = vmatpush1.msra.mxu0 0.0
    %3238 = vmatprep.subr.mxu0 0.0
    %3239 = vmatpush1.msra.mxu0 0.0
    %3240 = vmatprep.subr.mxu0 0.0
    %3241 = vmatpush1.msra.mxu0 0.0
    %3242 = vmatprep.subr.mxu0 0.0
    %3243 = vmatpush1.msra.mxu0 0.0
    %3244 = vmatprep.subr.mxu0 0.0
    %3245 = vmatpush1.msra.mxu0 0.0
    %3246 = vmatprep.subr.mxu0 0.0
    %3247 = vmatpush1.msra.mxu0 0.0
    %3248 = vmatprep.subr.mxu0 0.0
    %3249 = vmatpush1.msra.mxu0 0.0
    %3250 = vmatprep.subr.mxu0 0.0
    %3251 = vmatpush1.msra.mxu0 0.0
    %3252 = vmatprep.subr.mxu0 0.0
    %3253 = vmatpush1.msra.mxu0 0.0
    %3254 = vmatprep.subr.mxu0 0.0
    %3255 = vmatpush1.msra.mxu0 0.0
    %3256 = vmatprep.subr.mxu0 0.0
    %3257 = vmatpush1.msra.mxu0 0.0
    %3258 = vmatprep.subr.mxu0 0.0
    %3259 = vmatpush1.msra.mxu0 0.0
    %3260 = vmatprep.subr.mxu0 0.0
    %3261 = vmatpush1.msra.mxu0 0.0
    %3262 = vmatprep.subr.mxu0 0.0
    %3263 = vmatpush1.msra.mxu0 0.0
    %3264 = vmatprep.subr.mxu0 0.0
    %3265 = vmatpush1.msra.mxu0 0.0
    %3266 = vmatprep.subr.mxu0 0.0
    %3267 = vmatpush1.msra.mxu0 0.0
    %3268 = vmatprep.subr.mxu0 0.0
    %3269 = vmatpush1.msra.mxu0 0.0
    %3270 = vmatprep.subr.mxu0 0.0
    %3271 = vmatpush1.msra.mxu0 0.0
    %3272 = vmatprep.subr.mxu0 0.0
    %3273 = vmatpush1.msra.mxu0 0.0
    %3274 = vmatprep.subr.mxu0 0.0
    %3275 = vmatpush1.msra.mxu0 0.0
    %3276 = vmatprep.subr.mxu0 0.0
    %3277 = vmatpush1.msra.mxu0 0.0
    %3278 = vmatprep.subr.mxu0 0.0
    %3279 = vmatpush1.msra.mxu0 0.0
    %3280 = vmatprep.subr.mxu0 0.0
    %3281 = vmatpush1.msra.mxu0 0.0
    %3282 = vmatprep.subr.mxu0 0.0
    %3283 = vmatpush1.msra.mxu0 0.0
    %3284 = vmatprep.subr.mxu0 0.0
    %3285 = vmatpush1.msra.mxu0 0.0
    %3286 = vmatprep.subr.mxu0 0.0
    %3287 = vmatpush1.msra.mxu0 0.0
    %3288 = vmatprep.subr.mxu0 0.0
    %3289 = vmatpush1.msra.mxu0 0.0
    %3290 = vmatprep.subr.mxu0 0.0
    %3291 = vmatpush1.msra.mxu0 0.0
    %3292 = vmatprep.subr.mxu0 0.0
    %3293 = vmatpush1.msra.mxu0 0.0
    %3294 = vmatprep.subr.mxu0 0.0
    %3295 = vmatpush1.msra.mxu0 0.0
    %3296 = vmatprep.mubr.f32.mxu0 0.0
    %3297 = vmatmul.mubr.f32.gmra.mrb[0].mxu0 %v3230
    %v3298 = vpop.f32.mrb[0].mxu0
    %v3299 = vadd.f32 0.0, %v3298
    %v3300 = vpop.f32.mrb[0].mxu0
    %3301 = vdwg.mxu0
    %v3303 = vsel %vm2086, %v2782, 0
    %3305 = vmatprep.subr.mxu0 0.0
    %3306 = vmatpush1.msra.mxu0 %v2083
    %3307 = vmatprep.subr.mxu0 0.0
    %3308 = vmatpush1.msra.mxu0 0.0
    %3309 = vmatprep.subr.mxu0 0.0
    %3310 = vmatpush1.msra.mxu0 0.0
    %3311 = vmatprep.subr.mxu0 0.0
    %3312 = vmatpush1.msra.mxu0 0.0
    %3313 = vmatprep.subr.mxu0 0.0
    %3314 = vmatpush1.msra.mxu0 0.0
    %3315 = vmatprep.subr.mxu0 0.0
    %3316 = vmatpush1.msra.mxu0 0.0
    %3317 = vmatprep.subr.mxu0 0.0
    %3318 = vmatpush1.msra.mxu0 0.0
    %3319 = vmatprep.subr.mxu0 0.0
    %3320 = vmatpush1.msra.mxu0 0.0
    %3321 = vmatprep.subr.mxu0 0.0
    %3322 = vmatpush1.msra.mxu0 0.0
    %3323 = vmatprep.subr.mxu0 0.0
    %3324 = vmatpush1.msra.mxu0 0.0
    %3325 = vmatprep.subr.mxu0 0.0
    %3326 = vmatpush1.msra.mxu0 0.0
    %3327 = vmatprep.subr.mxu0 0.0
    %3328 = vmatpush1.msra.mxu0 0.0
    %3329 = vmatprep.subr.mxu0 0.0
    %3330 = vmatpush1.msra.mxu0 0.0
    %3331 = vmatprep.subr.mxu0 0.0
    %3332 = vmatpush1.msra.mxu0 0.0
    %3333 = vmatprep.subr.mxu0 0.0
    %3334 = vmatpush1.msra.mxu0 0.0
    %3335 = vmatprep.subr.mxu0 0.0
    %3336 = vmatpush1.msra.mxu0 0.0
    %3337 = vmatprep.subr.mxu0 0.0
    %3338 = vmatpush1.msra.mxu0 0.0
    %3339 = vmatprep.subr.mxu0 0.0
    %3340 = vmatpush1.msra.mxu0 0.0
    %3341 = vmatprep.subr.mxu0 0.0
    %3342 = vmatpush1.msra.mxu0 0.0
    %3343 = vmatprep.subr.mxu0 0.0
    %3344 = vmatpush1.msra.mxu0 0.0
    %3345 = vmatprep.subr.mxu0 0.0
    %3346 = vmatpush1.msra.mxu0 0.0
    %3347 = vmatprep.subr.mxu0 0.0
    %3348 = vmatpush1.msra.mxu0 0.0
    %3349 = vmatprep.subr.mxu0 0.0
    %3350 = vmatpush1.msra.mxu0 0.0
    %3351 = vmatprep.subr.mxu0 0.0
    %3352 = vmatpush1.msra.mxu0 0.0
    %3353 = vmatprep.subr.mxu0 0.0
    %3354 = vmatpush1.msra.mxu0 0.0
    %3355 = vmatprep.subr.mxu0 0.0
    %3356 = vmatpush1.msra.mxu0 0.0
    %3357 = vmatprep.subr.mxu0 0.0
    %3358 = vmatpush1.msra.mxu0 0.0
    %3359 = vmatprep.subr.mxu0 0.0
    %3360 = vmatpush1.msra.mxu0 0.0
    %3361 = vmatprep.subr.mxu0 0.0
    %3362 = vmatpush1.msra.mxu0 0.0
    %3363 = vmatprep.subr.mxu0 0.0
    %3364 = vmatpush1.msra.mxu0 0.0
    %3365 = vmatprep.subr.mxu0 0.0
    %3366 = vmatpush1.msra.mxu0 0.0
    %3367 = vmatprep.subr.mxu0 0.0
    %3368 = vmatpush1.msra.mxu0 0.0
    %3369 = vmatprep.mubr.f32.mxu0 0.0
    %3370 = vmatmul.mubr.f32.gmra.mrb[0].mxu0 %v3303
    %v3371 = vpop.f32.mrb[0].mxu0
    %v3372 = vadd.f32 0.0, %v3371
    %v3373 = vpop.f32.mrb[0].mxu0
    %3374 = vdwg.mxu0
    %v3375 = vld [vmem:[#allocation8] sm:$0xff]
    %v3376 = vld [vmem:[#allocation8 + $0x8] sm:$0xff]
    %v3377 = vld [vmem:[#allocation8 + $0x10] sm:$0xff]
    %v3378 = vld [vmem:[#allocation8 + $0x18] sm:$0xff]
    %v3379 = vld [vmem:[#allocation8 + $0x20] sm:$0xff]
    %v3380 = vld [vmem:[#allocation8 + $0x28] sm:$0xff]
    %v3381 = vld [vmem:[#allocation8 + $0x30] sm:$0xff]
    %v3382 = vld [vmem:[#allocation8 + $0x38] sm:$0xff]
    %v3384 = vsel %vm2086, %v2861, 0
    %3386 = vmatprep.subr.mxu0 0.0
    %3387 = vmatpush1.msra.mxu0 %v3375
    %3388 = vmatprep.subr.mxu0 0.0
    %3389 = vmatpush1.msra.mxu0 0.0
    %3390 = vmatprep.subr.mxu0 0.0
    %3391 = vmatpush1.msra.mxu0 0.0
    %3392 = vmatprep.subr.mxu0 0.0
    %3393 = vmatpush1.msra.mxu0 0.0
    %3394 = vmatprep.subr.mxu0 0.0
    %3395 = vmatpush1.msra.mxu0 0.0
    %3396 = vmatprep.subr.mxu0 0.0
    %3397 = vmatpush1.msra.mxu0 0.0
    %3398 = vmatprep.subr.mxu0 0.0
    %3399 = vmatpush1.msra.mxu0 0.0
    %3400 = vmatprep.subr.mxu0 0.0
    %3401 = vmatpush1.msra.mxu0 0.0
    %3402 = vmatprep.subr.mxu0 0.0
    %3403 = vmatpush1.msra.mxu0 0.0
    %3404 = vmatprep.subr.mxu0 0.0
    %3405 = vmatpush1.msra.mxu0 0.0
    %3406 = vmatprep.subr.mxu0 0.0
    %3407 = vmatpush1.msra.mxu0 0.0
    %3408 = vmatprep.subr.mxu0 0.0
    %3409 = vmatpush1.msra.mxu0 0.0
    %3410 = vmatprep.subr.mxu0 0.0
    %3411 = vmatpush1.msra.mxu0 0.0
    %3412 = vmatprep.subr.mxu0 0.0
    %3413 = vmatpush1.msra.mxu0 0.0
    %3414 = vmatprep.subr.mxu0 0.0
    %3415 = vmatpush1.msra.mxu0 0.0
    %3416 = vmatprep.subr.mxu0 0.0
    %3417 = vmatpush1.msra.mxu0 0.0
    %3418 = vmatprep.subr.mxu0 0.0
    %3419 = vmatpush1.msra.mxu0 0.0
    %3420 = vmatprep.subr.mxu0 0.0
    %3421 = vmatpush1.msra.mxu0 0.0
    %3422 = vmatprep.subr.mxu0 0.0
    %3423 = vmatpush1.msra.mxu0 0.0
    %3424 = vmatprep.subr.mxu0 0.0
    %3425 = vmatpush1.msra.mxu0 0.0
    %3426 = vmatprep.subr.mxu0 0.0
    %3427 = vmatpush1.msra.mxu0 0.0
    %3428 = vmatprep.subr.mxu0 0.0
    %3429 = vmatpush1.msra.mxu0 0.0
    %3430 = vmatprep.subr.mxu0 0.0
    %3431 = vmatpush1.msra.mxu0 0.0
    %3432 = vmatprep.subr.mxu0 0.0
    %3433 = vmatpush1.msra.mxu0 0.0
    %3434 = vmatprep.subr.mxu0 0.0
    %3435 = vmatpush1.msra.mxu0 0.0
    %3436 = vmatprep.subr.mxu0 0.0
    %3437 = vmatpush1.msra.mxu0 0.0
    %3438 = vmatprep.subr.mxu0 0.0
    %3439 = vmatpush1.msra.mxu0 0.0
    %3440 = vmatprep.subr.mxu0 0.0
    %3441 = vmatpush1.msra.mxu0 0.0
    %3442 = vmatprep.subr.mxu0 0.0
    %3443 = vmatpush1.msra.mxu0 0.0
    %3444 = vmatprep.subr.mxu0 0.0
    %3445 = vmatpush1.msra.mxu0 0.0
    %3446 = vmatprep.subr.mxu0 0.0
    %3447 = vmatpush1.msra.mxu0 0.0
    %3448 = vmatprep.subr.mxu0 0.0
    %3449 = vmatpush1.msra.mxu0 0.0
    %3450 = vmatprep.mubr.f32.mxu0 0.0
    %3451 = vmatmul.mubr.f32.gmra.mrb[0].mxu0 %v3384
    %v3452 = vpop.f32.mrb[0].mxu0
    %v3453 = vadd.f32 0.0, %v3452
    %v3454 = vpop.f32.mrb[0].mxu0
    %3455 = vdwg.mxu0
    %v3457 = vsel %vm2086, %v2934, 0
    %3459 = vmatprep.subr.mxu0 0.0
    %3460 = vmatpush1.msra.mxu0 %v3376
    %3461 = vmatprep.subr.mxu0 0.0
    %3462 = vmatpush1.msra.mxu0 0.0
    %3463 = vmatprep.subr.mxu0 0.0
    %3464 = vmatpush1.msra.mxu0 0.0
    %3465 = vmatprep.subr.mxu0 0.0
    %3466 = vmatpush1.msra.mxu0 0.0
    %3467 = vmatprep.subr.mxu0 0.0
    %3468 = vmatpush1.msra.mxu0 0.0
    %3469 = vmatprep.subr.mxu0 0.0
    %3470 = vmatpush1.msra.mxu0 0.0
    %3471 = vmatprep.subr.mxu0 0.0
    %3472 = vmatpush1.msra.mxu0 0.0
    %3473 = vmatprep.subr.mxu0 0.0
    %3474 = vmatpush1.msra.mxu0 0.0
    %3475 = vmatprep.subr.mxu0 0.0
    %3476 = vmatpush1.msra.mxu0 0.0
    %3477 = vmatprep.subr.mxu0 0.0
    %3478 = vmatpush1.msra.mxu0 0.0
    %3479 = vmatprep.subr.mxu0 0.0
    %3480 = vmatpush1.msra.mxu0 0.0
    %3481 = vmatprep.subr.mxu0 0.0
    %3482 = vmatpush1.msra.mxu0 0.0
    %3483 = vmatprep.subr.mxu0 0.0
    %3484 = vmatpush1.msra.mxu0 0.0
    %3485 = vmatprep.subr.mxu0 0.0
    %3486 = vmatpush1.msra.mxu0 0.0
    %3487 = vmatprep.subr.mxu0 0.0
    %3488 = vmatpush1.msra.mxu0 0.0
    %3489 = vmatprep.subr.mxu0 0.0
    %3490 = vmatpush1.msra.mxu0 0.0
    %3491 = vmatprep.subr.mxu0 0.0
    %3492 = vmatpush1.msra.mxu0 0.0
    %3493 = vmatprep.subr.mxu0 0.0
    %3494 = vmatpush1.msra.mxu0 0.0
    %3495 = vmatprep.subr.mxu0 0.0
    %3496 = vmatpush1.msra.mxu0 0.0
    %3497 = vmatprep.subr.mxu0 0.0
    %3498 = vmatpush1.msra.mxu0 0.0
    %3499 = vmatprep.subr.mxu0 0.0
    %3500 = vmatpush1.msra.mxu0 0.0
    %3501 = vmatprep.subr.mxu0 0.0
    %3502 = vmatpush1.msra.mxu0 0.0
    %3503 = vmatprep.subr.mxu0 0.0
    %3504 = vmatpush1.msra.mxu0 0.0
    %3505 = vmatprep.subr.mxu0 0.0
    %3506 = vmatpush1.msra.mxu0 0.0
    %3507 = vmatprep.subr.mxu0 0.0
    %3508 = vmatpush1.msra.mxu0 0.0
    %3509 = vmatprep.subr.mxu0 0.0
    %3510 = vmatpush1.msra.mxu0 0.0
    %3511 = vmatprep.subr.mxu0 0.0
    %3512 = vmatpush1.msra.mxu0 0.0
    %3513 = vmatprep.subr.mxu0 0.0
    %3514 = vmatpush1.msra.mxu0 0.0
    %3515 = vmatprep.subr.mxu0 0.0
    %3516 = vmatpush1.msra.mxu0 0.0
    %3517 = vmatprep.subr.mxu0 0.0
    %3518 = vmatpush1.msra.mxu0 0.0
    %3519 = vmatprep.subr.mxu0 0.0
    %3520 = vmatpush1.msra.mxu0 0.0
    %3521 = vmatprep.subr.mxu0 0.0
    %3522 = vmatpush1.msra.mxu0 0.0
    %3523 = vmatprep.mubr.f32.mxu0 0.0
    %3524 = vmatmul.mubr.f32.gmra.mrb[0].mxu0 %v3457
    %v3525 = vpop.f32.mrb[0].mxu0
    %v3526 = vadd.f32 0.0, %v3525
    %v3527 = vpop.f32.mrb[0].mxu0
    %3528 = vdwg.mxu0
    %v3530 = vsel %vm2086, %v3007, 0
    %3532 = vmatprep.subr.mxu0 0.0
    %3533 = vmatpush1.msra.mxu0 %v3377
    %3534 = vmatprep.subr.mxu0 0.0
    %3535 = vmatpush1.msra.mxu0 0.0
    %3536 = vmatprep.subr.mxu0 0.0
    %3537 = vmatpush1.msra.mxu0 0.0
    %3538 = vmatprep.subr.mxu0 0.0
    %3539 = vmatpush1.msra.mxu0 0.0
    %3540 = vmatprep.subr.mxu0 0.0
    %3541 = vmatpush1.msra.mxu0 0.0
    %3542 = vmatprep.subr.mxu0 0.0
    %3543 = vmatpush1.msra.mxu0 0.0
    %3544 = vmatprep.subr.mxu0 0.0
    %3545 = vmatpush1.msra.mxu0 0.0
    %3546 = vmatprep.subr.mxu0 0.0
    %3547 = vmatpush1.msra.mxu0 0.0
    %3548 = vmatprep.subr.mxu0 0.0
    %3549 = vmatpush1.msra.mxu0 0.0
    %3550 = vmatprep.subr.mxu0 0.0
    %3551 = vmatpush1.msra.mxu0 0.0
    %3552 = vmatprep.subr.mxu0 0.0
    %3553 = vmatpush1.msra.mxu0 0.0
    %3554 = vmatprep.subr.mxu0 0.0
    %3555 = vmatpush1.msra.mxu0 0.0
    %3556 = vmatprep.subr.mxu0 0.0
    %3557 = vmatpush1.msra.mxu0 0.0
    %3558 = vmatprep.subr.mxu0 0.0
    %3559 = vmatpush1.msra.mxu0 0.0
    %3560 = vmatprep.subr.mxu0 0.0
    %3561 = vmatpush1.msra.mxu0 0.0
    %3562 = vmatprep.subr.mxu0 0.0
    %3563 = vmatpush1.msra.mxu0 0.0
    %3564 = vmatprep.subr.mxu0 0.0
    %3565 = vmatpush1.msra.mxu0 0.0
    %3566 = vmatprep.subr.mxu0 0.0
    %3567 = vmatpush1.msra.mxu0 0.0
    %3568 = vmatprep.subr.mxu0 0.0
    %3569 = vmatpush1.msra.mxu0 0.0
    %3570 = vmatprep.subr.mxu0 0.0
    %3571 = vmatpush1.msra.mxu0 0.0
    %3572 = vmatprep.subr.mxu0 0.0
    %3573 = vmatpush1.msra.mxu0 0.0
    %3574 = vmatprep.subr.mxu0 0.0
    %3575 = vmatpush1.msra.mxu0 0.0
    %3576 = vmatprep.subr.mxu0 0.0
    %3577 = vmatpush1.msra.mxu0 0.0
    %3578 = vmatprep.subr.mxu0 0.0
    %3579 = vmatpush1.msra.mxu0 0.0
    %3580 = vmatprep.subr.mxu0 0.0
    %3581 = vmatpush1.msra.mxu0 0.0
    %3582 = vmatprep.subr.mxu0 0.0
    %3583 = vmatpush1.msra.mxu0 0.0
    %3584 = vmatprep.subr.mxu0 0.0
    %3585 = vmatpush1.msra.mxu0 0.0
    %3586 = vmatprep.subr.mxu0 0.0
    %3587 = vmatpush1.msra.mxu0 0.0
    %3588 = vmatprep.subr.mxu0 0.0
    %3589 = vmatpush1.msra.mxu0 0.0
    %3590 = vmatprep.subr.mxu0 0.0
    %3591 = vmatpush1.msra.mxu0 0.0
    %3592 = vmatprep.subr.mxu0 0.0
    %3593 = vmatpush1.msra.mxu0 0.0
    %3594 = vmatprep.subr.mxu0 0.0
    %3595 = vmatpush1.msra.mxu0 0.0
    %3596 = vmatprep.mubr.f32.mxu0 0.0
    %3597 = vmatmul.mubr.f32.gmra.mrb[0].mxu0 %v3530
    %v3598 = vpop.f32.mrb[0].mxu0
    %v3599 = vadd.f32 0.0, %v3598
    %v3600 = vpop.f32.mrb[0].mxu0
    %3601 = vdwg.mxu0
    %v3603 = vsel %vm2086, %v3080, 0
    %3605 = vmatprep.subr.mxu0 0.0
    %3606 = vmatpush1.msra.mxu0 %v3378
    %3607 = vmatprep.subr.mxu0 0.0
    %3608 = vmatpush1.msra.mxu0 0.0
    %3609 = vmatprep.subr.mxu0 0.0
    %3610 = vmatpush1.msra.mxu0 0.0
    %3611 = vmatprep.subr.mxu0 0.0
    %3612 = vmatpush1.msra.mxu0 0.0
    %3613 = vmatprep.subr.mxu0 0.0
    %3614 = vmatpush1.msra.mxu0 0.0
    %3615 = vmatprep.subr.mxu0 0.0
    %3616 = vmatpush1.msra.mxu0 0.0
    %3617 = vmatprep.subr.mxu0 0.0
    %3618 = vmatpush1.msra.mxu0 0.0
    %3619 = vmatprep.subr.mxu0 0.0
    %3620 = vmatpush1.msra.mxu0 0.0
    %3621 = vmatprep.subr.mxu0 0.0
    %3622 = vmatpush1.msra.mxu0 0.0
    %3623 = vmatprep.subr.mxu0 0.0
    %3624 = vmatpush1.msra.mxu0 0.0
    %3625 = vmatprep.subr.mxu0 0.0
    %3626 = vmatpush1.msra.mxu0 0.0
    %3627 = vmatprep.subr.mxu0 0.0
    %3628 = vmatpush1.msra.mxu0 0.0
    %3629 = vmatprep.subr.mxu0 0.0
    %3630 = vmatpush1.msra.mxu0 0.0
    %3631 = vmatprep.subr.mxu0 0.0
    %3632 = vmatpush1.msra.mxu0 0.0
    %3633 = vmatprep.subr.mxu0 0.0
    %3634 = vmatpush1.msra.mxu0 0.0
    %3635 = vmatprep.subr.mxu0 0.0
    %3636 = vmatpush1.msra.mxu0 0.0
    %3637 = vmatprep.subr.mxu0 0.0
    %3638 = vmatpush1.msra.mxu0 0.0
    %3639 = vmatprep.subr.mxu0 0.0
    %3640 = vmatpush1.msra.mxu0 0.0
    %3641 = vmatprep.subr.mxu0 0.0
    %3642 = vmatpush1.msra.mxu0 0.0
    %3643 = vmatprep.subr.mxu0 0.0
    %3644 = vmatpush1.msra.mxu0 0.0
    %3645 = vmatprep.subr.mxu0 0.0
    %3646 = vmatpush1.msra.mxu0 0.0
    %3647 = vmatprep.subr.mxu0 0.0
    %3648 = vmatpush1.msra.mxu0 0.0
    %3649 = vmatprep.subr.mxu0 0.0
    %3650 = vmatpush1.msra.mxu0 0.0
    %3651 = vmatprep.subr.mxu0 0.0
    %3652 = vmatpush1.msra.mxu0 0.0
    %3653 = vmatprep.subr.mxu0 0.0
    %3654 = vmatpush1.msra.mxu0 0.0
    %3655 = vmatprep.subr.mxu0 0.0
    %3656 = vmatpush1.msra.mxu0 0.0
    %3657 = vmatprep.subr.mxu0 0.0
    %3658 = vmatpush1.msra.mxu0 0.0
    %3659 = vmatprep.subr.mxu0 0.0
    %3660 = vmatpush1.msra.mxu0 0.0
    %3661 = vmatprep.subr.mxu0 0.0
    %3662 = vmatpush1.msra.mxu0 0.0
    %3663 = vmatprep.subr.mxu0 0.0
    %3664 = vmatpush1.msra.mxu0 0.0
    %3665 = vmatprep.subr.mxu0 0.0
    %3666 = vmatpush1.msra.mxu0 0.0
    %3667 = vmatprep.subr.mxu0 0.0
    %3668 = vmatpush1.msra.mxu0 0.0
    %3669 = vmatprep.mubr.f32.mxu0 0.0
    %3670 = vmatmul.mubr.f32.gmra.mrb[0].mxu0 %v3603
    %v3671 = vpop.f32.mrb[0].mxu0
    %v3672 = vadd.f32 0.0, %v3671
    %v3673 = vpop.f32.mrb[0].mxu0
    %3674 = vdwg.mxu0
    %v3676 = vsel %vm2086, %v3153, 0
    %3678 = vmatprep.subr.mxu0 0.0
    %3679 = vmatpush1.msra.mxu0 %v3379
    %3680 = vmatprep.subr.mxu0 0.0
    %3681 = vmatpush1.msra.mxu0 0.0
    %3682 = vmatprep.subr.mxu0 0.0
    %3683 = vmatpush1.msra.mxu0 0.0
    %3684 = vmatprep.subr.mxu0 0.0
    %3685 = vmatpush1.msra.mxu0 0.0
    %3686 = vmatprep.subr.mxu0 0.0
    %3687 = vmatpush1.msra.mxu0 0.0
    %3688 = vmatprep.subr.mxu0 0.0
    %3689 = vmatpush1.msra.mxu0 0.0
    %3690 = vmatprep.subr.mxu0 0.0
    %3691 = vmatpush1.msra.mxu0 0.0
    %3692 = vmatprep.subr.mxu0 0.0
    %3693 = vmatpush1.msra.mxu0 0.0
    %3694 = vmatprep.subr.mxu0 0.0
    %3695 = vmatpush1.msra.mxu0 0.0
    %3696 = vmatprep.subr.mxu0 0.0
    %3697 = vmatpush1.msra.mxu0 0.0
    %3698 = vmatprep.subr.mxu0 0.0
    %3699 = vmatpush1.msra.mxu0 0.0
    %3700 = vmatprep.subr.mxu0 0.0
    %3701 = vmatpush1.msra.mxu0 0.0
    %3702 = vmatprep.subr.mxu0 0.0
    %3703 = vmatpush1.msra.mxu0 0.0
    %3704 = vmatprep.subr.mxu0 0.0
    %3705 = vmatpush1.msra.mxu0 0.0
    %3706 = vmatprep.subr.mxu0 0.0
    %3707 = vmatpush1.msra.mxu0 0.0
    %3708 = vmatprep.subr.mxu0 0.0
    %3709 = vmatpush1.msra.mxu0 0.0
    %3710 = vmatprep.subr.mxu0 0.0
    %3711 = vmatpush1.msra.mxu0 0.0
    %3712 = vmatprep.subr.mxu0 0.0
    %3713 = vmatpush1.msra.mxu0 0.0
    %3714 = vmatprep.subr.mxu0 0.0
    %3715 = vmatpush1.msra.mxu0 0.0
    %3716 = vmatprep.subr.mxu0 0.0
    %3717 = vmatpush1.msra.mxu0 0.0
    %3718 = vmatprep.subr.mxu0 0.0
    %3719 = vmatpush1.msra.mxu0 0.0
    %3720 = vmatprep.subr.mxu0 0.0
    %3721 = vmatpush1.msra.mxu0 0.0
    %3722 = vmatprep.subr.mxu0 0.0
    %3723 = vmatpush1.msra.mxu0 0.0
    %3724 = vmatprep.subr.mxu0 0.0
    %3725 = vmatpush1.msra.mxu0 0.0
    %3726 = vmatprep.subr.mxu0 0.0
    %3727 = vmatpush1.msra.mxu0 0.0
    %3728 = vmatprep.subr.mxu0 0.0
    %3729 = vmatpush1.msra.mxu0 0.0
    %3730 = vmatprep.subr.mxu0 0.0
    %3731 = vmatpush1.msra.mxu0 0.0
    %3732 = vmatprep.subr.mxu0 0.0
    %3733 = vmatpush1.msra.mxu0 0.0
    %3734 = vmatprep.subr.mxu0 0.0
    %3735 = vmatpush1.msra.mxu0 0.0
    %3736 = vmatprep.subr.mxu0 0.0
    %3737 = vmatpush1.msra.mxu0 0.0
    %3738 = vmatprep.subr.mxu0 0.0
    %3739 = vmatpush1.msra.mxu0 0.0
    %3740 = vmatprep.subr.mxu0 0.0
    %3741 = vmatpush1.msra.mxu0 0.0
    %3742 = vmatprep.mubr.f32.mxu0 0.0
    %3743 = vmatmul.mubr.f32.gmra.mrb[0].mxu0 %v3676
    %v3744 = vpop.f32.mrb[0].mxu0
    %v3745 = vadd.f32 0.0, %v3744
    %v3746 = vpop.f32.mrb[0].mxu0
    %3747 = vdwg.mxu0
    %v3749 = vsel %vm2086, %v3226, 0
    %3751 = vmatprep.subr.mxu0 0.0
    %3752 = vmatpush1.msra.mxu0 %v3380
    %3753 = vmatprep.subr.mxu0 0.0
    %3754 = vmatpush1.msra.mxu0 0.0
    %3755 = vmatprep.subr.mxu0 0.0
    %3756 = vmatpush1.msra.mxu0 0.0
    %3757 = vmatprep.subr.mxu0 0.0
    %3758 = vmatpush1.msra.mxu0 0.0
    %3759 = vmatprep.subr.mxu0 0.0
    %3760 = vmatpush1.msra.mxu0 0.0
    %3761 = vmatprep.subr.mxu0 0.0
    %3762 = vmatpush1.msra.mxu0 0.0
    %3763 = vmatprep.subr.mxu0 0.0
    %3764 = vmatpush1.msra.mxu0 0.0
    %3765 = vmatprep.subr.mxu0 0.0
    %3766 = vmatpush1.msra.mxu0 0.0
    %3767 = vmatprep.subr.mxu0 0.0
    %3768 = vmatpush1.msra.mxu0 0.0
    %3769 = vmatprep.subr.mxu0 0.0
    %3770 = vmatpush1.msra.mxu0 0.0
    %3771 = vmatprep.subr.mxu0 0.0
    %3772 = vmatpush1.msra.mxu0 0.0
    %3773 = vmatprep.subr.mxu0 0.0
    %3774 = vmatpush1.msra.mxu0 0.0
    %3775 = vmatprep.subr.mxu0 0.0
    %3776 = vmatpush1.msra.mxu0 0.0
    %3777 = vmatprep.subr.mxu0 0.0
    %3778 = vmatpush1.msra.mxu0 0.0
    %3779 = vmatprep.subr.mxu0 0.0
    %3780 = vmatpush1.msra.mxu0 0.0
    %3781 = vmatprep.subr.mxu0 0.0
    %3782 = vmatpush1.msra.mxu0 0.0
    %3783 = vmatprep.subr.mxu0 0.0
    %3784 = vmatpush1.msra.mxu0 0.0
    %3785 = vmatprep.subr.mxu0 0.0
    %3786 = vmatpush1.msra.mxu0 0.0
    %3787 = vmatprep.subr.mxu0 0.0
    %3788 = vmatpush1.msra.mxu0 0.0
    %3789 = vmatprep.subr.mxu0 0.0
    %3790 = vmatpush1.msra.mxu0 0.0
    %3791 = vmatprep.subr.mxu0 0.0
    %3792 = vmatpush1.msra.mxu0 0.0
    %3793 = vmatprep.subr.mxu0 0.0
    %3794 = vmatpush1.msra.mxu0 0.0
    %3795 = vmatprep.subr.mxu0 0.0
    %3796 = vmatpush1.msra.mxu0 0.0
    %3797 = vmatprep.subr.mxu0 0.0
    %3798 = vmatpush1.msra.mxu0 0.0
    %3799 = vmatprep.subr.mxu0 0.0
    %3800 = vmatpush1.msra.mxu0 0.0
    %3801 = vmatprep.subr.mxu0 0.0
    %3802 = vmatpush1.msra.mxu0 0.0
    %3803 = vmatprep.subr.mxu0 0.0
    %3804 = vmatpush1.msra.mxu0 0.0
    %3805 = vmatprep.subr.mxu0 0.0
    %3806 = vmatpush1.msra.mxu0 0.0
    %3807 = vmatprep.subr.mxu0 0.0
    %3808 = vmatpush1.msra.mxu0 0.0
    %3809 = vmatprep.subr.mxu0 0.0
    %3810 = vmatpush1.msra.mxu0 0.0
    %3811 = vmatprep.subr.mxu0 0.0
    %3812 = vmatpush1.msra.mxu0 0.0
    %3813 = vmatprep.subr.mxu0 0.0
    %3814 = vmatpush1.msra.mxu0 0.0
    %3815 = vmatprep.mubr.f32.mxu0 0.0
    %3816 = vmatmul.mubr.f32.gmra.mrb[0].mxu0 %v3749
    %v3817 = vpop.f32.mrb[0].mxu0
    %v3818 = vadd.f32 0.0, %v3817
    %v3819 = vpop.f32.mrb[0].mxu0
    %3820 = vdwg.mxu0
    %v3822 = vsel %vm2086, %v3299, 0
    %3824 = vmatprep.subr.mxu0 0.0
    %3825 = vmatpush1.msra.mxu0 %v3381
    %3826 = vmatprep.subr.mxu0 0.0
    %3827 = vmatpush1.msra.mxu0 0.0
    %3828 = vmatprep.subr.mxu0 0.0
    %3829 = vmatpush1.msra.mxu0 0.0
    %3830 = vmatprep.subr.mxu0 0.0
    %3831 = vmatpush1.msra.mxu0 0.0
    %3832 = vmatprep.subr.mxu0 0.0
    %3833 = vmatpush1.msra.mxu0 0.0
    %3834 = vmatprep.subr.mxu0 0.0
    %3835 = vmatpush1.msra.mxu0 0.0
    %3836 = vmatprep.subr.mxu0 0.0
    %3837 = vmatpush1.msra.mxu0 0.0
    %3838 = vmatprep.subr.mxu0 0.0
    %3839 = vmatpush1.msra.mxu0 0.0
    %3840 = vmatprep.subr.mxu0 0.0
    %3841 = vmatpush1.msra.mxu0 0.0
    %3842 = vmatprep.subr.mxu0 0.0
    %3843 = vmatpush1.msra.mxu0 0.0
    %3844 = vmatprep.subr.mxu0 0.0
    %3845 = vmatpush1.msra.mxu0 0.0
    %3846 = vmatprep.subr.mxu0 0.0
    %3847 = vmatpush1.msra.mxu0 0.0
    %3848 = vmatprep.subr.mxu0 0.0
    %3849 = vmatpush1.msra.mxu0 0.0
    %3850 = vmatprep.subr.mxu0 0.0
    %3851 = vmatpush1.msra.mxu0 0.0
    %3852 = vmatprep.subr.mxu0 0.0
    %3853 = vmatpush1.msra.mxu0 0.0
    %3854 = vmatprep.subr.mxu0 0.0
    %3855 = vmatpush1.msra.mxu0 0.0
    %3856 = vmatprep.subr.mxu0 0.0
    %3857 = vmatpush1.msra.mxu0 0.0
    %3858 = vmatprep.subr.mxu0 0.0
    %3859 = vmatpush1.msra.mxu0 0.0
    %3860 = vmatprep.subr.mxu0 0.0
    %3861 = vmatpush1.msra.mxu0 0.0
    %3862 = vmatprep.subr.mxu0 0.0
    %3863 = vmatpush1.msra.mxu0 0.0
    %3864 = vmatprep.subr.mxu0 0.0
    %3865 = vmatpush1.msra.mxu0 0.0
    %3866 = vmatprep.subr.mxu0 0.0
    %3867 = vmatpush1.msra.mxu0 0.0
    %3868 = vmatprep.subr.mxu0 0.0
    %3869 = vmatpush1.msra.mxu0 0.0
    %3870 = vmatprep.subr.mxu0 0.0
    %3871 = vmatpush1.msra.mxu0 0.0
    %3872 = vmatprep.subr.mxu0 0.0
    %3873 = vmatpush1.msra.mxu0 0.0
    %3874 = vmatprep.subr.mxu0 0.0
    %3875 = vmatpush1.msra.mxu0 0.0
    %3876 = vmatprep.subr.mxu0 0.0
    %3877 = vmatpush1.msra.mxu0 0.0
    %3878 = vmatprep.subr.mxu0 0.0
    %3879 = vmatpush1.msra.mxu0 0.0
    %3880 = vmatprep.subr.mxu0 0.0
    %3881 = vmatpush1.msra.mxu0 0.0
    %3882 = vmatprep.subr.mxu0 0.0
    %3883 = vmatpush1.msra.mxu0 0.0
    %3884 = vmatprep.subr.mxu0 0.0
    %3885 = vmatpush1.msra.mxu0 0.0
    %3886 = vmatprep.subr.mxu0 0.0
    %3887 = vmatpush1.msra.mxu0 0.0
    %3888 = vmatprep.mubr.f32.mxu0 0.0
    %3889 = vmatmul.mubr.f32.gmra.mrb[0].mxu0 %v3822
    %v3890 = vpop.f32.mrb[0].mxu0
    %v3891 = vadd.f32 0.0, %v3890
    %v3892 = vpop.f32.mrb[0].mxu0
    %3893 = vdwg.mxu0
    %v3895 = vsel %vm2086, %v3372, 0
    %3897 = vmatprep.subr.mxu0 0.0
    %3898 = vmatpush1.msra.mxu0 %v3382
    %3899 = vmatprep.subr.mxu0 0.0
    %3900 = vmatpush1.msra.mxu0 0.0
    %3901 = vmatprep.subr.mxu0 0.0
    %3902 = vmatpush1.msra.mxu0 0.0
    %3903 = vmatprep.subr.mxu0 0.0
    %3904 = vmatpush1.msra.mxu0 0.0
    %3905 = vmatprep.subr.mxu0 0.0
    %3906 = vmatpush1.msra.mxu0 0.0
    %3907 = vmatprep.subr.mxu0 0.0
    %3908 = vmatpush1.msra.mxu0 0.0
    %3909 = vmatprep.subr.mxu0 0.0
    %3910 = vmatpush1.msra.mxu0 0.0
    %3911 = vmatprep.subr.mxu0 0.0
    %3912 = vmatpush1.msra.mxu0 0.0
    %3913 = vmatprep.subr.mxu0 0.0
    %3914 = vmatpush1.msra.mxu0 0.0
    %3915 = vmatprep.subr.mxu0 0.0
    %3916 = vmatpush1.msra.mxu0 0.0
    %3917 = vmatprep.subr.mxu0 0.0
    %3918 = vmatpush1.msra.mxu0 0.0
    %3919 = vmatprep.subr.mxu0 0.0
    %3920 = vmatpush1.msra.mxu0 0.0
    %3921 = vmatprep.subr.mxu0 0.0
    %3922 = vmatpush1.msra.mxu0 0.0
    %3923 = vmatprep.subr.mxu0 0.0
    %3924 = vmatpush1.msra.mxu0 0.0
    %3925 = vmatprep.subr.mxu0 0.0
    %3926 = vmatpush1.msra.mxu0 0.0
    %3927 = vmatprep.subr.mxu0 0.0
    %3928 = vmatpush1.msra.mxu0 0.0
    %3929 = vmatprep.subr.mxu0 0.0
    %3930 = vmatpush1.msra.mxu0 0.0
    %3931 = vmatprep.subr.mxu0 0.0
    %3932 = vmatpush1.msra.mxu0 0.0
    %3933 = vmatprep.subr.mxu0 0.0
    %3934 = vmatpush1.msra.mxu0 0.0
    %3935 = vmatprep.subr.mxu0 0.0
    %3936 = vmatpush1.msra.mxu0 0.0
    %3937 = vmatprep.subr.mxu0 0.0
    %3938 = vmatpush1.msra.mxu0 0.0
    %3939 = vmatprep.subr.mxu0 0.0
    %3940 = vmatpush1.msra.mxu0 0.0
    %3941 = vmatprep.subr.mxu0 0.0
    %3942 = vmatpush1.msra.mxu0 0.0
    %3943 = vmatprep.subr.mxu0 0.0
    %3944 = vmatpush1.msra.mxu0 0.0
    %3945 = vmatprep.subr.mxu0 0.0
    %3946 = vmatpush1.msra.mxu0 0.0
    %3947 = vmatprep.subr.mxu0 0.0
    %3948 = vmatpush1.msra.mxu0 0.0
    %3949 = vmatprep.subr.mxu0 0.0
    %3950 = vmatpush1.msra.mxu0 0.0
    %3951 = vmatprep.subr.mxu0 0.0
    %3952 = vmatpush1.msra.mxu0 0.0
    %3953 = vmatprep.subr.mxu0 0.0
    %3954 = vmatpush1.msra.mxu0 0.0
    %3955 = vmatprep.subr.mxu0 0.0
    %3956 = vmatpush1.msra.mxu0 0.0
    %3957 = vmatprep.subr.mxu0 0.0
    %3958 = vmatpush1.msra.mxu0 0.0
    %3959 = vmatprep.subr.mxu0 0.0
    %3960 = vmatpush1.msra.mxu0 0.0
    %3961 = vmatprep.mubr.f32.mxu0 0.0
    %3962 = vmatmul.mubr.f32.gmra.mrb[0].mxu0 %v3895
    %v3963 = vpop.f32.mrb[0].mxu0
    %v3964 = vadd.f32 0.0, %v3963
    %v3965 = vpop.f32.mrb[0].mxu0
    %3966 = vdwg.mxu0
    %v3967 = vld [vmem:[#allocation11] sm:$0xff]
    %v3968 = vld [vmem:[#allocation11 + $0x8] sm:$0xff]
    %v3969 = vld [vmem:[#allocation11 + $0x10] sm:$0xff]
    %v3970 = vld [vmem:[#allocation11 + $0x18] sm:$0xff]
    %v3971 = vld [vmem:[#allocation11 + $0x20] sm:$0xff]
    %v3972 = vld [vmem:[#allocation11 + $0x28] sm:$0xff]
    %v3973 = vld [vmem:[#allocation11 + $0x30] sm:$0xff]
    %v3974 = vld [vmem:[#allocation11 + $0x38] sm:$0xff]
    %v3975 = vld [vmem:[#allocation11 + $0x40] sm:$0xff]
    %v3976 = vld [vmem:[#allocation11 + $0x48] sm:$0xff]
    %v3977 = vld [vmem:[#allocation11 + $0x50] sm:$0xff]
    %v3978 = vld [vmem:[#allocation11 + $0x58] sm:$0xff]
    %v3979 = vld [vmem:[#allocation5] sm:$0xff]
    %v3980 = vld [vmem:[#allocation5 + $0x8] sm:$0xff]
    %vm3981 = vcmask 523264
    %v3983 = vsel %vm3981, %v3979, 0
    %v3986 = vsel %vm3981, %v3980, 0
    %3988 = vmatprep.subr.mxu0 0.0
    %3989 = vmatpush1.msra.mxu0 %v3453
    %3990 = vmatprep.subr.mxu0 0.0
    %3991 = vmatpush1.msra.mxu0 %v3526
    %3992 = vmatprep.subr.mxu0 0.0
    %3993 = vmatpush1.msra.mxu0 %v3599
    %3994 = vmatprep.subr.mxu0 0.0
    %3995 = vmatpush1.msra.mxu0 %v3672
    %3996 = vmatprep.subr.mxu0 0.0
    %3997 = vmatpush1.msra.mxu0 %v3745
    %3998 = vmatprep.subr.mxu0 0.0
    %3999 = vmatpush1.msra.mxu0 %v3818
    %4000 = vmatprep.subr.mxu0 0.0
    %4001 = vmatpush1.msra.mxu0 %v3891
    %4002 = vmatprep.subr.mxu0 0.0
    %4003 = vmatpush1.msra.mxu0 %v3964
    %4004 = vmatprep.subr.mxu0 0.0
    %4005 = vmatpush1.msra.mxu0 0.0
    %4006 = vmatprep.subr.mxu0 0.0
    %4007 = vmatpush1.msra.mxu0 0.0
    %4008 = vmatprep.subr.mxu0 0.0
    %4009 = vmatpush1.msra.mxu0 0.0
    %4010 = vmatprep.subr.mxu0 0.0
    %4011 = vmatpush1.msra.mxu0 0.0
    %4012 = vmatprep.subr.mxu0 0.0
    %4013 = vmatpush1.msra.mxu0 0.0
    %4014 = vmatprep.subr.mxu0 0.0
    %4015 = vmatpush1.msra.mxu0 0.0
    %4016 = vmatprep.subr.mxu0 0.0
    %4017 = vmatpush1.msra.mxu0 0.0
    %4018 = vmatprep.subr.mxu0 0.0
    %4019 = vmatpush1.msra.mxu0 0.0
    %4020 = vmatprep.subr.mxu0 0.0
    %4021 = vmatpush1.msra.mxu0 0.0
    %4022 = vmatprep.subr.mxu0 0.0
    %4023 = vmatpush1.msra.mxu0 0.0
    %4024 = vmatprep.subr.mxu0 0.0
    %4025 = vmatpush1.msra.mxu0 0.0
    %4026 = vmatprep.subr.mxu0 0.0
    %4027 = vmatpush1.msra.mxu0 0.0
    %4028 = vmatprep.subr.mxu0 0.0
    %4029 = vmatpush1.msra.mxu0 0.0
    %4030 = vmatprep.subr.mxu0 0.0
    %4031 = vmatpush1.msra.mxu0 0.0
    %4032 = vmatprep.subr.mxu0 0.0
    %4033 = vmatpush1.msra.mxu0 0.0
    %4034 = vmatprep.subr.mxu0 0.0
    %4035 = vmatpush1.msra.mxu0 0.0
    %4036 = vmatprep.subr.mxu0 0.0
    %4037 = vmatpush1.msra.mxu0 0.0
    %4038 = vmatprep.subr.mxu0 0.0
    %4039 = vmatpush1.msra.mxu0 0.0
    %4040 = vmatprep.subr.mxu0 0.0
    %4041 = vmatpush1.msra.mxu0 0.0
    %4042 = vmatprep.subr.mxu0 0.0
    %4043 = vmatpush1.msra.mxu0 0.0
    %4044 = vmatprep.subr.mxu0 0.0
    %4045 = vmatpush1.msra.mxu0 0.0
    %4046 = vmatprep.subr.mxu0 0.0
    %4047 = vmatpush1.msra.mxu0 0.0
    %4048 = vmatprep.subr.mxu0 0.0
    %4049 = vmatpush1.msra.mxu0 0.0
    %4050 = vmatprep.subr.mxu0 0.0
    %4051 = vmatpush1.msra.mxu0 0.0
    %4052 = vmatprep.mubr.f32.mxu0 0.0
    %4053 = vmatmul.mubr.f32.gmra.mrb[0].mxu0 %v3983
    %v4054 = vpop.f32.mrb[0].mxu0
    %v4055 = vadd.f32 %v3967, %v4054
    %v4056 = vpop.f32.mrb[0].mxu0
    %4057 = vmatprep.mubr.f32.mxu0 0.0
    %4058 = vmatmul.mubr.f32.gmra.mrb[0].mxu0 %v3986
    %v4059 = vpop.f32.mrb[0].mxu0
    %v4060 = vadd.f32 %v3968, %v4059
    %v4061 = vpop.f32.mrb[0].mxu0
    %4062 = vdwg.mxu0
    %v4063 = vadd.f32 %v121, %v4055
    %v4064 = vadd.f32 %v122, %v4060
    %v4065 = vsel %vm309, %v4063, 0.0
    %4066 = vadd.xlane.f32.xlu0 %v4065
    %v4067 = vpop.xlane.xlu0 %4066
    %v4068 = vsel %vm309, %v4064, 0.0
    %4069 = vadd.xlane.f32.xlu0 %v4068
    %v4070 = vpop.xlane.xlu0 %4069
    %v4071 = vrcp.pop 32.0
    %v4072 = vmul.f32 %v4067, %v4071
    %v4073 = vmul.f32 %v4070, %v4071
    %v4074 = vsub.f32 %v4063, %v4072
    %v4075 = vsub.f32 %v4064, %v4073
    %v4076 = vmul.f32 %v4074, %v4074
    %v4077 = vmul.f32 %v4075, %v4075
    %v4078 = vsel %vm309, %v4076, 0.0
    %4079 = vadd.xlane.f32.xlu0 %v4078
    %v4080 = vpop.xlane.xlu0 %4079
    %v4081 = vsel %vm309, %v4077, 0.0
    %4082 = vadd.xlane.f32.xlu0 %v4081
    %v4083 = vpop.xlane.xlu0 %4082
    %v4084 = vmul.f32 %v4080, %v4071
    %v4085 = vmul.f32 %v4083, %v4071
    %v4086 = vadd.f32 %v4084, 1e-05
    %v4087 = vadd.f32 %v4085, 1e-05
    %v4088 = vrsqrt.pop %v4086
    %v4089 = vrsqrt.pop %v4087
    %v4090 = vmul.f32 %v4074, %v4088
    %v4091 = vmul.f32 %v4075, %v4089
    %v4092 = vmul.f32 %v4090, %v3971
    %v4093 = vmul.f32 %v4091, %v3972
    %v4094 = vadd.f32 %v4092, %v3973
    %v4095 = vadd.f32 %v4093, %v3974
    %v4096 = vld [vmem:[#allocation10] sm:$0xff]
    %v4097 = vld [vmem:[#allocation10 + $0x8] sm:$0xff]
    %v4098 = vld [vmem:[#allocation10 + $0x10] sm:$0xff]
    %v4099 = vld [vmem:[#allocation10 + $0x18] sm:$0xff]
    %v4100 = vld [vmem:[%s9] sm:$0xff]
    %v4101 = vld [vmem:[%s9 + $0x8] sm:$0xff]
    %v4103 = vsel %vm309, %v4094, 0
    %v4106 = vsel %vm309, %v4095, 0
    %4108 = vmatprep.subr.mxu0 0.0
    %4109 = vmatpush1.msra.mxu0 %v4096
    %4110 = vmatprep.subr.mxu0 0.0
    %4111 = vmatpush1.msra.mxu0 %v4097
    %4112 = vmatprep.subr.mxu0 0.0
    %4113 = vmatpush1.msra.mxu0 %v4098
    %4114 = vmatprep.subr.mxu0 0.0
    %4115 = vmatpush1.msra.mxu0 %v4099
    %4116 = vmatprep.subr.mxu0 0.0
    %4117 = vmatpush1.msra.mxu0 0.0
    %4118 = vmatprep.subr.mxu0 0.0
    %4119 = vmatpush1.msra.mxu0 0.0
    %4120 = vmatprep.subr.mxu0 0.0
    %4121 = vmatpush1.msra.mxu0 0.0
    %4122 = vmatprep.subr.mxu0 0.0
    %4123 = vmatpush1.msra.mxu0 0.0
    %4124 = vmatprep.subr.mxu0 0.0
    %4125 = vmatpush1.msra.mxu0 0.0
    %4126 = vmatprep.subr.mxu0 0.0
    %4127 = vmatpush1.msra.mxu0 0.0
    %4128 = vmatprep.subr.mxu0 0.0
    %4129 = vmatpush1.msra.mxu0 0.0
    %4130 = vmatprep.subr.mxu0 0.0
    %4131 = vmatpush1.msra.mxu0 0.0
    %4132 = vmatprep.subr.mxu0 0.0
    %4133 = vmatpush1.msra.mxu0 0.0
    %4134 = vmatprep.subr.mxu0 0.0
    %4135 = vmatpush1.msra.mxu0 0.0
    %4136 = vmatprep.subr.mxu0 0.0
    %4137 = vmatpush1.msra.mxu0 0.0
    %4138 = vmatprep.subr.mxu0 0.0
    %4139 = vmatpush1.msra.mxu0 0.0
    %4140 = vmatprep.subr.mxu0 0.0
    %4141 = vmatpush1.msra.mxu0 0.0
    %4142 = vmatprep.subr.mxu0 0.0
    %4143 = vmatpush1.msra.mxu0 0.0
    %4144 = vmatprep.subr.mxu0 0.0
    %4145 = vmatpush1.msra.mxu0 0.0
    %4146 = vmatprep.subr.mxu0 0.0
    %4147 = vmatpush1.msra.mxu0 0.0
    %4148 = vmatprep.subr.mxu0 0.0
    %4149 = vmatpush1.msra.mxu0 0.0
    %4150 = vmatprep.subr.mxu0 0.0
    %4151 = vmatpush1.msra.mxu0 0.0
    %4152 = vmatprep.subr.mxu0 0.0
    %4153 = vmatpush1.msra.mxu0 0.0
    %4154 = vmatprep.subr.mxu0 0.0
    %4155 = vmatpush1.msra.mxu0 0.0
    %4156 = vmatprep.subr.mxu0 0.0
    %4157 = vmatpush1.msra.mxu0 0.0
    %4158 = vmatprep.subr.mxu0 0.0
    %4159 = vmatpush1.msra.mxu0 0.0
    %4160 = vmatprep.subr.mxu0 0.0
    %4161 = vmatpush1.msra.mxu0 0.0
    %4162 = vmatprep.subr.mxu0 0.0
    %4163 = vmatpush1.msra.mxu0 0.0
    %4164 = vmatprep.subr.mxu0 0.0
    %4165 = vmatpush1.msra.mxu0 0.0
    %4166 = vmatprep.subr.mxu0 0.0
    %4167 = vmatpush1.msra.mxu0 0.0
    %4168 = vmatprep.subr.mxu0 0.0
    %4169 = vmatpush1.msra.mxu0 0.0
    %4170 = vmatprep.subr.mxu0 0.0
    %4171 = vmatpush1.msra.mxu0 0.0
    %4172 = vmatprep.mubr.f32.mxu0 0.0
    %4173 = vmatmul.mubr.f32.gmra.mrb[0].mxu0 %v4103
    %v4174 = vpop.f32.mrb[0].mxu0
    %v4175 = vadd.f32 %v4100, %v4174
    %v4176 = vpop.f32.mrb[0].mxu0
    %4177 = vmatprep.mubr.f32.mxu0 0.0
    %4178 = vmatmul.mubr.f32.gmra.mrb[0].mxu0 %v4106
    %v4179 = vpop.f32.mrb[0].mxu0
    %v4180 = vadd.f32 %v4101, %v4179
    %v4181 = vpop.f32.mrb[0].mxu0
    %4182 = vdwg.mxu0
    %v4183 = vmax.f32 %v4175, 0.0
    %v4184 = vmax.f32 %v4180, 0.0
    %v4185 = vld [vmem:[%s7] sm:$0xff]
    %v4186 = vld [vmem:[%s7 + $0x8] sm:$0xff]
    %v4187 = vld [vmem:[%s7 + $0x10] sm:$0xff]
    %v4188 = vld [vmem:[%s7 + $0x18] sm:$0xff]
    %v4189 = vld [vmem:[%s7 + $0x20] sm:$0xff]
    %v4190 = vld [vmem:[%s7 + $0x28] sm:$0xff]
    %v4191 = vld [vmem:[%s7 + $0x30] sm:$0xff]
    %v4192 = vld [vmem:[%s7 + $0x38] sm:$0xff]
    %v4194 = vsel %vm3981, %v4183, 0
    %v4197 = vsel %vm3981, %v4184, 0
    %4199 = vmatprep.subr.mxu0 0.0
    %4200 = vmatpush1.msra.mxu0 %v4185
    %4201 = vmatprep.subr.mxu0 0.0
    %4202 = vmatpush1.msra.mxu0 %v4186
    %4203 = vmatprep.subr.mxu0 0.0
    %4204 = vmatpush1.msra.mxu0 %v4187
    %4205 = vmatprep.subr.mxu0 0.0
    %4206 = vmatpush1.msra.mxu0 %v4188
    %4207 = vmatprep.subr.mxu0 0.0
    %4208 = vmatpush1.msra.mxu0 %v4189
    %4209 = vmatprep.subr.mxu0 0.0
    %4210 = vmatpush1.msra.mxu0 %v4190
    %4211 = vmatprep.subr.mxu0 0.0
    %4212 = vmatpush1.msra.mxu0 %v4191
    %4213 = vmatprep.subr.mxu0 0.0
    %4214 = vmatpush1.msra.mxu0 %v4192
    %4215 = vmatprep.subr.mxu0 0.0
    %4216 = vmatpush1.msra.mxu0 0.0
    %4217 = vmatprep.subr.mxu0 0.0
    %4218 = vmatpush1.msra.mxu0 0.0
    %4219 = vmatprep.subr.mxu0 0.0
    %4220 = vmatpush1.msra.mxu0 0.0
    %4221 = vmatprep.subr.mxu0 0.0
    %4222 = vmatpush1.msra.mxu0 0.0
    %4223 = vmatprep.subr.mxu0 0.0
    %4224 = vmatpush1.msra.mxu0 0.0
    %4225 = vmatprep.subr.mxu0 0.0
    %4226 = vmatpush1.msra.mxu0 0.0
    %4227 = vmatprep.subr.mxu0 0.0
    %4228 = vmatpush1.msra.mxu0 0.0
    %4229 = vmatprep.subr.mxu0 0.0
    %4230 = vmatpush1.msra.mxu0 0.0
    %4231 = vmatprep.subr.mxu0 0.0
    %4232 = vmatpush1.msra.mxu0 0.0
    %4233 = vmatprep.subr.mxu0 0.0
    %4234 = vmatpush1.msra.mxu0 0.0
    %4235 = vmatprep.subr.mxu0 0.0
    %4236 = vmatpush1.msra.mxu0 0.0
    %4237 = vmatprep.subr.mxu0 0.0
    %4238 = vmatpush1.msra.mxu0 0.0
    %4239 = vmatprep.subr.mxu0 0.0
    %4240 = vmatpush1.msra.mxu0 0.0
    %4241 = vmatprep.subr.mxu0 0.0
    %4242 = vmatpush1.msra.mxu0 0.0
    %4243 = vmatprep.subr.mxu0 0.0
    %4244 = vmatpush1.msra.mxu0 0.0
    %4245 = vmatprep.subr.mxu0 0.0
    %4246 = vmatpush1.msra.mxu0 0.0
    %4247 = vmatprep.subr.mxu0 0.0
    %4248 = vmatpush1.msra.mxu0 0.0
    %4249 = vmatprep.subr.mxu0 0.0
    %4250 = vmatpush1.msra.mxu0 0.0
    %4251 = vmatprep.subr.mxu0 0.0
    %4252 = vmatpush1.msra.mxu0 0.0
    %4253 = vmatprep.subr.mxu0 0.0
    %4254 = vmatpush1.msra.mxu0 0.0
    %4255 = vmatprep.subr.mxu0 0.0
    %4256 = vmatpush1.msra.mxu0 0.0
    %4257 = vmatprep.subr.mxu0 0.0
    %4258 = vmatpush1.msra.mxu0 0.0
    %4259 = vmatprep.subr.mxu0 0.0
    %4260 = vmatpush1.msra.mxu0 0.0
    %4261 = vmatprep.subr.mxu0 0.0
    %4262 = vmatpush1.msra.mxu0 0.0
    %4263 = vmatprep.mubr.f32.mxu0 0.0
    %4264 = vmatmul.mubr.f32.gmra.mrb[0].mxu0 %v4194
    %v4265 = vpop.f32.mrb[0].mxu0
    %v4266 = vadd.f32 %v3969, %v4265
    %v4267 = vpop.f32.mrb[0].mxu0
    %4268 = vmatprep.mubr.f32.mxu0 0.0
    %4269 = vmatmul.mubr.f32.gmra.mrb[0].mxu0 %v4197
    %v4270 = vpop.f32.mrb[0].mxu0
    %v4271 = vadd.f32 %v3970, %v4270
    %v4272 = vpop.f32.mrb[0].mxu0
    %4273 = vdwg.mxu0
    %v4274 = vadd.f32 %v4094, %v4266
    %v4275 = vadd.f32 %v4095, %v4271
    %v4276 = vsel %vm309, %v4274, 0.0
    %4277 = vadd.xlane.f32.xlu0 %v4276
    %v4278 = vpop.xlane.xlu0 %4277
    %v4279 = vsel %vm309, %v4275, 0.0
    %4280 = vadd.xlane.f32.xlu0 %v4279
    %v4281 = vpop.xlane.xlu0 %4280
    %v4282 = vmul.f32 %v4278, %v4071
    %v4283 = vmul.f32 %v4281, %v4071
    %v4284 = vsub.f32 %v4274, %v4282
    %v4285 = vsub.f32 %v4275, %v4283
    %v4286 = vmul.f32 %v4284, %v4284
    %v4287 = vmul.f32 %v4285, %v4285
    %v4288 = vsel %vm309, %v4286, 0.0
    %4289 = vadd.xlane.f32.xlu0 %v4288
    %v4290 = vpop.xlane.xlu0 %4289
    %v4291 = vsel %vm309, %v4287, 0.0
    %4292 = vadd.xlane.f32.xlu0 %v4291
    %v4293 = vpop.xlane.xlu0 %4292
    %v4294 = vmul.f32 %v4290, %v4071
    %v4295 = vmul.f32 %v4293, %v4071
    %v4296 = vadd.f32 %v4294, 1e-05
    %v4297 = vadd.f32 %v4295, 1e-05
    %v4298 = vrsqrt.pop %v4296
    %v4299 = vrsqrt.pop %v4297
    %v4300 = vmul.f32 %v4284, %v4298
    %v4301 = vmul.f32 %v4285, %v4299
    %v4302 = vmul.f32 %v4300, %v3975
    %v4303 = vmul.f32 %v4301, %v3976
    %v4304 = vadd.f32 %v4302, %v3977
    %v4305 = vadd.f32 %v4303, %v3978
    %4306 = vst.msk [vmem:[#allocation13] sm:$0xff] %vm309, %v4304
    %4307 = vst.msk [vmem:[#allocation13 + $0x8] sm:$0xff] %vm309, %v4305
    // Predicated region
    $region66: #{transformer_encoder_layer.1} parent=1 // pred_check
      _
    $region67: #{transformer_encoder_layer.1} parent=1 // pred_check_branch
      %4309 = sbr.rel (0) target = $region69
    $region68: #{transformer_encoder_layer.1} parent=1 // pred_region
      %s4311 = ssub.s32 256, 256
      %4312 = vsyncadd [#allocation4], %s4311
      %s4313 = sshll.u32 [#allocation13], 4
      %s4314 = int_to_ptr.vmem [resolvable:$true] %s4313
      %4319 = dma.vmem_to_hbm [thread:$0]  %s4314, 256, %s10, [#allocation4], 128, 128, 8
    $region69: #{transformer_encoder_layer.1} parent=1 // pred_fallthru
      _
    // Predicated region
    $region70: #{transformer_encoder_layer.1} parent=1 // pred_check
      _
    $region71: #{transformer_encoder_layer.1} parent=1 // pred_check_branch
      %4321 = sbr.rel (0) target = $region73
    $region72: #{transformer_encoder_layer.1} parent=1 // pred_region
      %s4323 = ssub.s32 1024, 1024
      %4324 = vsyncadd [#allocation15], %s4323
      %s4325 = sshll.u32 [#allocation14], 4
      %s4326 = int_to_ptr.vmem [resolvable:$true] %s4325
      %4331 = dma.vmem_to_hbm [thread:$0]  %s4326, 1024, %s11, [#allocation15], 128, 128, 8
    $region73: #{transformer_encoder_layer.1} parent=1 // pred_fallthru
      _
    // Predicated region
    $region74: #{transformer_encoder_layer.1} parent=1 // pred_check
      _
    $region75: #{transformer_encoder_layer.1} parent=1 // pred_check_branch
      %4333 = sbr.rel (0) target = $region77
    $region76: #{transformer_encoder_layer.1} parent=1 // pred_region
      %4334 = dma.done [#allocation4], 256
    $region77: #{transformer_encoder_layer.1} parent=1 // pred_fallthru
      _
    // Predicated region
    $region78: #{transformer_encoder_layer.1} parent=1 // pred_check
      _
    $region79: #{transformer_encoder_layer.1} parent=1 // pred_check_branch
      %4336 = sbr.rel (0) target = $region81
    $region80: #{transformer_encoder_layer.1} parent=1 // pred_region
      %4337 = dma.done [#allocation15], 1024
    $region81: #{transformer_encoder_layer.1} parent=1 // pred_fallthru
      _
    %4338 = vsyncpa [#allocation3], 1
    %4339 = vsyncpa [#allocation6], 1
    %4340 = vsyncpa [#allocation9], 1
    %4341 = vsyncpa [#allocation12], 1
    %4342 = vsyncpa [#allocation4], 1
    %4343 = vsyncpa [#allocation15], 1

</llo_original>
